<compile_context>
chip_gen: v7x
topology: tpu7x:2x2x1
jax: 0.10.0
libtpu: 0.0.40
codegen_flags: <defaults>
</compile_context>

<pallas_src>
import functools
import math

import jax
import jax.numpy as jnp
from jax import lax
from jax.experimental import pallas as pl
from jax.experimental.pallas import tpu as pltpu


# ------------------------------ fused kernel -------------------------------

def _fused_forward_kernel(
    x_ref, pe_ref, w_in_ref, b_in_ref,
    wqkv_ref, bqkv_ref, wo_ref, bo_ref,
    ln1_g_ref, ln1_b_ref, w1_ref, b1_ref, w2_ref, b2_ref,
    ln2_g_ref, ln2_b_ref,
    wqkv_e_ref, bqkv_e_ref, wo_e_ref, bo_e_ref,
    attn_ln_g_ref, attn_ln_b_ref,
    w_fc_ref, b_fc_ref,
    out_ref,
    *, nhead, num_layers, eps):
  """Whole TransformerClassifier forward for one batch element (grid over B)."""
  x = x_ref[0]                                            # (S, F)

  # input_linear + positional encoding (dropout = identity, eval mode)
  h = jnp.dot(x, w_in_ref[...], preferred_element_type=jnp.float32)
  h = h + b_in_ref[...] + pe_ref[...]                     # (S, D)

  D = h.shape[-1]
  Dh = D // nhead
  scale = 1.0 / math.sqrt(Dh)

  def layer_norm(v, g, b):
    mu = jnp.mean(v, axis=-1, keepdims=True)
    var = jnp.mean(jnp.square(v - mu), axis=-1, keepdims=True)
    return (v - mu) * lax.rsqrt(var + eps) * g + b

  def self_attention(v, wqkv, bqkv, wo, bo):
    # fused QKV projection: one (S, D) @ (D, 3D) matmul
    qkv = jnp.dot(v, wqkv, preferred_element_type=jnp.float32) + bqkv  # (S, 3D)
    q = qkv[:, :D]
    k = qkv[:, D:2 * D]
    val = qkv[:, 2 * D:]
    outs = []
    for hh in range(nhead):                               # static unrolled head loop
      sl = slice(hh * Dh, (hh + 1) * Dh)
      qh, kh, vh = q[:, sl], k[:, sl], val[:, sl]
      s = lax.dot_general(qh, kh, (((1,), (1,)), ((), ())),
                          preferred_element_type=jnp.float32) * scale  # (S, S)
      m = jnp.max(s, axis=-1, keepdims=True)
      p = jnp.exp(s - m)
      l = jnp.sum(p, axis=-1, keepdims=True)
      p = p * pl.reciprocal(l, approx=True)
      outs.append(jnp.dot(p, vh, preferred_element_type=jnp.float32))  # (S, Dh)
    o = jnp.concatenate(outs, axis=-1)                    # (S, D)
    return jnp.dot(o, wo, preferred_element_type=jnp.float32) + bo

  # nn.TransformerEncoder: num_layers post-norm layers with ReLU FFN
  for l in range(num_layers):                             # static unrolled
    attn = self_attention(h, wqkv_ref[l], bqkv_ref[l], wo_ref[l], bo_ref[l])
    h = layer_norm(h + attn, ln1_g_ref[l], ln1_b_ref[l])
    ff = jnp.dot(h, w1_ref[l], preferred_element_type=jnp.float32) + b1_ref[l]
    ff = jnp.maximum(ff, 0.0)
    ff = jnp.dot(ff, w2_ref[l], preferred_element_type=jnp.float32) + b2_ref[l]
    h = layer_norm(h + ff, ln2_g_ref[l], ln2_b_ref[l])

  # extra self-attention block + residual + LayerNorm
  attn = self_attention(h, wqkv_e_ref[...], bqkv_e_ref[...],
                        wo_e_ref[...], bo_e_ref[...])
  h = layer_norm(h + attn, attn_ln_g_ref[...], attn_ln_b_ref[...])

  # mean over sequence, dropout = identity, final fc  (epilogue, in-kernel)
  m = jnp.mean(h, axis=0, keepdims=True)                  # (1, D)
  logits = jnp.dot(m, w_fc_ref[...], preferred_element_type=jnp.float32)
  logits = logits + b_fc_ref[...]                         # (1, C)
  out_ref[0] = logits.astype(out_ref.dtype)


def transformer_classifier_forward(x, params, nhead):
  if x.ndim == 2:
    x = x[:, None, :]
  x = x.astype(jnp.float32)
  B, S, F = x.shape
  C = params["w_fc"].shape[1]
  L = params["wqkv"].shape[0]

  pe = params["pe"][:S]

  def full_spec(a):
    return pl.BlockSpec(a.shape, lambda b: (0,) * a.ndim)

  weights = [
      pe, params["w_in"], params["b_in"],
      params["wqkv"], params["bqkv"], params["wo"], params["bo"],
      params["ln1_g"], params["ln1_b"],
      params["w1"], params["b1"], params["w2"], params["b2"],
      params["ln2_g"], params["ln2_b"],
      params["wqkv_e"], params["bqkv_e"], params["wo_e"], params["bo_e"],
      params["attn_ln_g"], params["attn_ln_b"],
      params["w_fc"], params["b_fc"],
  ]

  out = pl.pallas_call(
      functools.partial(_fused_forward_kernel,
                        nhead=nhead, num_layers=L, eps=1e-5),
      out_shape=jax.ShapeDtypeStruct((B, 1, C), jnp.float32),
      grid=(B,),
      in_specs=[pl.BlockSpec((1, S, F), lambda b: (b, 0, 0))]
               + [full_spec(w) for w in weights],
      out_specs=pl.BlockSpec((1, 1, C), lambda b: (b, 0, 0)),
      compiler_params=pltpu.CompilerParams(
          dimension_semantics=("parallel",)),
  )(x, *weights)
  return out.reshape(B, C)


# ----------------------------- parameter init ------------------------------

def make_positional_encoding(max_len, d_model):
  position = jnp.arange(max_len, dtype=jnp.float32)[:, None]
  div_term = jnp.exp(jnp.arange(0, d_model, 2, dtype=jnp.float32)
                     * (-math.log(10000.0) / d_model))
  pe = jnp.zeros((max_len, d_model), dtype=jnp.float32)
  pe = pe.at[:, 0::2].set(jnp.sin(position * div_term))
  pe = pe.at[:, 1::2].set(jnp.cos(position * div_term))
  return pe  # (max_len, d_model)


def init_params(key, num_features, hidden_dim, nhead, num_layers, num_classes,
                window_size):
  D = hidden_dim
  keys = iter(jax.random.split(key, 64))

  def dense(fan_in, fan_out):
    s = 1.0 / math.sqrt(fan_in)
    w = jax.random.uniform(next(keys), (fan_in, fan_out), jnp.float32, -s, s)
    b = jnp.zeros((1, fan_out), jnp.float32)
    return w, b

  w_in, b_in = dense(num_features, D)

  wqkv, bqkv, wo, bo = [], [], [], []
  w1, b1, w2, b2 = [], [], [], []
  for _ in range(num_layers):
    w, b = dense(D, 3 * D); wqkv.append(w); bqkv.append(b)   # packed Q/K/V
    w, b = dense(D, D);     wo.append(w);   bo.append(b)
    w, b = dense(D, 4 * D); w1.append(w);   b1.append(b)
    w, b = dense(4 * D, D); w2.append(w);   b2.append(b)

  stack = lambda xs: jnp.stack(xs, axis=0)
  ones = jnp.ones((num_layers, 1, D), jnp.float32)
  zeros = jnp.zeros((num_layers, 1, D), jnp.float32)

  wqkv_e, bqkv_e = dense(D, 3 * D)
  wo_e, bo_e = dense(D, D)
  w_fc, b_fc = dense(D, num_classes)
  pe = make_positional_encoding(window_size, D)

  return dict(
      w_in=w_in, b_in=b_in, pe=pe,
      wqkv=stack(wqkv), bqkv=stack(bqkv), wo=stack(wo), bo=stack(bo),
      ln1_g=ones, ln1_b=zeros,
      w1=stack(w1), b1=stack(b1), w2=stack(w2), b2=stack(b2),
      ln2_g=ones, ln2_b=zeros,
      wqkv_e=wqkv_e, bqkv_e=bqkv_e, wo_e=wo_e, bo_e=bo_e,
      attn_ln_g=jnp.ones((1, D), jnp.float32),
      attn_ln_b=jnp.zeros((1, D), jnp.float32),
      w_fc=w_fc, b_fc=b_fc)


# ---------------------------------- main -----------------------------------

if __name__ == "__main__":
  # Small shapes consistent with the module's forward:
  # batch=2, window_size (seq)=8, num_features=16, hidden_dim=32, nhead=4,
  # num_encoder_layers=2, num_classes=2.
  B, S = 2, 8
  NUM_FEATURES, HIDDEN, NHEAD, LAYERS, CLASSES = 16, 32, 4, 2, 2

  key = jax.random.PRNGKey(0)
  k_x, k_p = jax.random.split(key)
  x = jax.random.normal(k_x, (B, S, NUM_FEATURES), dtype=jnp.float32)
  params = init_params(k_p, NUM_FEATURES, HIDDEN, NHEAD, LAYERS, CLASSES, S)

  logits = transformer_classifier_forward(x, params, NHEAD)
  jax.block_until_ready(logits)
  assert logits.shape == (B, CLASSES)
  print("KERNEL_OK")
</pallas_src>

<mosaic_0001>
module attributes {stable_mosaic.version = 11 : i64} {
  func.func @_fused_forward_kernel(%arg0: i32, %arg1: memref<1x8x16xf32, #tpu.memory_space<vmem>>, %arg2: memref<8x32xf32, #tpu.memory_space<vmem>>, %arg3: memref<16x32xf32, #tpu.memory_space<vmem>>, %arg4: memref<1x32xf32, #tpu.memory_space<vmem>>, %arg5: memref<2x32x96xf32, #tpu.memory_space<vmem>>, %arg6: memref<2x1x96xf32, #tpu.memory_space<vmem>>, %arg7: memref<2x32x32xf32, #tpu.memory_space<vmem>>, %arg8: memref<2x1x32xf32, #tpu.memory_space<vmem>>, %arg9: memref<2x1x32xf32, #tpu.memory_space<vmem>>, %arg10: memref<2x1x32xf32, #tpu.memory_space<vmem>>, %arg11: memref<2x32x128xf32, #tpu.memory_space<vmem>>, %arg12: memref<2x1x128xf32, #tpu.memory_space<vmem>>, %arg13: memref<2x128x32xf32, #tpu.memory_space<vmem>>, %arg14: memref<2x1x32xf32, #tpu.memory_space<vmem>>, %arg15: memref<2x1x32xf32, #tpu.memory_space<vmem>>, %arg16: memref<2x1x32xf32, #tpu.memory_space<vmem>>, %arg17: memref<32x96xf32, #tpu.memory_space<vmem>>, %arg18: memref<1x96xf32, #tpu.memory_space<vmem>>, %arg19: memref<32x32xf32, #tpu.memory_space<vmem>>, %arg20: memref<1x32xf32, #tpu.memory_space<vmem>>, %arg21: memref<1x32xf32, #tpu.memory_space<vmem>>, %arg22: memref<1x32xf32, #tpu.memory_space<vmem>>, %arg23: memref<32x2xf32, #tpu.memory_space<vmem>>, %arg24: memref<1x2xf32, #tpu.memory_space<vmem>>, %arg25: memref<1x1x2xf32, #tpu.memory_space<vmem>>) attributes {dimension_semantics = [#tpu.dimension_semantics<parallel>], iteration_bounds = array<i64: 2>, scalar_prefetch = 0 : i64, scratch_operands = 0 : i64, tpu.core_type = #tpu.core_type<tc>, window_params = [{transform_indices = @transform_0, window_bounds = array<i64: 1, 8, 16>}, {pipeline_mode = #tpu.pipeline_mode<synchronous>, transform_indices = @transform_1, window_bounds = array<i64: 8, 32>}, {pipeline_mode = #tpu.pipeline_mode<synchronous>, transform_indices = @transform_2, window_bounds = array<i64: 16, 32>}, {pipeline_mode = #tpu.pipeline_mode<synchronous>, transform_indices = @transform_3, window_bounds = array<i64: 1, 32>}, {pipeline_mode = #tpu.pipeline_mode<synchronous>, transform_indices = @transform_4, window_bounds = array<i64: 2, 32, 96>}, {pipeline_mode = #tpu.pipeline_mode<synchronous>, transform_indices = @transform_5, window_bounds = array<i64: 2, 1, 96>}, {pipeline_mode = #tpu.pipeline_mode<synchronous>, transform_indices = @transform_6, window_bounds = array<i64: 2, 32, 32>}, {pipeline_mode = #tpu.pipeline_mode<synchronous>, transform_indices = @transform_7, window_bounds = array<i64: 2, 1, 32>}, {pipeline_mode = #tpu.pipeline_mode<synchronous>, transform_indices = @transform_8, window_bounds = array<i64: 2, 1, 32>}, {pipeline_mode = #tpu.pipeline_mode<synchronous>, transform_indices = @transform_9, window_bounds = array<i64: 2, 1, 32>}, {pipeline_mode = #tpu.pipeline_mode<synchronous>, transform_indices = @transform_10, window_bounds = array<i64: 2, 32, 128>}, {pipeline_mode = #tpu.pipeline_mode<synchronous>, transform_indices = @transform_11, window_bounds = array<i64: 2, 1, 128>}, {pipeline_mode = #tpu.pipeline_mode<synchronous>, transform_indices = @transform_12, window_bounds = array<i64: 2, 128, 32>}, {pipeline_mode = #tpu.pipeline_mode<synchronous>, transform_indices = @transform_13, window_bounds = array<i64: 2, 1, 32>}, {pipeline_mode = #tpu.pipeline_mode<synchronous>, transform_indices = @transform_14, window_bounds = array<i64: 2, 1, 32>}, {pipeline_mode = #tpu.pipeline_mode<synchronous>, transform_indices = @transform_15, window_bounds = array<i64: 2, 1, 32>}, {pipeline_mode = #tpu.pipeline_mode<synchronous>, transform_indices = @transform_16, window_bounds = array<i64: 32, 96>}, {pipeline_mode = #tpu.pipeline_mode<synchronous>, transform_indices = @transform_17, window_bounds = array<i64: 1, 96>}, {pipeline_mode = #tpu.pipeline_mode<synchronous>, transform_indices = @transform_18, window_bounds = array<i64: 32, 32>}, {pipeline_mode = #tpu.pipeline_mode<synchronous>, transform_indices = @transform_19, window_bounds = array<i64: 1, 32>}, {pipeline_mode = #tpu.pipeline_mode<synchronous>, transform_indices = @transform_20, window_bounds = array<i64: 1, 32>}, {pipeline_mode = #tpu.pipeline_mode<synchronous>, transform_indices = @transform_21, window_bounds = array<i64: 1, 32>}, {pipeline_mode = #tpu.pipeline_mode<synchronous>, transform_indices = @transform_22, window_bounds = array<i64: 32, 2>}, {pipeline_mode = #tpu.pipeline_mode<synchronous>, transform_indices = @transform_23, window_bounds = array<i64: 1, 2>}, {transform_indices = @transform_24, window_bounds = array<i64: 1, 1, 2>}]} {
    %c0 = arith.constant 0 : index
    %c0_0 = arith.constant 0 : index
    %c0_1 = arith.constant 0 : index
    %0 = vector.load %arg1[%c0, %c0_0, %c0_1] : memref<1x8x16xf32, #tpu.memory_space<vmem>>, vector<1x8x16xf32>
    %1 = vector.shape_cast %0 : vector<1x8x16xf32> to vector<8x16xf32>
    %c0_2 = arith.constant 0 : index
    %c0_3 = arith.constant 0 : index
    %2 = vector.load %arg3[%c0_2, %c0_3] : memref<16x32xf32, #tpu.memory_space<vmem>>, vector<16x32xf32>
    %cst = arith.constant dense<0.000000e+00> : vector<8x32xf32>
    %3 = tpu.matmul %1, %2, %cst {dimension_numbers = #tpu.dot_dimension_numbers<[1], [0], [0], [1], [0, 0, 1, 1], [], []>} : vector<8x16xf32>, vector<16x32xf32>, vector<8x32xf32> -> vector<8x32xf32>
    %c0_4 = arith.constant 0 : index
    %c0_5 = arith.constant 0 : index
    %4 = vector.load %arg4[%c0_4, %c0_5] : memref<1x32xf32, #tpu.memory_space<vmem>>, vector<1x32xf32>
    %5 = vector.broadcast %4 : vector<1x32xf32> to vector<8x32xf32>
    %6 = arith.addf %3, %5 : vector<8x32xf32>
    %c0_6 = arith.constant 0 : index
    %c0_7 = arith.constant 0 : index
    %7 = vector.load %arg2[%c0_6, %c0_7] : memref<8x32xf32, #tpu.memory_space<vmem>>, vector<8x32xf32>
    %8 = arith.addf %6, %7 : vector<8x32xf32>
    %c0_8 = arith.constant 0 : index
    %c0_9 = arith.constant 0 : index
    %c0_10 = arith.constant 0 : index
    %9 = vector.load %arg5[%c0_8, %c0_9, %c0_10] : memref<2x32x96xf32, #tpu.memory_space<vmem>>, vector<1x32x96xf32>
    %10 = vector.shape_cast %9 : vector<1x32x96xf32> to vector<32x96xf32>
    %c0_11 = arith.constant 0 : index
    %c0_12 = arith.constant 0 : index
    %c0_13 = arith.constant 0 : index
    %11 = vector.load %arg6[%c0_11, %c0_12, %c0_13] : memref<2x1x96xf32, #tpu.memory_space<vmem>>, vector<1x1x96xf32>
    %12 = vector.shape_cast %11 : vector<1x1x96xf32> to vector<1x96xf32>
    %c0_14 = arith.constant 0 : index
    %c0_15 = arith.constant 0 : index
    %c0_16 = arith.constant 0 : index
    %13 = vector.load %arg7[%c0_14, %c0_15, %c0_16] : memref<2x32x32xf32, #tpu.memory_space<vmem>>, vector<1x32x32xf32>
    %14 = vector.shape_cast %13 : vector<1x32x32xf32> to vector<32x32xf32>
    %c0_17 = arith.constant 0 : index
    %c0_18 = arith.constant 0 : index
    %c0_19 = arith.constant 0 : index
    %15 = vector.load %arg8[%c0_17, %c0_18, %c0_19] : memref<2x1x32xf32, #tpu.memory_space<vmem>>, vector<1x1x32xf32>
    %16 = vector.shape_cast %15 : vector<1x1x32xf32> to vector<1x32xf32>
    %cst_20 = arith.constant dense<0.000000e+00> : vector<8x96xf32>
    %17 = tpu.matmul %8, %10, %cst_20 {dimension_numbers = #tpu.dot_dimension_numbers<[1], [0], [0], [1], [0, 0, 1, 1], [], []>} : vector<8x32xf32>, vector<32x96xf32>, vector<8x96xf32> -> vector<8x96xf32>
    %18 = vector.broadcast %12 : vector<1x96xf32> to vector<8x96xf32>
    %19 = arith.addf %17, %18 : vector<8x96xf32>
    %20 = vector.extract_strided_slice %19 {offsets = [0, 0], sizes = [8, 32], strides = [1, 1]} : vector<8x96xf32> to vector<8x32xf32>
    %21 = vector.extract_strided_slice %19 {offsets = [0, 32], sizes = [8, 32], strides = [1, 1]} : vector<8x96xf32> to vector<8x32xf32>
    %22 = vector.extract_strided_slice %19 {offsets = [0, 64], sizes = [8, 32], strides = [1, 1]} : vector<8x96xf32> to vector<8x32xf32>
    %23 = vector.extract_strided_slice %20 {offsets = [0, 0], sizes = [8, 8], strides = [1, 1]} : vector<8x32xf32> to vector<8x8xf32>
    %24 = vector.extract_strided_slice %21 {offsets = [0, 0], sizes = [8, 8], strides = [1, 1]} : vector<8x32xf32> to vector<8x8xf32>
    %25 = vector.extract_strided_slice %22 {offsets = [0, 0], sizes = [8, 8], strides = [1, 1]} : vector<8x32xf32> to vector<8x8xf32>
    %cst_21 = arith.constant dense<0.000000e+00> : vector<8x8xf32>
    %26 = tpu.matmul %23, %24, %cst_21 {dimension_numbers = #tpu.dot_dimension_numbers<[1], [1], [0], [0], [0, 0, 1, 0], [], []>} : vector<8x8xf32>, vector<8x8xf32>, vector<8x8xf32> -> vector<8x8xf32>
    %cst_22 = arith.constant 0.353553385 : f32
    %27 = vector.broadcast %cst_22 : f32 to vector<8x8xf32>
    %28 = arith.mulf %26, %27 : vector<8x8xf32>
    %cst_23 = arith.constant dense<0xFF800000> : vector<8xf32>
    %29 = vector.multi_reduction <maximumf>, %28, %cst_23 [1] : vector<8x8xf32> to vector<8xf32>
    %30 = vector.shape_cast %29 : vector<8xf32> to vector<8x1xf32>
    %31 = vector.broadcast %30 : vector<8x1xf32> to vector<8x8xf32>
    %32 = arith.subf %28, %31 : vector<8x8xf32>
    %33 = math.exp %32 : vector<8x8xf32>
    %cst_24 = arith.constant dense<0.000000e+00> : vector<8xf32>
    %34 = vector.multi_reduction <add>, %33, %cst_24 [1] : vector<8x8xf32> to vector<8xf32>
    %35 = vector.shape_cast %34 : vector<8xf32> to vector<8x1xf32>
    %36 = tpu.reciprocal %35 {approx = true} : vector<8x1xf32> -> vector<8x1xf32>
    %37 = vector.broadcast %36 : vector<8x1xf32> to vector<8x8xf32>
    %38 = arith.mulf %33, %37 : vector<8x8xf32>
    %cst_25 = arith.constant dense<0.000000e+00> : vector<8x8xf32>
    %39 = tpu.matmul %38, %25, %cst_25 {dimension_numbers = #tpu.dot_dimension_numbers<[1], [0], [0], [1], [0, 0, 1, 1], [], []>} : vector<8x8xf32>, vector<8x8xf32>, vector<8x8xf32> -> vector<8x8xf32>
    %40 = vector.extract_strided_slice %20 {offsets = [0, 8], sizes = [8, 8], strides = [1, 1]} : vector<8x32xf32> to vector<8x8xf32>
    %41 = vector.extract_strided_slice %21 {offsets = [0, 8], sizes = [8, 8], strides = [1, 1]} : vector<8x32xf32> to vector<8x8xf32>
    %42 = vector.extract_strided_slice %22 {offsets = [0, 8], sizes = [8, 8], strides = [1, 1]} : vector<8x32xf32> to vector<8x8xf32>
    %cst_26 = arith.constant dense<0.000000e+00> : vector<8x8xf32>
    %43 = tpu.matmul %40, %41, %cst_26 {dimension_numbers = #tpu.dot_dimension_numbers<[1], [1], [0], [0], [0, 0, 1, 0], [], []>} : vector<8x8xf32>, vector<8x8xf32>, vector<8x8xf32> -> vector<8x8xf32>
    %cst_27 = arith.constant 0.353553385 : f32
    %44 = vector.broadcast %cst_27 : f32 to vector<8x8xf32>
    %45 = arith.mulf %43, %44 : vector<8x8xf32>
    %cst_28 = arith.constant dense<0xFF800000> : vector<8xf32>
    %46 = vector.multi_reduction <maximumf>, %45, %cst_28 [1] : vector<8x8xf32> to vector<8xf32>
    %47 = vector.shape_cast %46 : vector<8xf32> to vector<8x1xf32>
    %48 = vector.broadcast %47 : vector<8x1xf32> to vector<8x8xf32>
    %49 = arith.subf %45, %48 : vector<8x8xf32>
    %50 = math.exp %49 : vector<8x8xf32>
    %cst_29 = arith.constant dense<0.000000e+00> : vector<8xf32>
    %51 = vector.multi_reduction <add>, %50, %cst_29 [1] : vector<8x8xf32> to vector<8xf32>
    %52 = vector.shape_cast %51 : vector<8xf32> to vector<8x1xf32>
    %53 = tpu.reciprocal %52 {approx = true} : vector<8x1xf32> -> vector<8x1xf32>
    %54 = vector.broadcast %53 : vector<8x1xf32> to vector<8x8xf32>
    %55 = arith.mulf %50, %54 : vector<8x8xf32>
    %cst_30 = arith.constant dense<0.000000e+00> : vector<8x8xf32>
    %56 = tpu.matmul %55, %42, %cst_30 {dimension_numbers = #tpu.dot_dimension_numbers<[1], [0], [0], [1], [0, 0, 1, 1], [], []>} : vector<8x8xf32>, vector<8x8xf32>, vector<8x8xf32> -> vector<8x8xf32>
    %57 = vector.extract_strided_slice %20 {offsets = [0, 16], sizes = [8, 8], strides = [1, 1]} : vector<8x32xf32> to vector<8x8xf32>
    %58 = vector.extract_strided_slice %21 {offsets = [0, 16], sizes = [8, 8], strides = [1, 1]} : vector<8x32xf32> to vector<8x8xf32>
    %59 = vector.extract_strided_slice %22 {offsets = [0, 16], sizes = [8, 8], strides = [1, 1]} : vector<8x32xf32> to vector<8x8xf32>
    %cst_31 = arith.constant dense<0.000000e+00> : vector<8x8xf32>
    %60 = tpu.matmul %57, %58, %cst_31 {dimension_numbers = #tpu.dot_dimension_numbers<[1], [1], [0], [0], [0, 0, 1, 0], [], []>} : vector<8x8xf32>, vector<8x8xf32>, vector<8x8xf32> -> vector<8x8xf32>
    %cst_32 = arith.constant 0.353553385 : f32
    %61 = vector.broadcast %cst_32 : f32 to vector<8x8xf32>
    %62 = arith.mulf %60, %61 : vector<8x8xf32>
    %cst_33 = arith.constant dense<0xFF800000> : vector<8xf32>
    %63 = vector.multi_reduction <maximumf>, %62, %cst_33 [1] : vector<8x8xf32> to vector<8xf32>
    %64 = vector.shape_cast %63 : vector<8xf32> to vector<8x1xf32>
    %65 = vector.broadcast %64 : vector<8x1xf32> to vector<8x8xf32>
    %66 = arith.subf %62, %65 : vector<8x8xf32>
    %67 = math.exp %66 : vector<8x8xf32>
    %cst_34 = arith.constant dense<0.000000e+00> : vector<8xf32>
    %68 = vector.multi_reduction <add>, %67, %cst_34 [1] : vector<8x8xf32> to vector<8xf32>
    %69 = vector.shape_cast %68 : vector<8xf32> to vector<8x1xf32>
    %70 = tpu.reciprocal %69 {approx = true} : vector<8x1xf32> -> vector<8x1xf32>
    %71 = vector.broadcast %70 : vector<8x1xf32> to vector<8x8xf32>
    %72 = arith.mulf %67, %71 : vector<8x8xf32>
    %cst_35 = arith.constant dense<0.000000e+00> : vector<8x8xf32>
    %73 = tpu.matmul %72, %59, %cst_35 {dimension_numbers = #tpu.dot_dimension_numbers<[1], [0], [0], [1], [0, 0, 1, 1], [], []>} : vector<8x8xf32>, vector<8x8xf32>, vector<8x8xf32> -> vector<8x8xf32>
    %74 = vector.extract_strided_slice %20 {offsets = [0, 24], sizes = [8, 8], strides = [1, 1]} : vector<8x32xf32> to vector<8x8xf32>
    %75 = vector.extract_strided_slice %21 {offsets = [0, 24], sizes = [8, 8], strides = [1, 1]} : vector<8x32xf32> to vector<8x8xf32>
    %76 = vector.extract_strided_slice %22 {offsets = [0, 24], sizes = [8, 8], strides = [1, 1]} : vector<8x32xf32> to vector<8x8xf32>
    %cst_36 = arith.constant dense<0.000000e+00> : vector<8x8xf32>
    %77 = tpu.matmul %74, %75, %cst_36 {dimension_numbers = #tpu.dot_dimension_numbers<[1], [1], [0], [0], [0, 0, 1, 0], [], []>} : vector<8x8xf32>, vector<8x8xf32>, vector<8x8xf32> -> vector<8x8xf32>
    %cst_37 = arith.constant 0.353553385 : f32
    %78 = vector.broadcast %cst_37 : f32 to vector<8x8xf32>
    %79 = arith.mulf %77, %78 : vector<8x8xf32>
    %cst_38 = arith.constant dense<0xFF800000> : vector<8xf32>
    %80 = vector.multi_reduction <maximumf>, %79, %cst_38 [1] : vector<8x8xf32> to vector<8xf32>
    %81 = vector.shape_cast %80 : vector<8xf32> to vector<8x1xf32>
    %82 = vector.broadcast %81 : vector<8x1xf32> to vector<8x8xf32>
    %83 = arith.subf %79, %82 : vector<8x8xf32>
    %84 = math.exp %83 : vector<8x8xf32>
    %cst_39 = arith.constant dense<0.000000e+00> : vector<8xf32>
    %85 = vector.multi_reduction <add>, %84, %cst_39 [1] : vector<8x8xf32> to vector<8xf32>
    %86 = vector.shape_cast %85 : vector<8xf32> to vector<8x1xf32>
    %87 = tpu.reciprocal %86 {approx = true} : vector<8x1xf32> -> vector<8x1xf32>
    %88 = vector.broadcast %87 : vector<8x1xf32> to vector<8x8xf32>
    %89 = arith.mulf %84, %88 : vector<8x8xf32>
    %cst_40 = arith.constant dense<0.000000e+00> : vector<8x8xf32>
    %90 = tpu.matmul %89, %76, %cst_40 {dimension_numbers = #tpu.dot_dimension_numbers<[1], [0], [0], [1], [0, 0, 1, 1], [], []>} : vector<8x8xf32>, vector<8x8xf32>, vector<8x8xf32> -> vector<8x8xf32>
    %91 = tpu.concatenate %39, %56, %73, %90 in 1 : vector<8x8xf32>, vector<8x8xf32>, vector<8x8xf32>, vector<8x8xf32> -> vector<8x32xf32>
    %cst_41 = arith.constant dense<0.000000e+00> : vector<8x32xf32>
    %92 = tpu.matmul %91, %14, %cst_41 {dimension_numbers = #tpu.dot_dimension_numbers<[1], [0], [0], [1], [0, 0, 1, 1], [], []>} : vector<8x32xf32>, vector<32x32xf32>, vector<8x32xf32> -> vector<8x32xf32>
    %93 = vector.broadcast %16 : vector<1x32xf32> to vector<8x32xf32>
    %94 = arith.addf %92, %93 : vector<8x32xf32>
    %95 = arith.addf %8, %94 : vector<8x32xf32>
    %c0_42 = arith.constant 0 : index
    %c0_43 = arith.constant 0 : index
    %c0_44 = arith.constant 0 : index
    %96 = vector.load %arg9[%c0_42, %c0_43, %c0_44] : memref<2x1x32xf32, #tpu.memory_space<vmem>>, vector<1x1x32xf32>
    %97 = vector.shape_cast %96 : vector<1x1x32xf32> to vector<1x32xf32>
    %c0_45 = arith.constant 0 : index
    %c0_46 = arith.constant 0 : index
    %c0_47 = arith.constant 0 : index
    %98 = vector.load %arg10[%c0_45, %c0_46, %c0_47] : memref<2x1x32xf32, #tpu.memory_space<vmem>>, vector<1x1x32xf32>
    %99 = vector.shape_cast %98 : vector<1x1x32xf32> to vector<1x32xf32>
    %cst_48 = arith.constant dense<0.000000e+00> : vector<8xf32>
    %100 = vector.multi_reduction <add>, %95, %cst_48 [1] : vector<8x32xf32> to vector<8xf32>
    %101 = vector.shape_cast %100 : vector<8xf32> to vector<8x1xf32>
    %cst_49 = arith.constant 3.200000e+01 : f32
    %102 = vector.broadcast %cst_49 : f32 to vector<8x1xf32>
    %103 = arith.divf %101, %102 : vector<8x1xf32>
    %104 = vector.broadcast %103 : vector<8x1xf32> to vector<8x32xf32>
    %105 = arith.subf %95, %104 : vector<8x32xf32>
    %106 = arith.mulf %105, %105 : vector<8x32xf32>
    %cst_50 = arith.constant dense<0.000000e+00> : vector<8xf32>
    %107 = vector.multi_reduction <add>, %106, %cst_50 [1] : vector<8x32xf32> to vector<8xf32>
    %108 = vector.shape_cast %107 : vector<8xf32> to vector<8x1xf32>
    %cst_51 = arith.constant 3.200000e+01 : f32
    %109 = vector.broadcast %cst_51 : f32 to vector<8x1xf32>
    %110 = arith.divf %108, %109 : vector<8x1xf32>
    %111 = vector.broadcast %103 : vector<8x1xf32> to vector<8x32xf32>
    %112 = arith.subf %95, %111 : vector<8x32xf32>
    %cst_52 = arith.constant 9.99999974E-6 : f32
    %113 = vector.broadcast %cst_52 : f32 to vector<8x1xf32>
    %114 = arith.addf %110, %113 : vector<8x1xf32>
    %115 = math.rsqrt %114 : vector<8x1xf32>
    %116 = vector.broadcast %115 : vector<8x1xf32> to vector<8x32xf32>
    %117 = arith.mulf %112, %116 : vector<8x32xf32>
    %118 = vector.broadcast %97 : vector<1x32xf32> to vector<8x32xf32>
    %119 = arith.mulf %117, %118 : vector<8x32xf32>
    %120 = vector.broadcast %99 : vector<1x32xf32> to vector<8x32xf32>
    %121 = arith.addf %119, %120 : vector<8x32xf32>
    %c0_53 = arith.constant 0 : index
    %c0_54 = arith.constant 0 : index
    %c0_55 = arith.constant 0 : index
    %122 = vector.load %arg11[%c0_53, %c0_54, %c0_55] : memref<2x32x128xf32, #tpu.memory_space<vmem>>, vector<1x32x128xf32>
    %123 = vector.shape_cast %122 : vector<1x32x128xf32> to vector<32x128xf32>
    %cst_56 = arith.constant dense<0.000000e+00> : vector<8x128xf32>
    %124 = tpu.matmul %121, %123, %cst_56 {dimension_numbers = #tpu.dot_dimension_numbers<[1], [0], [0], [1], [0, 0, 1, 1], [], []>} : vector<8x32xf32>, vector<32x128xf32>, vector<8x128xf32> -> vector<8x128xf32>
    %c0_57 = arith.constant 0 : index
    %c0_58 = arith.constant 0 : index
    %c0_59 = arith.constant 0 : index
    %125 = vector.load %arg12[%c0_57, %c0_58, %c0_59] : memref<2x1x128xf32, #tpu.memory_space<vmem>>, vector<1x1x128xf32>
    %126 = vector.shape_cast %125 : vector<1x1x128xf32> to vector<1x128xf32>
    %127 = vector.broadcast %126 : vector<1x128xf32> to vector<8x128xf32>
    %128 = arith.addf %124, %127 : vector<8x128xf32>
    %cst_60 = arith.constant 0.000000e+00 : f32
    %129 = vector.broadcast %cst_60 : f32 to vector<8x128xf32>
    %130 = arith.maximumf %128, %129 : vector<8x128xf32>
    %c0_61 = arith.constant 0 : index
    %c0_62 = arith.constant 0 : index
    %c0_63 = arith.constant 0 : index
    %131 = vector.load %arg13[%c0_61, %c0_62, %c0_63] : memref<2x128x32xf32, #tpu.memory_space<vmem>>, vector<1x128x32xf32>
    %132 = vector.shape_cast %131 : vector<1x128x32xf32> to vector<128x32xf32>
    %cst_64 = arith.constant dense<0.000000e+00> : vector<8x32xf32>
    %133 = tpu.matmul %130, %132, %cst_64 {dimension_numbers = #tpu.dot_dimension_numbers<[1], [0], [0], [1], [0, 0, 1, 1], [], []>} : vector<8x128xf32>, vector<128x32xf32>, vector<8x32xf32> -> vector<8x32xf32>
    %c0_65 = arith.constant 0 : index
    %c0_66 = arith.constant 0 : index
    %c0_67 = arith.constant 0 : index
    %134 = vector.load %arg14[%c0_65, %c0_66, %c0_67] : memref<2x1x32xf32, #tpu.memory_space<vmem>>, vector<1x1x32xf32>
    %135 = vector.shape_cast %134 : vector<1x1x32xf32> to vector<1x32xf32>
    %136 = vector.broadcast %135 : vector<1x32xf32> to vector<8x32xf32>
    %137 = arith.addf %133, %136 : vector<8x32xf32>
    %138 = arith.addf %121, %137 : vector<8x32xf32>
    %c0_68 = arith.constant 0 : index
    %c0_69 = arith.constant 0 : index
    %c0_70 = arith.constant 0 : index
    %139 = vector.load %arg15[%c0_68, %c0_69, %c0_70] : memref<2x1x32xf32, #tpu.memory_space<vmem>>, vector<1x1x32xf32>
    %140 = vector.shape_cast %139 : vector<1x1x32xf32> to vector<1x32xf32>
    %c0_71 = arith.constant 0 : index
    %c0_72 = arith.constant 0 : index
    %c0_73 = arith.constant 0 : index
    %141 = vector.load %arg16[%c0_71, %c0_72, %c0_73] : memref<2x1x32xf32, #tpu.memory_space<vmem>>, vector<1x1x32xf32>
    %142 = vector.shape_cast %141 : vector<1x1x32xf32> to vector<1x32xf32>
    %cst_74 = arith.constant dense<0.000000e+00> : vector<8xf32>
    %143 = vector.multi_reduction <add>, %138, %cst_74 [1] : vector<8x32xf32> to vector<8xf32>
    %144 = vector.shape_cast %143 : vector<8xf32> to vector<8x1xf32>
    %cst_75 = arith.constant 3.200000e+01 : f32
    %145 = vector.broadcast %cst_75 : f32 to vector<8x1xf32>
    %146 = arith.divf %144, %145 : vector<8x1xf32>
    %147 = vector.broadcast %146 : vector<8x1xf32> to vector<8x32xf32>
    %148 = arith.subf %138, %147 : vector<8x32xf32>
    %149 = arith.mulf %148, %148 : vector<8x32xf32>
    %cst_76 = arith.constant dense<0.000000e+00> : vector<8xf32>
    %150 = vector.multi_reduction <add>, %149, %cst_76 [1] : vector<8x32xf32> to vector<8xf32>
    %151 = vector.shape_cast %150 : vector<8xf32> to vector<8x1xf32>
    %cst_77 = arith.constant 3.200000e+01 : f32
    %152 = vector.broadcast %cst_77 : f32 to vector<8x1xf32>
    %153 = arith.divf %151, %152 : vector<8x1xf32>
    %154 = vector.broadcast %146 : vector<8x1xf32> to vector<8x32xf32>
    %155 = arith.subf %138, %154 : vector<8x32xf32>
    %cst_78 = arith.constant 9.99999974E-6 : f32
    %156 = vector.broadcast %cst_78 : f32 to vector<8x1xf32>
    %157 = arith.addf %153, %156 : vector<8x1xf32>
    %158 = math.rsqrt %157 : vector<8x1xf32>
    %159 = vector.broadcast %158 : vector<8x1xf32> to vector<8x32xf32>
    %160 = arith.mulf %155, %159 : vector<8x32xf32>
    %161 = vector.broadcast %140 : vector<1x32xf32> to vector<8x32xf32>
    %162 = arith.mulf %160, %161 : vector<8x32xf32>
    %163 = vector.broadcast %142 : vector<1x32xf32> to vector<8x32xf32>
    %164 = arith.addf %162, %163 : vector<8x32xf32>
    %c1 = arith.constant 1 : index
    %c0_79 = arith.constant 0 : index
    %c0_80 = arith.constant 0 : index
    %165 = vector.load %arg5[%c1, %c0_79, %c0_80] : memref<2x32x96xf32, #tpu.memory_space<vmem>>, vector<1x32x96xf32>
    %166 = vector.shape_cast %165 : vector<1x32x96xf32> to vector<32x96xf32>
    %c1_81 = arith.constant 1 : index
    %c0_82 = arith.constant 0 : index
    %c0_83 = arith.constant 0 : index
    %167 = vector.load %arg6[%c1_81, %c0_82, %c0_83] : memref<2x1x96xf32, #tpu.memory_space<vmem>>, vector<1x1x96xf32>
    %168 = vector.shape_cast %167 : vector<1x1x96xf32> to vector<1x96xf32>
    %c1_84 = arith.constant 1 : index
    %c0_85 = arith.constant 0 : index
    %c0_86 = arith.constant 0 : index
    %169 = vector.load %arg7[%c1_84, %c0_85, %c0_86] : memref<2x32x32xf32, #tpu.memory_space<vmem>>, vector<1x32x32xf32>
    %170 = vector.shape_cast %169 : vector<1x32x32xf32> to vector<32x32xf32>
    %c1_87 = arith.constant 1 : index
    %c0_88 = arith.constant 0 : index
    %c0_89 = arith.constant 0 : index
    %171 = vector.load %arg8[%c1_87, %c0_88, %c0_89] : memref<2x1x32xf32, #tpu.memory_space<vmem>>, vector<1x1x32xf32>
    %172 = vector.shape_cast %171 : vector<1x1x32xf32> to vector<1x32xf32>
    %cst_90 = arith.constant dense<0.000000e+00> : vector<8x96xf32>
    %173 = tpu.matmul %164, %166, %cst_90 {dimension_numbers = #tpu.dot_dimension_numbers<[1], [0], [0], [1], [0, 0, 1, 1], [], []>} : vector<8x32xf32>, vector<32x96xf32>, vector<8x96xf32> -> vector<8x96xf32>
    %174 = vector.broadcast %168 : vector<1x96xf32> to vector<8x96xf32>
    %175 = arith.addf %173, %174 : vector<8x96xf32>
    %176 = vector.extract_strided_slice %175 {offsets = [0, 0], sizes = [8, 32], strides = [1, 1]} : vector<8x96xf32> to vector<8x32xf32>
    %177 = vector.extract_strided_slice %175 {offsets = [0, 32], sizes = [8, 32], strides = [1, 1]} : vector<8x96xf32> to vector<8x32xf32>
    %178 = vector.extract_strided_slice %175 {offsets = [0, 64], sizes = [8, 32], strides = [1, 1]} : vector<8x96xf32> to vector<8x32xf32>
    %179 = vector.extract_strided_slice %176 {offsets = [0, 0], sizes = [8, 8], strides = [1, 1]} : vector<8x32xf32> to vector<8x8xf32>
    %180 = vector.extract_strided_slice %177 {offsets = [0, 0], sizes = [8, 8], strides = [1, 1]} : vector<8x32xf32> to vector<8x8xf32>
    %181 = vector.extract_strided_slice %178 {offsets = [0, 0], sizes = [8, 8], strides = [1, 1]} : vector<8x32xf32> to vector<8x8xf32>
    %cst_91 = arith.constant dense<0.000000e+00> : vector<8x8xf32>
    %182 = tpu.matmul %179, %180, %cst_91 {dimension_numbers = #tpu.dot_dimension_numbers<[1], [1], [0], [0], [0, 0, 1, 0], [], []>} : vector<8x8xf32>, vector<8x8xf32>, vector<8x8xf32> -> vector<8x8xf32>
    %cst_92 = arith.constant 0.353553385 : f32
    %183 = vector.broadcast %cst_92 : f32 to vector<8x8xf32>
    %184 = arith.mulf %182, %183 : vector<8x8xf32>
    %cst_93 = arith.constant dense<0xFF800000> : vector<8xf32>
    %185 = vector.multi_reduction <maximumf>, %184, %cst_93 [1] : vector<8x8xf32> to vector<8xf32>
    %186 = vector.shape_cast %185 : vector<8xf32> to vector<8x1xf32>
    %187 = vector.broadcast %186 : vector<8x1xf32> to vector<8x8xf32>
    %188 = arith.subf %184, %187 : vector<8x8xf32>
    %189 = math.exp %188 : vector<8x8xf32>
    %cst_94 = arith.constant dense<0.000000e+00> : vector<8xf32>
    %190 = vector.multi_reduction <add>, %189, %cst_94 [1] : vector<8x8xf32> to vector<8xf32>
    %191 = vector.shape_cast %190 : vector<8xf32> to vector<8x1xf32>
    %192 = tpu.reciprocal %191 {approx = true} : vector<8x1xf32> -> vector<8x1xf32>
    %193 = vector.broadcast %192 : vector<8x1xf32> to vector<8x8xf32>
    %194 = arith.mulf %189, %193 : vector<8x8xf32>
    %cst_95 = arith.constant dense<0.000000e+00> : vector<8x8xf32>
    %195 = tpu.matmul %194, %181, %cst_95 {dimension_numbers = #tpu.dot_dimension_numbers<[1], [0], [0], [1], [0, 0, 1, 1], [], []>} : vector<8x8xf32>, vector<8x8xf32>, vector<8x8xf32> -> vector<8x8xf32>
    %196 = vector.extract_strided_slice %176 {offsets = [0, 8], sizes = [8, 8], strides = [1, 1]} : vector<8x32xf32> to vector<8x8xf32>
    %197 = vector.extract_strided_slice %177 {offsets = [0, 8], sizes = [8, 8], strides = [1, 1]} : vector<8x32xf32> to vector<8x8xf32>
    %198 = vector.extract_strided_slice %178 {offsets = [0, 8], sizes = [8, 8], strides = [1, 1]} : vector<8x32xf32> to vector<8x8xf32>
    %cst_96 = arith.constant dense<0.000000e+00> : vector<8x8xf32>
    %199 = tpu.matmul %196, %197, %cst_96 {dimension_numbers = #tpu.dot_dimension_numbers<[1], [1], [0], [0], [0, 0, 1, 0], [], []>} : vector<8x8xf32>, vector<8x8xf32>, vector<8x8xf32> -> vector<8x8xf32>
    %cst_97 = arith.constant 0.353553385 : f32
    %200 = vector.broadcast %cst_97 : f32 to vector<8x8xf32>
    %201 = arith.mulf %199, %200 : vector<8x8xf32>
    %cst_98 = arith.constant dense<0xFF800000> : vector<8xf32>
    %202 = vector.multi_reduction <maximumf>, %201, %cst_98 [1] : vector<8x8xf32> to vector<8xf32>
    %203 = vector.shape_cast %202 : vector<8xf32> to vector<8x1xf32>
    %204 = vector.broadcast %203 : vector<8x1xf32> to vector<8x8xf32>
    %205 = arith.subf %201, %204 : vector<8x8xf32>
    %206 = math.exp %205 : vector<8x8xf32>
    %cst_99 = arith.constant dense<0.000000e+00> : vector<8xf32>
    %207 = vector.multi_reduction <add>, %206, %cst_99 [1] : vector<8x8xf32> to vector<8xf32>
    %208 = vector.shape_cast %207 : vector<8xf32> to vector<8x1xf32>
    %209 = tpu.reciprocal %208 {approx = true} : vector<8x1xf32> -> vector<8x1xf32>
    %210 = vector.broadcast %209 : vector<8x1xf32> to vector<8x8xf32>
    %211 = arith.mulf %206, %210 : vector<8x8xf32>
    %cst_100 = arith.constant dense<0.000000e+00> : vector<8x8xf32>
    %212 = tpu.matmul %211, %198, %cst_100 {dimension_numbers = #tpu.dot_dimension_numbers<[1], [0], [0], [1], [0, 0, 1, 1], [], []>} : vector<8x8xf32>, vector<8x8xf32>, vector<8x8xf32> -> vector<8x8xf32>
    %213 = vector.extract_strided_slice %176 {offsets = [0, 16], sizes = [8, 8], strides = [1, 1]} : vector<8x32xf32> to vector<8x8xf32>
    %214 = vector.extract_strided_slice %177 {offsets = [0, 16], sizes = [8, 8], strides = [1, 1]} : vector<8x32xf32> to vector<8x8xf32>
    %215 = vector.extract_strided_slice %178 {offsets = [0, 16], sizes = [8, 8], strides = [1, 1]} : vector<8x32xf32> to vector<8x8xf32>
    %cst_101 = arith.constant dense<0.000000e+00> : vector<8x8xf32>
    %216 = tpu.matmul %213, %214, %cst_101 {dimension_numbers = #tpu.dot_dimension_numbers<[1], [1], [0], [0], [0, 0, 1, 0], [], []>} : vector<8x8xf32>, vector<8x8xf32>, vector<8x8xf32> -> vector<8x8xf32>
    %cst_102 = arith.constant 0.353553385 : f32
    %217 = vector.broadcast %cst_102 : f32 to vector<8x8xf32>
    %218 = arith.mulf %216, %217 : vector<8x8xf32>
    %cst_103 = arith.constant dense<0xFF800000> : vector<8xf32>
    %219 = vector.multi_reduction <maximumf>, %218, %cst_103 [1] : vector<8x8xf32> to vector<8xf32>
    %220 = vector.shape_cast %219 : vector<8xf32> to vector<8x1xf32>
    %221 = vector.broadcast %220 : vector<8x1xf32> to vector<8x8xf32>
    %222 = arith.subf %218, %221 : vector<8x8xf32>
    %223 = math.exp %222 : vector<8x8xf32>
    %cst_104 = arith.constant dense<0.000000e+00> : vector<8xf32>
    %224 = vector.multi_reduction <add>, %223, %cst_104 [1] : vector<8x8xf32> to vector<8xf32>
    %225 = vector.shape_cast %224 : vector<8xf32> to vector<8x1xf32>
    %226 = tpu.reciprocal %225 {approx = true} : vector<8x1xf32> -> vector<8x1xf32>
    %227 = vector.broadcast %226 : vector<8x1xf32> to vector<8x8xf32>
    %228 = arith.mulf %223, %227 : vector<8x8xf32>
    %cst_105 = arith.constant dense<0.000000e+00> : vector<8x8xf32>
    %229 = tpu.matmul %228, %215, %cst_105 {dimension_numbers = #tpu.dot_dimension_numbers<[1], [0], [0], [1], [0, 0, 1, 1], [], []>} : vector<8x8xf32>, vector<8x8xf32>, vector<8x8xf32> -> vector<8x8xf32>
    %230 = vector.extract_strided_slice %176 {offsets = [0, 24], sizes = [8, 8], strides = [1, 1]} : vector<8x32xf32> to vector<8x8xf32>
    %231 = vector.extract_strided_slice %177 {offsets = [0, 24], sizes = [8, 8], strides = [1, 1]} : vector<8x32xf32> to vector<8x8xf32>
    %232 = vector.extract_strided_slice %178 {offsets = [0, 24], sizes = [8, 8], strides = [1, 1]} : vector<8x32xf32> to vector<8x8xf32>
    %cst_106 = arith.constant dense<0.000000e+00> : vector<8x8xf32>
    %233 = tpu.matmul %230, %231, %cst_106 {dimension_numbers = #tpu.dot_dimension_numbers<[1], [1], [0], [0], [0, 0, 1, 0], [], []>} : vector<8x8xf32>, vector<8x8xf32>, vector<8x8xf32> -> vector<8x8xf32>
    %cst_107 = arith.constant 0.353553385 : f32
    %234 = vector.broadcast %cst_107 : f32 to vector<8x8xf32>
    %235 = arith.mulf %233, %234 : vector<8x8xf32>
    %cst_108 = arith.constant dense<0xFF800000> : vector<8xf32>
    %236 = vector.multi_reduction <maximumf>, %235, %cst_108 [1] : vector<8x8xf32> to vector<8xf32>
    %237 = vector.shape_cast %236 : vector<8xf32> to vector<8x1xf32>
    %238 = vector.broadcast %237 : vector<8x1xf32> to vector<8x8xf32>
    %239 = arith.subf %235, %238 : vector<8x8xf32>
    %240 = math.exp %239 : vector<8x8xf32>
    %cst_109 = arith.constant dense<0.000000e+00> : vector<8xf32>
    %241 = vector.multi_reduction <add>, %240, %cst_109 [1] : vector<8x8xf32> to vector<8xf32>
    %242 = vector.shape_cast %241 : vector<8xf32> to vector<8x1xf32>
    %243 = tpu.reciprocal %242 {approx = true} : vector<8x1xf32> -> vector<8x1xf32>
    %244 = vector.broadcast %243 : vector<8x1xf32> to vector<8x8xf32>
    %245 = arith.mulf %240, %244 : vector<8x8xf32>
    %cst_110 = arith.constant dense<0.000000e+00> : vector<8x8xf32>
    %246 = tpu.matmul %245, %232, %cst_110 {dimension_numbers = #tpu.dot_dimension_numbers<[1], [0], [0], [1], [0, 0, 1, 1], [], []>} : vector<8x8xf32>, vector<8x8xf32>, vector<8x8xf32> -> vector<8x8xf32>
    %247 = tpu.concatenate %195, %212, %229, %246 in 1 : vector<8x8xf32>, vector<8x8xf32>, vector<8x8xf32>, vector<8x8xf32> -> vector<8x32xf32>
    %cst_111 = arith.constant dense<0.000000e+00> : vector<8x32xf32>
    %248 = tpu.matmul %247, %170, %cst_111 {dimension_numbers = #tpu.dot_dimension_numbers<[1], [0], [0], [1], [0, 0, 1, 1], [], []>} : vector<8x32xf32>, vector<32x32xf32>, vector<8x32xf32> -> vector<8x32xf32>
    %249 = vector.broadcast %172 : vector<1x32xf32> to vector<8x32xf32>
    %250 = arith.addf %248, %249 : vector<8x32xf32>
    %251 = arith.addf %164, %250 : vector<8x32xf32>
    %c1_112 = arith.constant 1 : index
    %c0_113 = arith.constant 0 : index
    %c0_114 = arith.constant 0 : index
    %252 = vector.load %arg9[%c1_112, %c0_113, %c0_114] : memref<2x1x32xf32, #tpu.memory_space<vmem>>, vector<1x1x32xf32>
    %253 = vector.shape_cast %252 : vector<1x1x32xf32> to vector<1x32xf32>
    %c1_115 = arith.constant 1 : index
    %c0_116 = arith.constant 0 : index
    %c0_117 = arith.constant 0 : index
    %254 = vector.load %arg10[%c1_115, %c0_116, %c0_117] : memref<2x1x32xf32, #tpu.memory_space<vmem>>, vector<1x1x32xf32>
    %255 = vector.shape_cast %254 : vector<1x1x32xf32> to vector<1x32xf32>
    %cst_118 = arith.constant dense<0.000000e+00> : vector<8xf32>
    %256 = vector.multi_reduction <add>, %251, %cst_118 [1] : vector<8x32xf32> to vector<8xf32>
    %257 = vector.shape_cast %256 : vector<8xf32> to vector<8x1xf32>
    %cst_119 = arith.constant 3.200000e+01 : f32
    %258 = vector.broadcast %cst_119 : f32 to vector<8x1xf32>
    %259 = arith.divf %257, %258 : vector<8x1xf32>
    %260 = vector.broadcast %259 : vector<8x1xf32> to vector<8x32xf32>
    %261 = arith.subf %251, %260 : vector<8x32xf32>
    %262 = arith.mulf %261, %261 : vector<8x32xf32>
    %cst_120 = arith.constant dense<0.000000e+00> : vector<8xf32>
    %263 = vector.multi_reduction <add>, %262, %cst_120 [1] : vector<8x32xf32> to vector<8xf32>
    %264 = vector.shape_cast %263 : vector<8xf32> to vector<8x1xf32>
    %cst_121 = arith.constant 3.200000e+01 : f32
    %265 = vector.broadcast %cst_121 : f32 to vector<8x1xf32>
    %266 = arith.divf %264, %265 : vector<8x1xf32>
    %267 = vector.broadcast %259 : vector<8x1xf32> to vector<8x32xf32>
    %268 = arith.subf %251, %267 : vector<8x32xf32>
    %cst_122 = arith.constant 9.99999974E-6 : f32
    %269 = vector.broadcast %cst_122 : f32 to vector<8x1xf32>
    %270 = arith.addf %266, %269 : vector<8x1xf32>
    %271 = math.rsqrt %270 : vector<8x1xf32>
    %272 = vector.broadcast %271 : vector<8x1xf32> to vector<8x32xf32>
    %273 = arith.mulf %268, %272 : vector<8x32xf32>
    %274 = vector.broadcast %253 : vector<1x32xf32> to vector<8x32xf32>
    %275 = arith.mulf %273, %274 : vector<8x32xf32>
    %276 = vector.broadcast %255 : vector<1x32xf32> to vector<8x32xf32>
    %277 = arith.addf %275, %276 : vector<8x32xf32>
    %c1_123 = arith.constant 1 : index
    %c0_124 = arith.constant 0 : index
    %c0_125 = arith.constant 0 : index
    %278 = vector.load %arg11[%c1_123, %c0_124, %c0_125] : memref<2x32x128xf32, #tpu.memory_space<vmem>>, vector<1x32x128xf32>
    %279 = vector.shape_cast %278 : vector<1x32x128xf32> to vector<32x128xf32>
    %cst_126 = arith.constant dense<0.000000e+00> : vector<8x128xf32>
    %280 = tpu.matmul %277, %279, %cst_126 {dimension_numbers = #tpu.dot_dimension_numbers<[1], [0], [0], [1], [0, 0, 1, 1], [], []>} : vector<8x32xf32>, vector<32x128xf32>, vector<8x128xf32> -> vector<8x128xf32>
    %c1_127 = arith.constant 1 : index
    %c0_128 = arith.constant 0 : index
    %c0_129 = arith.constant 0 : index
    %281 = vector.load %arg12[%c1_127, %c0_128, %c0_129] : memref<2x1x128xf32, #tpu.memory_space<vmem>>, vector<1x1x128xf32>
    %282 = vector.shape_cast %281 : vector<1x1x128xf32> to vector<1x128xf32>
    %283 = vector.broadcast %282 : vector<1x128xf32> to vector<8x128xf32>
    %284 = arith.addf %280, %283 : vector<8x128xf32>
    %cst_130 = arith.constant 0.000000e+00 : f32
    %285 = vector.broadcast %cst_130 : f32 to vector<8x128xf32>
    %286 = arith.maximumf %284, %285 : vector<8x128xf32>
    %c1_131 = arith.constant 1 : index
    %c0_132 = arith.constant 0 : index
    %c0_133 = arith.constant 0 : index
    %287 = vector.load %arg13[%c1_131, %c0_132, %c0_133] : memref<2x128x32xf32, #tpu.memory_space<vmem>>, vector<1x128x32xf32>
    %288 = vector.shape_cast %287 : vector<1x128x32xf32> to vector<128x32xf32>
    %cst_134 = arith.constant dense<0.000000e+00> : vector<8x32xf32>
    %289 = tpu.matmul %286, %288, %cst_134 {dimension_numbers = #tpu.dot_dimension_numbers<[1], [0], [0], [1], [0, 0, 1, 1], [], []>} : vector<8x128xf32>, vector<128x32xf32>, vector<8x32xf32> -> vector<8x32xf32>
    %c1_135 = arith.constant 1 : index
    %c0_136 = arith.constant 0 : index
    %c0_137 = arith.constant 0 : index
    %290 = vector.load %arg14[%c1_135, %c0_136, %c0_137] : memref<2x1x32xf32, #tpu.memory_space<vmem>>, vector<1x1x32xf32>
    %291 = vector.shape_cast %290 : vector<1x1x32xf32> to vector<1x32xf32>
    %292 = vector.broadcast %291 : vector<1x32xf32> to vector<8x32xf32>
    %293 = arith.addf %289, %292 : vector<8x32xf32>
    %294 = arith.addf %277, %293 : vector<8x32xf32>
    %c1_138 = arith.constant 1 : index
    %c0_139 = arith.constant 0 : index
    %c0_140 = arith.constant 0 : index
    %295 = vector.load %arg15[%c1_138, %c0_139, %c0_140] : memref<2x1x32xf32, #tpu.memory_space<vmem>>, vector<1x1x32xf32>
    %296 = vector.shape_cast %295 : vector<1x1x32xf32> to vector<1x32xf32>
    %c1_141 = arith.constant 1 : index
    %c0_142 = arith.constant 0 : index
    %c0_143 = arith.constant 0 : index
    %297 = vector.load %arg16[%c1_141, %c0_142, %c0_143] : memref<2x1x32xf32, #tpu.memory_space<vmem>>, vector<1x1x32xf32>
    %298 = vector.shape_cast %297 : vector<1x1x32xf32> to vector<1x32xf32>
    %cst_144 = arith.constant dense<0.000000e+00> : vector<8xf32>
    %299 = vector.multi_reduction <add>, %294, %cst_144 [1] : vector<8x32xf32> to vector<8xf32>
    %300 = vector.shape_cast %299 : vector<8xf32> to vector<8x1xf32>
    %cst_145 = arith.constant 3.200000e+01 : f32
    %301 = vector.broadcast %cst_145 : f32 to vector<8x1xf32>
    %302 = arith.divf %300, %301 : vector<8x1xf32>
    %303 = vector.broadcast %302 : vector<8x1xf32> to vector<8x32xf32>
    %304 = arith.subf %294, %303 : vector<8x32xf32>
    %305 = arith.mulf %304, %304 : vector<8x32xf32>
    %cst_146 = arith.constant dense<0.000000e+00> : vector<8xf32>
    %306 = vector.multi_reduction <add>, %305, %cst_146 [1] : vector<8x32xf32> to vector<8xf32>
    %307 = vector.shape_cast %306 : vector<8xf32> to vector<8x1xf32>
    %cst_147 = arith.constant 3.200000e+01 : f32
    %308 = vector.broadcast %cst_147 : f32 to vector<8x1xf32>
    %309 = arith.divf %307, %308 : vector<8x1xf32>
    %310 = vector.broadcast %302 : vector<8x1xf32> to vector<8x32xf32>
    %311 = arith.subf %294, %310 : vector<8x32xf32>
    %cst_148 = arith.constant 9.99999974E-6 : f32
    %312 = vector.broadcast %cst_148 : f32 to vector<8x1xf32>
    %313 = arith.addf %309, %312 : vector<8x1xf32>
    %314 = math.rsqrt %313 : vector<8x1xf32>
    %315 = vector.broadcast %314 : vector<8x1xf32> to vector<8x32xf32>
    %316 = arith.mulf %311, %315 : vector<8x32xf32>
    %317 = vector.broadcast %296 : vector<1x32xf32> to vector<8x32xf32>
    %318 = arith.mulf %316, %317 : vector<8x32xf32>
    %319 = vector.broadcast %298 : vector<1x32xf32> to vector<8x32xf32>
    %320 = arith.addf %318, %319 : vector<8x32xf32>
    %c0_149 = arith.constant 0 : index
    %c0_150 = arith.constant 0 : index
    %321 = vector.load %arg17[%c0_149, %c0_150] : memref<32x96xf32, #tpu.memory_space<vmem>>, vector<32x96xf32>
    %c0_151 = arith.constant 0 : index
    %c0_152 = arith.constant 0 : index
    %322 = vector.load %arg18[%c0_151, %c0_152] : memref<1x96xf32, #tpu.memory_space<vmem>>, vector<1x96xf32>
    %c0_153 = arith.constant 0 : index
    %c0_154 = arith.constant 0 : index
    %323 = vector.load %arg19[%c0_153, %c0_154] : memref<32x32xf32, #tpu.memory_space<vmem>>, vector<32x32xf32>
    %c0_155 = arith.constant 0 : index
    %c0_156 = arith.constant 0 : index
    %324 = vector.load %arg20[%c0_155, %c0_156] : memref<1x32xf32, #tpu.memory_space<vmem>>, vector<1x32xf32>
    %cst_157 = arith.constant dense<0.000000e+00> : vector<8x96xf32>
    %325 = tpu.matmul %320, %321, %cst_157 {dimension_numbers = #tpu.dot_dimension_numbers<[1], [0], [0], [1], [0, 0, 1, 1], [], []>} : vector<8x32xf32>, vector<32x96xf32>, vector<8x96xf32> -> vector<8x96xf32>
    %326 = vector.broadcast %322 : vector<1x96xf32> to vector<8x96xf32>
    %327 = arith.addf %325, %326 : vector<8x96xf32>
    %328 = vector.extract_strided_slice %327 {offsets = [0, 0], sizes = [8, 32], strides = [1, 1]} : vector<8x96xf32> to vector<8x32xf32>
    %329 = vector.extract_strided_slice %327 {offsets = [0, 32], sizes = [8, 32], strides = [1, 1]} : vector<8x96xf32> to vector<8x32xf32>
    %330 = vector.extract_strided_slice %327 {offsets = [0, 64], sizes = [8, 32], strides = [1, 1]} : vector<8x96xf32> to vector<8x32xf32>
    %331 = vector.extract_strided_slice %328 {offsets = [0, 0], sizes = [8, 8], strides = [1, 1]} : vector<8x32xf32> to vector<8x8xf32>
    %332 = vector.extract_strided_slice %329 {offsets = [0, 0], sizes = [8, 8], strides = [1, 1]} : vector<8x32xf32> to vector<8x8xf32>
    %333 = vector.extract_strided_slice %330 {offsets = [0, 0], sizes = [8, 8], strides = [1, 1]} : vector<8x32xf32> to vector<8x8xf32>
    %cst_158 = arith.constant dense<0.000000e+00> : vector<8x8xf32>
    %334 = tpu.matmul %331, %332, %cst_158 {dimension_numbers = #tpu.dot_dimension_numbers<[1], [1], [0], [0], [0, 0, 1, 0], [], []>} : vector<8x8xf32>, vector<8x8xf32>, vector<8x8xf32> -> vector<8x8xf32>
    %cst_159 = arith.constant 0.353553385 : f32
    %335 = vector.broadcast %cst_159 : f32 to vector<8x8xf32>
    %336 = arith.mulf %334, %335 : vector<8x8xf32>
    %cst_160 = arith.constant dense<0xFF800000> : vector<8xf32>
    %337 = vector.multi_reduction <maximumf>, %336, %cst_160 [1] : vector<8x8xf32> to vector<8xf32>
    %338 = vector.shape_cast %337 : vector<8xf32> to vector<8x1xf32>
    %339 = vector.broadcast %338 : vector<8x1xf32> to vector<8x8xf32>
    %340 = arith.subf %336, %339 : vector<8x8xf32>
    %341 = math.exp %340 : vector<8x8xf32>
    %cst_161 = arith.constant dense<0.000000e+00> : vector<8xf32>
    %342 = vector.multi_reduction <add>, %341, %cst_161 [1] : vector<8x8xf32> to vector<8xf32>
    %343 = vector.shape_cast %342 : vector<8xf32> to vector<8x1xf32>
    %344 = tpu.reciprocal %343 {approx = true} : vector<8x1xf32> -> vector<8x1xf32>
    %345 = vector.broadcast %344 : vector<8x1xf32> to vector<8x8xf32>
    %346 = arith.mulf %341, %345 : vector<8x8xf32>
    %cst_162 = arith.constant dense<0.000000e+00> : vector<8x8xf32>
    %347 = tpu.matmul %346, %333, %cst_162 {dimension_numbers = #tpu.dot_dimension_numbers<[1], [0], [0], [1], [0, 0, 1, 1], [], []>} : vector<8x8xf32>, vector<8x8xf32>, vector<8x8xf32> -> vector<8x8xf32>
    %348 = vector.extract_strided_slice %328 {offsets = [0, 8], sizes = [8, 8], strides = [1, 1]} : vector<8x32xf32> to vector<8x8xf32>
    %349 = vector.extract_strided_slice %329 {offsets = [0, 8], sizes = [8, 8], strides = [1, 1]} : vector<8x32xf32> to vector<8x8xf32>
    %350 = vector.extract_strided_slice %330 {offsets = [0, 8], sizes = [8, 8], strides = [1, 1]} : vector<8x32xf32> to vector<8x8xf32>
    %cst_163 = arith.constant dense<0.000000e+00> : vector<8x8xf32>
    %351 = tpu.matmul %348, %349, %cst_163 {dimension_numbers = #tpu.dot_dimension_numbers<[1], [1], [0], [0], [0, 0, 1, 0], [], []>} : vector<8x8xf32>, vector<8x8xf32>, vector<8x8xf32> -> vector<8x8xf32>
    %cst_164 = arith.constant 0.353553385 : f32
    %352 = vector.broadcast %cst_164 : f32 to vector<8x8xf32>
    %353 = arith.mulf %351, %352 : vector<8x8xf32>
    %cst_165 = arith.constant dense<0xFF800000> : vector<8xf32>
    %354 = vector.multi_reduction <maximumf>, %353, %cst_165 [1] : vector<8x8xf32> to vector<8xf32>
    %355 = vector.shape_cast %354 : vector<8xf32> to vector<8x1xf32>
    %356 = vector.broadcast %355 : vector<8x1xf32> to vector<8x8xf32>
    %357 = arith.subf %353, %356 : vector<8x8xf32>
    %358 = math.exp %357 : vector<8x8xf32>
    %cst_166 = arith.constant dense<0.000000e+00> : vector<8xf32>
    %359 = vector.multi_reduction <add>, %358, %cst_166 [1] : vector<8x8xf32> to vector<8xf32>
    %360 = vector.shape_cast %359 : vector<8xf32> to vector<8x1xf32>
    %361 = tpu.reciprocal %360 {approx = true} : vector<8x1xf32> -> vector<8x1xf32>
    %362 = vector.broadcast %361 : vector<8x1xf32> to vector<8x8xf32>
    %363 = arith.mulf %358, %362 : vector<8x8xf32>
    %cst_167 = arith.constant dense<0.000000e+00> : vector<8x8xf32>
    %364 = tpu.matmul %363, %350, %cst_167 {dimension_numbers = #tpu.dot_dimension_numbers<[1], [0], [0], [1], [0, 0, 1, 1], [], []>} : vector<8x8xf32>, vector<8x8xf32>, vector<8x8xf32> -> vector<8x8xf32>
    %365 = vector.extract_strided_slice %328 {offsets = [0, 16], sizes = [8, 8], strides = [1, 1]} : vector<8x32xf32> to vector<8x8xf32>
    %366 = vector.extract_strided_slice %329 {offsets = [0, 16], sizes = [8, 8], strides = [1, 1]} : vector<8x32xf32> to vector<8x8xf32>
    %367 = vector.extract_strided_slice %330 {offsets = [0, 16], sizes = [8, 8], strides = [1, 1]} : vector<8x32xf32> to vector<8x8xf32>
    %cst_168 = arith.constant dense<0.000000e+00> : vector<8x8xf32>
    %368 = tpu.matmul %365, %366, %cst_168 {dimension_numbers = #tpu.dot_dimension_numbers<[1], [1], [0], [0], [0, 0, 1, 0], [], []>} : vector<8x8xf32>, vector<8x8xf32>, vector<8x8xf32> -> vector<8x8xf32>
    %cst_169 = arith.constant 0.353553385 : f32
    %369 = vector.broadcast %cst_169 : f32 to vector<8x8xf32>
    %370 = arith.mulf %368, %369 : vector<8x8xf32>
    %cst_170 = arith.constant dense<0xFF800000> : vector<8xf32>
    %371 = vector.multi_reduction <maximumf>, %370, %cst_170 [1] : vector<8x8xf32> to vector<8xf32>
    %372 = vector.shape_cast %371 : vector<8xf32> to vector<8x1xf32>
    %373 = vector.broadcast %372 : vector<8x1xf32> to vector<8x8xf32>
    %374 = arith.subf %370, %373 : vector<8x8xf32>
    %375 = math.exp %374 : vector<8x8xf32>
    %cst_171 = arith.constant dense<0.000000e+00> : vector<8xf32>
    %376 = vector.multi_reduction <add>, %375, %cst_171 [1] : vector<8x8xf32> to vector<8xf32>
    %377 = vector.shape_cast %376 : vector<8xf32> to vector<8x1xf32>
    %378 = tpu.reciprocal %377 {approx = true} : vector<8x1xf32> -> vector<8x1xf32>
    %379 = vector.broadcast %378 : vector<8x1xf32> to vector<8x8xf32>
    %380 = arith.mulf %375, %379 : vector<8x8xf32>
    %cst_172 = arith.constant dense<0.000000e+00> : vector<8x8xf32>
    %381 = tpu.matmul %380, %367, %cst_172 {dimension_numbers = #tpu.dot_dimension_numbers<[1], [0], [0], [1], [0, 0, 1, 1], [], []>} : vector<8x8xf32>, vector<8x8xf32>, vector<8x8xf32> -> vector<8x8xf32>
    %382 = vector.extract_strided_slice %328 {offsets = [0, 24], sizes = [8, 8], strides = [1, 1]} : vector<8x32xf32> to vector<8x8xf32>
    %383 = vector.extract_strided_slice %329 {offsets = [0, 24], sizes = [8, 8], strides = [1, 1]} : vector<8x32xf32> to vector<8x8xf32>
    %384 = vector.extract_strided_slice %330 {offsets = [0, 24], sizes = [8, 8], strides = [1, 1]} : vector<8x32xf32> to vector<8x8xf32>
    %cst_173 = arith.constant dense<0.000000e+00> : vector<8x8xf32>
    %385 = tpu.matmul %382, %383, %cst_173 {dimension_numbers = #tpu.dot_dimension_numbers<[1], [1], [0], [0], [0, 0, 1, 0], [], []>} : vector<8x8xf32>, vector<8x8xf32>, vector<8x8xf32> -> vector<8x8xf32>
    %cst_174 = arith.constant 0.353553385 : f32
    %386 = vector.broadcast %cst_174 : f32 to vector<8x8xf32>
    %387 = arith.mulf %385, %386 : vector<8x8xf32>
    %cst_175 = arith.constant dense<0xFF800000> : vector<8xf32>
    %388 = vector.multi_reduction <maximumf>, %387, %cst_175 [1] : vector<8x8xf32> to vector<8xf32>
    %389 = vector.shape_cast %388 : vector<8xf32> to vector<8x1xf32>
    %390 = vector.broadcast %389 : vector<8x1xf32> to vector<8x8xf32>
    %391 = arith.subf %387, %390 : vector<8x8xf32>
    %392 = math.exp %391 : vector<8x8xf32>
    %cst_176 = arith.constant dense<0.000000e+00> : vector<8xf32>
    %393 = vector.multi_reduction <add>, %392, %cst_176 [1] : vector<8x8xf32> to vector<8xf32>
    %394 = vector.shape_cast %393 : vector<8xf32> to vector<8x1xf32>
    %395 = tpu.reciprocal %394 {approx = true} : vector<8x1xf32> -> vector<8x1xf32>
    %396 = vector.broadcast %395 : vector<8x1xf32> to vector<8x8xf32>
    %397 = arith.mulf %392, %396 : vector<8x8xf32>
    %cst_177 = arith.constant dense<0.000000e+00> : vector<8x8xf32>
    %398 = tpu.matmul %397, %384, %cst_177 {dimension_numbers = #tpu.dot_dimension_numbers<[1], [0], [0], [1], [0, 0, 1, 1], [], []>} : vector<8x8xf32>, vector<8x8xf32>, vector<8x8xf32> -> vector<8x8xf32>
    %399 = tpu.concatenate %347, %364, %381, %398 in 1 : vector<8x8xf32>, vector<8x8xf32>, vector<8x8xf32>, vector<8x8xf32> -> vector<8x32xf32>
    %cst_178 = arith.constant dense<0.000000e+00> : vector<8x32xf32>
    %400 = tpu.matmul %399, %323, %cst_178 {dimension_numbers = #tpu.dot_dimension_numbers<[1], [0], [0], [1], [0, 0, 1, 1], [], []>} : vector<8x32xf32>, vector<32x32xf32>, vector<8x32xf32> -> vector<8x32xf32>
    %401 = vector.broadcast %324 : vector<1x32xf32> to vector<8x32xf32>
    %402 = arith.addf %400, %401 : vector<8x32xf32>
    %403 = arith.addf %320, %402 : vector<8x32xf32>
    %c0_179 = arith.constant 0 : index
    %c0_180 = arith.constant 0 : index
    %404 = vector.load %arg21[%c0_179, %c0_180] : memref<1x32xf32, #tpu.memory_space<vmem>>, vector<1x32xf32>
    %c0_181 = arith.constant 0 : index
    %c0_182 = arith.constant 0 : index
    %405 = vector.load %arg22[%c0_181, %c0_182] : memref<1x32xf32, #tpu.memory_space<vmem>>, vector<1x32xf32>
    %cst_183 = arith.constant dense<0.000000e+00> : vector<8xf32>
    %406 = vector.multi_reduction <add>, %403, %cst_183 [1] : vector<8x32xf32> to vector<8xf32>
    %407 = vector.shape_cast %406 : vector<8xf32> to vector<8x1xf32>
    %cst_184 = arith.constant 3.200000e+01 : f32
    %408 = vector.broadcast %cst_184 : f32 to vector<8x1xf32>
    %409 = arith.divf %407, %408 : vector<8x1xf32>
    %410 = vector.broadcast %409 : vector<8x1xf32> to vector<8x32xf32>
    %411 = arith.subf %403, %410 : vector<8x32xf32>
    %412 = arith.mulf %411, %411 : vector<8x32xf32>
    %cst_185 = arith.constant dense<0.000000e+00> : vector<8xf32>
    %413 = vector.multi_reduction <add>, %412, %cst_185 [1] : vector<8x32xf32> to vector<8xf32>
    %414 = vector.shape_cast %413 : vector<8xf32> to vector<8x1xf32>
    %cst_186 = arith.constant 3.200000e+01 : f32
    %415 = vector.broadcast %cst_186 : f32 to vector<8x1xf32>
    %416 = arith.divf %414, %415 : vector<8x1xf32>
    %417 = vector.broadcast %409 : vector<8x1xf32> to vector<8x32xf32>
    %418 = arith.subf %403, %417 : vector<8x32xf32>
    %cst_187 = arith.constant 9.99999974E-6 : f32
    %419 = vector.broadcast %cst_187 : f32 to vector<8x1xf32>
    %420 = arith.addf %416, %419 : vector<8x1xf32>
    %421 = math.rsqrt %420 : vector<8x1xf32>
    %422 = vector.broadcast %421 : vector<8x1xf32> to vector<8x32xf32>
    %423 = arith.mulf %418, %422 : vector<8x32xf32>
    %424 = vector.broadcast %404 : vector<1x32xf32> to vector<8x32xf32>
    %425 = arith.mulf %423, %424 : vector<8x32xf32>
    %426 = vector.broadcast %405 : vector<1x32xf32> to vector<8x32xf32>
    %427 = arith.addf %425, %426 : vector<8x32xf32>
    %cst_188 = arith.constant dense<0.000000e+00> : vector<32xf32>
    %428 = vector.multi_reduction <add>, %427, %cst_188 [0] : vector<8x32xf32> to vector<32xf32>
    %429 = vector.shape_cast %428 : vector<32xf32> to vector<1x32xf32>
    %cst_189 = arith.constant 8.000000e+00 : f32
    %430 = vector.broadcast %cst_189 : f32 to vector<1x32xf32>
    %431 = arith.divf %429, %430 : vector<1x32xf32>
    %c0_190 = arith.constant 0 : index
    %c0_191 = arith.constant 0 : index
    %432 = vector.load %arg23[%c0_190, %c0_191] : memref<32x2xf32, #tpu.memory_space<vmem>>, vector<32x2xf32>
    %cst_192 = arith.constant dense<0.000000e+00> : vector<1x2xf32>
    %433 = tpu.matmul %431, %432, %cst_192 {dimension_numbers = #tpu.dot_dimension_numbers<[1], [0], [0], [1], [0, 0, 1, 1], [], []>} : vector<1x32xf32>, vector<32x2xf32>, vector<1x2xf32> -> vector<1x2xf32>
    %c0_193 = arith.constant 0 : index
    %c0_194 = arith.constant 0 : index
    %434 = vector.load %arg24[%c0_193, %c0_194] : memref<1x2xf32, #tpu.memory_space<vmem>>, vector<1x2xf32>
    %435 = arith.addf %433, %434 : vector<1x2xf32>
    %c0_195 = arith.constant 0 : index
    %c0_196 = arith.constant 0 : index
    %c0_197 = arith.constant 0 : index
    %436 = vector.load %arg25[%c0_195, %c0_196, %c0_197] : memref<1x1x2xf32, #tpu.memory_space<vmem>>, vector<1x1x2xf32>
    %437 = vector.shape_cast %436 : vector<1x1x2xf32> to vector<1x2xf32>
    %438 = vector.shape_cast %435 : vector<1x2xf32> to vector<1x1x2xf32>
    tpu.vector_store %arg25[%c0_195, %c0_196, %c0_197], %438 {strides = array<i32>} : memref<1x1x2xf32, #tpu.memory_space<vmem>>, vector<1x1x2xf32>,
    return
  }
  func.func @transform_0(%arg0: i32) -> (i32, i32, i32) {
    %c0_i32 = arith.constant 0 : i32
    %c0_i32_0 = arith.constant 0 : i32
    %c0_i32_1 = arith.constant 0 : i32
    return %arg0, %c0_i32, %c0_i32_0 : i32, i32, i32
  }
  func.func @transform_1(%arg0: i32) -> (i32, i32) {
    %c0_i32 = arith.constant 0 : i32
    %c0_i32_0 = arith.constant 0 : i32
    %c0_i32_1 = arith.constant 0 : i32
    return %c0_i32, %c0_i32_0 : i32, i32
  }
  func.func @transform_2(%arg0: i32) -> (i32, i32) {
    %c0_i32 = arith.constant 0 : i32
    %c0_i32_0 = arith.constant 0 : i32
    %c0_i32_1 = arith.constant 0 : i32
    return %c0_i32, %c0_i32_0 : i32, i32
  }
  func.func @transform_3(%arg0: i32) -> (i32, i32) {
    %c0_i32 = arith.constant 0 : i32
    %c0_i32_0 = arith.constant 0 : i32
    %c0_i32_1 = arith.constant 0 : i32
    return %c0_i32, %c0_i32_0 : i32, i32
  }
  func.func @transform_4(%arg0: i32) -> (i32, i32, i32) {
    %c0_i32 = arith.constant 0 : i32
    %c0_i32_0 = arith.constant 0 : i32
    %c0_i32_1 = arith.constant 0 : i32
    %c0_i32_2 = arith.constant 0 : i32
    return %c0_i32, %c0_i32_0, %c0_i32_1 : i32, i32, i32
  }
  func.func @transform_5(%arg0: i32) -> (i32, i32, i32) {
    %c0_i32 = arith.constant 0 : i32
    %c0_i32_0 = arith.constant 0 : i32
    %c0_i32_1 = arith.constant 0 : i32
    %c0_i32_2 = arith.constant 0 : i32
    return %c0_i32, %c0_i32_0, %c0_i32_1 : i32, i32, i32
  }
  func.func @transform_6(%arg0: i32) -> (i32, i32, i32) {
    %c0_i32 = arith.constant 0 : i32
    %c0_i32_0 = arith.constant 0 : i32
    %c0_i32_1 = arith.constant 0 : i32
    %c0_i32_2 = arith.constant 0 : i32
    return %c0_i32, %c0_i32_0, %c0_i32_1 : i32, i32, i32
  }
  func.func @transform_7(%arg0: i32) -> (i32, i32, i32) {
    %c0_i32 = arith.constant 0 : i32
    %c0_i32_0 = arith.constant 0 : i32
    %c0_i32_1 = arith.constant 0 : i32
    %c0_i32_2 = arith.constant 0 : i32
    return %c0_i32, %c0_i32_0, %c0_i32_1 : i32, i32, i32
  }
  func.func @transform_8(%arg0: i32) -> (i32, i32, i32) {
    %c0_i32 = arith.constant 0 : i32
    %c0_i32_0 = arith.constant 0 : i32
    %c0_i32_1 = arith.constant 0 : i32
    %c0_i32_2 = arith.constant 0 : i32
    return %c0_i32, %c0_i32_0, %c0_i32_1 : i32, i32, i32
  }
  func.func @transform_9(%arg0: i32) -> (i32, i32, i32) {
    %c0_i32 = arith.constant 0 : i32
    %c0_i32_0 = arith.constant 0 : i32
    %c0_i32_1 = arith.constant 0 : i32
    %c0_i32_2 = arith.constant 0 : i32
    return %c0_i32, %c0_i32_0, %c0_i32_1 : i32, i32, i32
  }
  func.func @transform_10(%arg0: i32) -> (i32, i32, i32) {
    %c0_i32 = arith.constant 0 : i32
    %c0_i32_0 = arith.constant 0 : i32
    %c0_i32_1 = arith.constant 0 : i32
    %c0_i32_2 = arith.constant 0 : i32
    return %c0_i32, %c0_i32_0, %c0_i32_1 : i32, i32, i32
  }
  func.func @transform_11(%arg0: i32) -> (i32, i32, i32) {
    %c0_i32 = arith.constant 0 : i32
    %c0_i32_0 = arith.constant 0 : i32
    %c0_i32_1 = arith.constant 0 : i32
    %c0_i32_2 = arith.constant 0 : i32
    return %c0_i32, %c0_i32_0, %c0_i32_1 : i32, i32, i32
  }
  func.func @transform_12(%arg0: i32) -> (i32, i32, i32) {
    %c0_i32 = arith.constant 0 : i32
    %c0_i32_0 = arith.constant 0 : i32
    %c0_i32_1 = arith.constant 0 : i32
    %c0_i32_2 = arith.constant 0 : i32
    return %c0_i32, %c0_i32_0, %c0_i32_1 : i32, i32, i32
  }
  func.func @transform_13(%arg0: i32) -> (i32, i32, i32) {
    %c0_i32 = arith.constant 0 : i32
    %c0_i32_0 = arith.constant 0 : i32
    %c0_i32_1 = arith.constant 0 : i32
    %c0_i32_2 = arith.constant 0 : i32
    return %c0_i32, %c0_i32_0, %c0_i32_1 : i32, i32, i32
  }
  func.func @transform_14(%arg0: i32) -> (i32, i32, i32) {
    %c0_i32 = arith.constant 0 : i32
    %c0_i32_0 = arith.constant 0 : i32
    %c0_i32_1 = arith.constant 0 : i32
    %c0_i32_2 = arith.constant 0 : i32
    return %c0_i32, %c0_i32_0, %c0_i32_1 : i32, i32, i32
  }
  func.func @transform_15(%arg0: i32) -> (i32, i32, i32) {
    %c0_i32 = arith.constant 0 : i32
    %c0_i32_0 = arith.constant 0 : i32
    %c0_i32_1 = arith.constant 0 : i32
    %c0_i32_2 = arith.constant 0 : i32
    return %c0_i32, %c0_i32_0, %c0_i32_1 : i32, i32, i32
  }
  func.func @transform_16(%arg0: i32) -> (i32, i32) {
    %c0_i32 = arith.constant 0 : i32
    %c0_i32_0 = arith.constant 0 : i32
    %c0_i32_1 = arith.constant 0 : i32
    return %c0_i32, %c0_i32_0 : i32, i32
  }
  func.func @transform_17(%arg0: i32) -> (i32, i32) {
    %c0_i32 = arith.constant 0 : i32
    %c0_i32_0 = arith.constant 0 : i32
    %c0_i32_1 = arith.constant 0 : i32
    return %c0_i32, %c0_i32_0 : i32, i32
  }
  func.func @transform_18(%arg0: i32) -> (i32, i32) {
    %c0_i32 = arith.constant 0 : i32
    %c0_i32_0 = arith.constant 0 : i32
    %c0_i32_1 = arith.constant 0 : i32
    return %c0_i32, %c0_i32_0 : i32, i32
  }
  func.func @transform_19(%arg0: i32) -> (i32, i32) {
    %c0_i32 = arith.constant 0 : i32
    %c0_i32_0 = arith.constant 0 : i32
    %c0_i32_1 = arith.constant 0 : i32
    return %c0_i32, %c0_i32_0 : i32, i32
  }
  func.func @transform_20(%arg0: i32) -> (i32, i32) {
    %c0_i32 = arith.constant 0 : i32
    %c0_i32_0 = arith.constant 0 : i32
    %c0_i32_1 = arith.constant 0 : i32
    return %c0_i32, %c0_i32_0 : i32, i32
  }
  func.func @transform_21(%arg0: i32) -> (i32, i32) {
    %c0_i32 = arith.constant 0 : i32
    %c0_i32_0 = arith.constant 0 : i32
    %c0_i32_1 = arith.constant 0 : i32
    return %c0_i32, %c0_i32_0 : i32, i32
  }
  func.func @transform_22(%arg0: i32) -> (i32, i32) {
    %c0_i32 = arith.constant 0 : i32
    %c0_i32_0 = arith.constant 0 : i32
    %c0_i32_1 = arith.constant 0 : i32
    return %c0_i32, %c0_i32_0 : i32, i32
  }
  func.func @transform_23(%arg0: i32) -> (i32, i32) {
    %c0_i32 = arith.constant 0 : i32
    %c0_i32_0 = arith.constant 0 : i32
    %c0_i32_1 = arith.constant 0 : i32
    return %c0_i32, %c0_i32_0 : i32, i32
  }
  func.func @transform_24(%arg0: i32) -> (i32, i32, i32) {
    %c0_i32 = arith.constant 0 : i32
    %c0_i32_0 = arith.constant 0 : i32
    %c0_i32_1 = arith.constant 0 : i32
    return %arg0, %c0_i32, %c0_i32_0 : i32, i32, i32
  }
}

</mosaic_0001>

<llo_original>
// kernel: tpu_custom_call.1
$region0: #{tpu_custom_call.1}
  #allocation0 [shape = 'u32[]', space=smem, size = 0x4, offset = 0x4, fixed_abs, tag = 'smem constant byte address 0x4 - core index']
  #allocation1 [shape = 'u32[144,128]{1,0:T(1,128)}', space=vmem, size = 0x12000, scoped, tag = 'internal scratch']
  %s0 = inlined_call_operand.vmem [shape: f32[2,8,16], index: 0, kind: input, shape index: {}]
  %s1 = inlined_call_operand.vmem [shape: f32[8,32], index: 1, kind: input, shape index: {}]
  %s2 = inlined_call_operand.vmem [shape: f32[16,32], index: 2, kind: input, shape index: {}]
  %s3 = inlined_call_operand.vmem [shape: f32[1,32], index: 3, kind: input, shape index: {}]
  %s4 = inlined_call_operand.vmem [shape: f32[2,32,96], index: 4, kind: input, shape index: {}]
  %s5 = inlined_call_operand.vmem [shape: f32[2,1,96], index: 5, kind: input, shape index: {}]
  %s6 = inlined_call_operand.vmem [shape: f32[2,32,32], index: 6, kind: input, shape index: {}]
  %s7 = inlined_call_operand.vmem [shape: f32[2,1,32], index: 7, kind: input, shape index: {}]
  %s8 = inlined_call_operand.vmem [shape: f32[2,1,32], index: 8, kind: input, shape index: {}]
  %s9 = inlined_call_operand.vmem [shape: f32[2,1,32], index: 9, kind: input, shape index: {}]
  %s10 = inlined_call_operand.vmem [shape: f32[2,32,128], index: 10, kind: input, shape index: {}]
  %s11 = inlined_call_operand.vmem [shape: f32[2,1,128], index: 11, kind: input, shape index: {}]
  %s12 = inlined_call_operand.vmem [shape: f32[2,128,32], index: 12, kind: input, shape index: {}]
  %s13 = inlined_call_operand.vmem [shape: f32[2,1,32], index: 13, kind: input, shape index: {}]
  %s14 = inlined_call_operand.vmem [shape: f32[2,1,32], index: 14, kind: input, shape index: {}]
  %s15 = inlined_call_operand.vmem [shape: f32[2,1,32], index: 15, kind: input, shape index: {}]
  %s16 = inlined_call_operand.vmem [shape: f32[32,96], index: 16, kind: input, shape index: {}]
  %s17 = inlined_call_operand.vmem [shape: f32[1,96], index: 17, kind: input, shape index: {}]
  %s18 = inlined_call_operand.vmem [shape: f32[32,32], index: 18, kind: input, shape index: {}]
  %s19 = inlined_call_operand.vmem [shape: f32[1,32], index: 19, kind: input, shape index: {}]
  %s20 = inlined_call_operand.vmem [shape: f32[1,32], index: 20, kind: input, shape index: {}]
  %s21 = inlined_call_operand.vmem [shape: f32[1,32], index: 21, kind: input, shape index: {}]
  %s22 = inlined_call_operand.vmem [shape: f32[32,2], index: 22, kind: input, shape index: {}]
  %s23 = inlined_call_operand.vmem [shape: f32[1,2], index: 23, kind: input, shape index: {}]
  %s24 = inlined_call_operand.hbm [shape: f32[2,1,2], index: 24, kind: output, shape index: {}]
  %s25 = sld [smem:[#allocation0]]
  $region129: #{tpu_custom_call.1} parent=0
    _
  %s27 = ssub.s32 1, %s25
  %s28 = scalar_select 0, %s27, %s25
  $region1: #{tpu_custom_call.1} parent=0
    #allocation2 [shape = 'u8[1024]{0}', space=vmem, size = 0x400, scoped, tag = 'output window, operand 0']
    #allocation3 [shape = 's32[2]{0}', space=sflag, size = 0x8, scoped, tag = 'scoped memory for tpu_custom_call.1']
    %29 = vsyncpa [#allocation3], 0
    %s30 = scalar_lea.sflag [#allocation3], 1
    %31 = vsyncpa %s30, 0
    loop: start=0, step=1, limit=4
    $region2: #{tpu_custom_call.1} parent=1 // loop_pre_header
      _
    $region3: #{tpu_custom_call.1} parent=1 // loop_header
      %s33 = sphi 0, %s37
      %p34 = scmp.ge.s32.totalorder %s33, 4
      %s43 = sphi 0, %s45
      %s46 = sphi 0, %s43
      %s47 = sphi 0, %s46
      %s63 = sphi 0, %s47
      %s67 = sphi 0, %s67
      %s69 = sphi 0, %s67
      %s70 = sphi 0, %s69
      %s84 = sphi 0, %s70
      %s88 = sphi 0, %s88
      %s90 = sphi 0, %s88
      %s91 = sphi 0, %s90
      %s105 = sphi 0, %s91
      %s109 = sphi 0, %s109
      %s111 = sphi 0, %s109
      %s112 = sphi 0, %s111
      %s126 = sphi 0, %s112
      %s130 = sphi 0, %s130
      %s132 = sphi 0, %s130
      %s133 = sphi 0, %s132
      %s147 = sphi 0, %s133
      %s151 = sphi 0, %s151
      %s153 = sphi 0, %s151
      %s154 = sphi 0, %s153
      %s168 = sphi 0, %s154
      %s172 = sphi 0, %s172
      %s174 = sphi 0, %s172
      %s175 = sphi 0, %s174
      %s189 = sphi 0, %s175
      %s193 = sphi 0, %s193
      %s195 = sphi 0, %s193
      %s196 = sphi 0, %s195
      %s210 = sphi 0, %s196
      %s214 = sphi 0, %s214
      %s216 = sphi 0, %s214
      %s217 = sphi 0, %s216
      %s231 = sphi 0, %s217
      %s235 = sphi 0, %s235
      %s237 = sphi 0, %s235
      %s238 = sphi 0, %s237
      %s252 = sphi 0, %s238
      %s256 = sphi 0, %s256
      %s258 = sphi 0, %s256
      %s259 = sphi 0, %s258
      %s273 = sphi 0, %s259
      %s277 = sphi 0, %s277
      %s279 = sphi 0, %s277
      %s280 = sphi 0, %s279
      %s294 = sphi 0, %s280
      %s298 = sphi 0, %s298
      %s300 = sphi 0, %s298
      %s301 = sphi 0, %s300
      %s315 = sphi 0, %s301
      %s319 = sphi 0, %s319
      %s321 = sphi 0, %s319
      %s322 = sphi 0, %s321
      %s336 = sphi 0, %s322
      %s340 = sphi 0, %s340
      %s342 = sphi 0, %s340
      %s343 = sphi 0, %s342
      %s357 = sphi 0, %s343
      %s361 = sphi 0, %s361
      %s363 = sphi 0, %s361
      %s364 = sphi 0, %s363
      %s378 = sphi 0, %s364
      %s382 = sphi 0, %s382
      %s384 = sphi 0, %s382
      %s385 = sphi 0, %s384
      %s399 = sphi 0, %s385
      %s403 = sphi 0, %s403
      %s405 = sphi 0, %s403
      %s406 = sphi 0, %s405
      %s420 = sphi 0, %s406
      %s424 = sphi 0, %s424
      %s426 = sphi 0, %s424
      %s427 = sphi 0, %s426
      %s441 = sphi 0, %s427
      %s445 = sphi 0, %s445
      %s447 = sphi 0, %s445
      %s448 = sphi 0, %s447
      %s462 = sphi 0, %s448
      %s466 = sphi 0, %s466
      %s468 = sphi 0, %s466
      %s469 = sphi 0, %s468
      %s483 = sphi 0, %s469
      %s487 = sphi 0, %s487
      %s489 = sphi 0, %s487
      %s490 = sphi 0, %s489
      %s504 = sphi 0, %s490
      %s508 = sphi 0, %s508
      %s510 = sphi 0, %s508
      %s511 = sphi 0, %s510
      %s525 = sphi 0, %s511
      %s529 = sphi 0, %s529
      %s531 = sphi 0, %s529
      %s532 = sphi 0, %s531
      %s546 = sphi 0, %s532
      %s552 = sphi 0, %s554
      %s555 = sphi 0, %s552
      %s556 = sphi 0, %s555
      %s572 = sphi 0, %s556
    $region4: #{tpu_custom_call.1} parent=1 // loop_header_branch
      %36 = sbr.rel (%p34) target = $region8
    $region5: #{tpu_custom_call.1} parent=1 // loop_body
      %s38 = ssub.s32 %s33, 1
      %s39 = ssub.s32 %s33, 2
      %s40 = sadd.s32 %s33, 1
      %s41 = ssub.s32 %s33, %s40
      %p42 = scmp.eq.s32.totalorder %s41, 0
      %s44 = sadd.s32 %s43, 1
      %s45 = scalar_select %p42, %s43, %s44
      %p48 = pneg %p42
      %p49 = scmp.eq.s32.totalorder %s33, 1
      %p50 = por %p48, %p49
      %p51 = scmp.ne.s32.totalorder %s43, %s46
      %p52 = scmp.eq.s32.totalorder %s33, 0
      %p53 = por %p51, %p52
      %p54 = scmp.ne.s32.totalorder %s43, %s46
      %p55 = scmp.eq.s32.totalorder %s38, 1
      %p56 = por %p54, %p55
      %p57 = scmp.ne.s32.totalorder %s46, %s47
      %p58 = scmp.eq.s32.totalorder %s38, 0
      %p59 = por %p57, %p58
      %p60 = scmp.ne.s32.totalorder %s46, %s47
      %p61 = scmp.eq.s32.totalorder %s39, 1
      %p62 = por %p60, %p61
      %p64 = scmp.ne.s32.totalorder %s47, %s63
      %p65 = scmp.eq.s32.totalorder %s39, 0
      %p66 = por %p64, %p65
      %s68 = sadd.s32 %s67, 1
      %p71 = scmp.eq.s32.totalorder %s33, 1
      %p72 = scmp.ne.s32.totalorder %s67, %s69
      %p73 = scmp.eq.s32.totalorder %s33, 0
      %p74 = por %p72, %p73
      %p75 = scmp.ne.s32.totalorder %s67, %s69
      %p76 = scmp.eq.s32.totalorder %s38, 1
      %p77 = por %p75, %p76
      %p78 = scmp.ne.s32.totalorder %s69, %s70
      %p79 = scmp.eq.s32.totalorder %s38, 0
      %p80 = por %p78, %p79
      %p81 = scmp.ne.s32.totalorder %s69, %s70
      %p82 = scmp.eq.s32.totalorder %s39, 1
      %p83 = por %p81, %p82
      %p85 = scmp.ne.s32.totalorder %s70, %s84
      %p86 = scmp.eq.s32.totalorder %s39, 0
      %p87 = por %p85, %p86
      %s89 = sadd.s32 %s88, 1
      %p92 = scmp.eq.s32.totalorder %s33, 1
      %p93 = scmp.ne.s32.totalorder %s88, %s90
      %p94 = scmp.eq.s32.totalorder %s33, 0
      %p95 = por %p93, %p94
      %p96 = scmp.ne.s32.totalorder %s88, %s90
      %p97 = scmp.eq.s32.totalorder %s38, 1
      %p98 = por %p96, %p97
      %p99 = scmp.ne.s32.totalorder %s90, %s91
      %p100 = scmp.eq.s32.totalorder %s38, 0
      %p101 = por %p99, %p100
      %p102 = scmp.ne.s32.totalorder %s90, %s91
      %p103 = scmp.eq.s32.totalorder %s39, 1
      %p104 = por %p102, %p103
      %p106 = scmp.ne.s32.totalorder %s91, %s105
      %p107 = scmp.eq.s32.totalorder %s39, 0
      %p108 = por %p106, %p107
      %s110 = sadd.s32 %s109, 1
      %p113 = scmp.eq.s32.totalorder %s33, 1
      %p114 = scmp.ne.s32.totalorder %s109, %s111
      %p115 = scmp.eq.s32.totalorder %s33, 0
      %p116 = por %p114, %p115
      %p117 = scmp.ne.s32.totalorder %s109, %s111
      %p118 = scmp.eq.s32.totalorder %s38, 1
      %p119 = por %p117, %p118
      %p120 = scmp.ne.s32.totalorder %s111, %s112
      %p121 = scmp.eq.s32.totalorder %s38, 0
      %p122 = por %p120, %p121
      %p123 = scmp.ne.s32.totalorder %s111, %s112
      %p124 = scmp.eq.s32.totalorder %s39, 1
      %p125 = por %p123, %p124
      %p127 = scmp.ne.s32.totalorder %s112, %s126
      %p128 = scmp.eq.s32.totalorder %s39, 0
      %p129 = por %p127, %p128
      %s131 = sadd.s32 %s130, 1
      %p134 = scmp.eq.s32.totalorder %s33, 1
      %p135 = scmp.ne.s32.totalorder %s130, %s132
      %p136 = scmp.eq.s32.totalorder %s33, 0
      %p137 = por %p135, %p136
      %p138 = scmp.ne.s32.totalorder %s130, %s132
      %p139 = scmp.eq.s32.totalorder %s38, 1
      %p140 = por %p138, %p139
      %p141 = scmp.ne.s32.totalorder %s132, %s133
      %p142 = scmp.eq.s32.totalorder %s38, 0
      %p143 = por %p141, %p142
      %p144 = scmp.ne.s32.totalorder %s132, %s133
      %p145 = scmp.eq.s32.totalorder %s39, 1
      %p146 = por %p144, %p145
      %p148 = scmp.ne.s32.totalorder %s133, %s147
      %p149 = scmp.eq.s32.totalorder %s39, 0
      %p150 = por %p148, %p149
      %s152 = sadd.s32 %s151, 1
      %p155 = scmp.eq.s32.totalorder %s33, 1
      %p156 = scmp.ne.s32.totalorder %s151, %s153
      %p157 = scmp.eq.s32.totalorder %s33, 0
      %p158 = por %p156, %p157
      %p159 = scmp.ne.s32.totalorder %s151, %s153
      %p160 = scmp.eq.s32.totalorder %s38, 1
      %p161 = por %p159, %p160
      %p162 = scmp.ne.s32.totalorder %s153, %s154
      %p163 = scmp.eq.s32.totalorder %s38, 0
      %p164 = por %p162, %p163
      %p165 = scmp.ne.s32.totalorder %s153, %s154
      %p166 = scmp.eq.s32.totalorder %s39, 1
      %p167 = por %p165, %p166
      %p169 = scmp.ne.s32.totalorder %s154, %s168
      %p170 = scmp.eq.s32.totalorder %s39, 0
      %p171 = por %p169, %p170
      %s173 = sadd.s32 %s172, 1
      %p176 = scmp.eq.s32.totalorder %s33, 1
      %p177 = scmp.ne.s32.totalorder %s172, %s174
      %p178 = scmp.eq.s32.totalorder %s33, 0
      %p179 = por %p177, %p178
      %p180 = scmp.ne.s32.totalorder %s172, %s174
      %p181 = scmp.eq.s32.totalorder %s38, 1
      %p182 = por %p180, %p181
      %p183 = scmp.ne.s32.totalorder %s174, %s175
      %p184 = scmp.eq.s32.totalorder %s38, 0
      %p185 = por %p183, %p184
      %p186 = scmp.ne.s32.totalorder %s174, %s175
      %p187 = scmp.eq.s32.totalorder %s39, 1
      %p188 = por %p186, %p187
      %p190 = scmp.ne.s32.totalorder %s175, %s189
      %p191 = scmp.eq.s32.totalorder %s39, 0
      %p192 = por %p190, %p191
      %s194 = sadd.s32 %s193, 1
      %p197 = scmp.eq.s32.totalorder %s33, 1
      %p198 = scmp.ne.s32.totalorder %s193, %s195
      %p199 = scmp.eq.s32.totalorder %s33, 0
      %p200 = por %p198, %p199
      %p201 = scmp.ne.s32.totalorder %s193, %s195
      %p202 = scmp.eq.s32.totalorder %s38, 1
      %p203 = por %p201, %p202
      %p204 = scmp.ne.s32.totalorder %s195, %s196
      %p205 = scmp.eq.s32.totalorder %s38, 0
      %p206 = por %p204, %p205
      %p207 = scmp.ne.s32.totalorder %s195, %s196
      %p208 = scmp.eq.s32.totalorder %s39, 1
      %p209 = por %p207, %p208
      %p211 = scmp.ne.s32.totalorder %s196, %s210
      %p212 = scmp.eq.s32.totalorder %s39, 0
      %p213 = por %p211, %p212
      %s215 = sadd.s32 %s214, 1
      %p218 = scmp.eq.s32.totalorder %s33, 1
      %p219 = scmp.ne.s32.totalorder %s214, %s216
      %p220 = scmp.eq.s32.totalorder %s33, 0
      %p221 = por %p219, %p220
      %p222 = scmp.ne.s32.totalorder %s214, %s216
      %p223 = scmp.eq.s32.totalorder %s38, 1
      %p224 = por %p222, %p223
      %p225 = scmp.ne.s32.totalorder %s216, %s217
      %p226 = scmp.eq.s32.totalorder %s38, 0
      %p227 = por %p225, %p226
      %p228 = scmp.ne.s32.totalorder %s216, %s217
      %p229 = scmp.eq.s32.totalorder %s39, 1
      %p230 = por %p228, %p229
      %p232 = scmp.ne.s32.totalorder %s217, %s231
      %p233 = scmp.eq.s32.totalorder %s39, 0
      %p234 = por %p232, %p233
      %s236 = sadd.s32 %s235, 1
      %p239 = scmp.eq.s32.totalorder %s33, 1
      %p240 = scmp.ne.s32.totalorder %s235, %s237
      %p241 = scmp.eq.s32.totalorder %s33, 0
      %p242 = por %p240, %p241
      %p243 = scmp.ne.s32.totalorder %s235, %s237
      %p244 = scmp.eq.s32.totalorder %s38, 1
      %p245 = por %p243, %p244
      %p246 = scmp.ne.s32.totalorder %s237, %s238
      %p247 = scmp.eq.s32.totalorder %s38, 0
      %p248 = por %p246, %p247
      %p249 = scmp.ne.s32.totalorder %s237, %s238
      %p250 = scmp.eq.s32.totalorder %s39, 1
      %p251 = por %p249, %p250
      %p253 = scmp.ne.s32.totalorder %s238, %s252
      %p254 = scmp.eq.s32.totalorder %s39, 0
      %p255 = por %p253, %p254
      %s257 = sadd.s32 %s256, 1
      %p260 = scmp.eq.s32.totalorder %s33, 1
      %p261 = scmp.ne.s32.totalorder %s256, %s258
      %p262 = scmp.eq.s32.totalorder %s33, 0
      %p263 = por %p261, %p262
      %p264 = scmp.ne.s32.totalorder %s256, %s258
      %p265 = scmp.eq.s32.totalorder %s38, 1
      %p266 = por %p264, %p265
      %p267 = scmp.ne.s32.totalorder %s258, %s259
      %p268 = scmp.eq.s32.totalorder %s38, 0
      %p269 = por %p267, %p268
      %p270 = scmp.ne.s32.totalorder %s258, %s259
      %p271 = scmp.eq.s32.totalorder %s39, 1
      %p272 = por %p270, %p271
      %p274 = scmp.ne.s32.totalorder %s259, %s273
      %p275 = scmp.eq.s32.totalorder %s39, 0
      %p276 = por %p274, %p275
      %s278 = sadd.s32 %s277, 1
      %p281 = scmp.eq.s32.totalorder %s33, 1
      %p282 = scmp.ne.s32.totalorder %s277, %s279
      %p283 = scmp.eq.s32.totalorder %s33, 0
      %p284 = por %p282, %p283
      %p285 = scmp.ne.s32.totalorder %s277, %s279
      %p286 = scmp.eq.s32.totalorder %s38, 1
      %p287 = por %p285, %p286
      %p288 = scmp.ne.s32.totalorder %s279, %s280
      %p289 = scmp.eq.s32.totalorder %s38, 0
      %p290 = por %p288, %p289
      %p291 = scmp.ne.s32.totalorder %s279, %s280
      %p292 = scmp.eq.s32.totalorder %s39, 1
      %p293 = por %p291, %p292
      %p295 = scmp.ne.s32.totalorder %s280, %s294
      %p296 = scmp.eq.s32.totalorder %s39, 0
      %p297 = por %p295, %p296
      %s299 = sadd.s32 %s298, 1
      %p302 = scmp.eq.s32.totalorder %s33, 1
      %p303 = scmp.ne.s32.totalorder %s298, %s300
      %p304 = scmp.eq.s32.totalorder %s33, 0
      %p305 = por %p303, %p304
      %p306 = scmp.ne.s32.totalorder %s298, %s300
      %p307 = scmp.eq.s32.totalorder %s38, 1
      %p308 = por %p306, %p307
      %p309 = scmp.ne.s32.totalorder %s300, %s301
      %p310 = scmp.eq.s32.totalorder %s38, 0
      %p311 = por %p309, %p310
      %p312 = scmp.ne.s32.totalorder %s300, %s301
      %p313 = scmp.eq.s32.totalorder %s39, 1
      %p314 = por %p312, %p313
      %p316 = scmp.ne.s32.totalorder %s301, %s315
      %p317 = scmp.eq.s32.totalorder %s39, 0
      %p318 = por %p316, %p317
      %s320 = sadd.s32 %s319, 1
      %p323 = scmp.eq.s32.totalorder %s33, 1
      %p324 = scmp.ne.s32.totalorder %s319, %s321
      %p325 = scmp.eq.s32.totalorder %s33, 0
      %p326 = por %p324, %p325
      %p327 = scmp.ne.s32.totalorder %s319, %s321
      %p328 = scmp.eq.s32.totalorder %s38, 1
      %p329 = por %p327, %p328
      %p330 = scmp.ne.s32.totalorder %s321, %s322
      %p331 = scmp.eq.s32.totalorder %s38, 0
      %p332 = por %p330, %p331
      %p333 = scmp.ne.s32.totalorder %s321, %s322
      %p334 = scmp.eq.s32.totalorder %s39, 1
      %p335 = por %p333, %p334
      %p337 = scmp.ne.s32.totalorder %s322, %s336
      %p338 = scmp.eq.s32.totalorder %s39, 0
      %p339 = por %p337, %p338
      %s341 = sadd.s32 %s340, 1
      %p344 = scmp.eq.s32.totalorder %s33, 1
      %p345 = scmp.ne.s32.totalorder %s340, %s342
      %p346 = scmp.eq.s32.totalorder %s33, 0
      %p347 = por %p345, %p346
      %p348 = scmp.ne.s32.totalorder %s340, %s342
      %p349 = scmp.eq.s32.totalorder %s38, 1
      %p350 = por %p348, %p349
      %p351 = scmp.ne.s32.totalorder %s342, %s343
      %p352 = scmp.eq.s32.totalorder %s38, 0
      %p353 = por %p351, %p352
      %p354 = scmp.ne.s32.totalorder %s342, %s343
      %p355 = scmp.eq.s32.totalorder %s39, 1
      %p356 = por %p354, %p355
      %p358 = scmp.ne.s32.totalorder %s343, %s357
      %p359 = scmp.eq.s32.totalorder %s39, 0
      %p360 = por %p358, %p359
      %s362 = sadd.s32 %s361, 1
      %p365 = scmp.eq.s32.totalorder %s33, 1
      %p366 = scmp.ne.s32.totalorder %s361, %s363
      %p367 = scmp.eq.s32.totalorder %s33, 0
      %p368 = por %p366, %p367
      %p369 = scmp.ne.s32.totalorder %s361, %s363
      %p370 = scmp.eq.s32.totalorder %s38, 1
      %p371 = por %p369, %p370
      %p372 = scmp.ne.s32.totalorder %s363, %s364
      %p373 = scmp.eq.s32.totalorder %s38, 0
      %p374 = por %p372, %p373
      %p375 = scmp.ne.s32.totalorder %s363, %s364
      %p376 = scmp.eq.s32.totalorder %s39, 1
      %p377 = por %p375, %p376
      %p379 = scmp.ne.s32.totalorder %s364, %s378
      %p380 = scmp.eq.s32.totalorder %s39, 0
      %p381 = por %p379, %p380
      %s383 = sadd.s32 %s382, 1
      %p386 = scmp.eq.s32.totalorder %s33, 1
      %p387 = scmp.ne.s32.totalorder %s382, %s384
      %p388 = scmp.eq.s32.totalorder %s33, 0
      %p389 = por %p387, %p388
      %p390 = scmp.ne.s32.totalorder %s382, %s384
      %p391 = scmp.eq.s32.totalorder %s38, 1
      %p392 = por %p390, %p391
      %p393 = scmp.ne.s32.totalorder %s384, %s385
      %p394 = scmp.eq.s32.totalorder %s38, 0
      %p395 = por %p393, %p394
      %p396 = scmp.ne.s32.totalorder %s384, %s385
      %p397 = scmp.eq.s32.totalorder %s39, 1
      %p398 = por %p396, %p397
      %p400 = scmp.ne.s32.totalorder %s385, %s399
      %p401 = scmp.eq.s32.totalorder %s39, 0
      %p402 = por %p400, %p401
      %s404 = sadd.s32 %s403, 1
      %p407 = scmp.eq.s32.totalorder %s33, 1
      %p408 = scmp.ne.s32.totalorder %s403, %s405
      %p409 = scmp.eq.s32.totalorder %s33, 0
      %p410 = por %p408, %p409
      %p411 = scmp.ne.s32.totalorder %s403, %s405
      %p412 = scmp.eq.s32.totalorder %s38, 1
      %p413 = por %p411, %p412
      %p414 = scmp.ne.s32.totalorder %s405, %s406
      %p415 = scmp.eq.s32.totalorder %s38, 0
      %p416 = por %p414, %p415
      %p417 = scmp.ne.s32.totalorder %s405, %s406
      %p418 = scmp.eq.s32.totalorder %s39, 1
      %p419 = por %p417, %p418
      %p421 = scmp.ne.s32.totalorder %s406, %s420
      %p422 = scmp.eq.s32.totalorder %s39, 0
      %p423 = por %p421, %p422
      %s425 = sadd.s32 %s424, 1
      %p428 = scmp.eq.s32.totalorder %s33, 1
      %p429 = scmp.ne.s32.totalorder %s424, %s426
      %p430 = scmp.eq.s32.totalorder %s33, 0
      %p431 = por %p429, %p430
      %p432 = scmp.ne.s32.totalorder %s424, %s426
      %p433 = scmp.eq.s32.totalorder %s38, 1
      %p434 = por %p432, %p433
      %p435 = scmp.ne.s32.totalorder %s426, %s427
      %p436 = scmp.eq.s32.totalorder %s38, 0
      %p437 = por %p435, %p436
      %p438 = scmp.ne.s32.totalorder %s426, %s427
      %p439 = scmp.eq.s32.totalorder %s39, 1
      %p440 = por %p438, %p439
      %p442 = scmp.ne.s32.totalorder %s427, %s441
      %p443 = scmp.eq.s32.totalorder %s39, 0
      %p444 = por %p442, %p443
      %s446 = sadd.s32 %s445, 1
      %p449 = scmp.eq.s32.totalorder %s33, 1
      %p450 = scmp.ne.s32.totalorder %s445, %s447
      %p451 = scmp.eq.s32.totalorder %s33, 0
      %p452 = por %p450, %p451
      %p453 = scmp.ne.s32.totalorder %s445, %s447
      %p454 = scmp.eq.s32.totalorder %s38, 1
      %p455 = por %p453, %p454
      %p456 = scmp.ne.s32.totalorder %s447, %s448
      %p457 = scmp.eq.s32.totalorder %s38, 0
      %p458 = por %p456, %p457
      %p459 = scmp.ne.s32.totalorder %s447, %s448
      %p460 = scmp.eq.s32.totalorder %s39, 1
      %p461 = por %p459, %p460
      %p463 = scmp.ne.s32.totalorder %s448, %s462
      %p464 = scmp.eq.s32.totalorder %s39, 0
      %p465 = por %p463, %p464
      %s467 = sadd.s32 %s466, 1
      %p470 = scmp.eq.s32.totalorder %s33, 1
      %p471 = scmp.ne.s32.totalorder %s466, %s468
      %p472 = scmp.eq.s32.totalorder %s33, 0
      %p473 = por %p471, %p472
      %p474 = scmp.ne.s32.totalorder %s466, %s468
      %p475 = scmp.eq.s32.totalorder %s38, 1
      %p476 = por %p474, %p475
      %p477 = scmp.ne.s32.totalorder %s468, %s469
      %p478 = scmp.eq.s32.totalorder %s38, 0
      %p479 = por %p477, %p478
      %p480 = scmp.ne.s32.totalorder %s468, %s469
      %p481 = scmp.eq.s32.totalorder %s39, 1
      %p482 = por %p480, %p481
      %p484 = scmp.ne.s32.totalorder %s469, %s483
      %p485 = scmp.eq.s32.totalorder %s39, 0
      %p486 = por %p484, %p485
      %s488 = sadd.s32 %s487, 1
      %p491 = scmp.eq.s32.totalorder %s33, 1
      %p492 = scmp.ne.s32.totalorder %s487, %s489
      %p493 = scmp.eq.s32.totalorder %s33, 0
      %p494 = por %p492, %p493
      %p495 = scmp.ne.s32.totalorder %s487, %s489
      %p496 = scmp.eq.s32.totalorder %s38, 1
      %p497 = por %p495, %p496
      %p498 = scmp.ne.s32.totalorder %s489, %s490
      %p499 = scmp.eq.s32.totalorder %s38, 0
      %p500 = por %p498, %p499
      %p501 = scmp.ne.s32.totalorder %s489, %s490
      %p502 = scmp.eq.s32.totalorder %s39, 1
      %p503 = por %p501, %p502
      %p505 = scmp.ne.s32.totalorder %s490, %s504
      %p506 = scmp.eq.s32.totalorder %s39, 0
      %p507 = por %p505, %p506
      %s509 = sadd.s32 %s508, 1
      %p512 = scmp.eq.s32.totalorder %s33, 1
      %p513 = scmp.ne.s32.totalorder %s508, %s510
      %p514 = scmp.eq.s32.totalorder %s33, 0
      %p515 = por %p513, %p514
      %p516 = scmp.ne.s32.totalorder %s508, %s510
      %p517 = scmp.eq.s32.totalorder %s38, 1
      %p518 = por %p516, %p517
      %p519 = scmp.ne.s32.totalorder %s510, %s511
      %p520 = scmp.eq.s32.totalorder %s38, 0
      %p521 = por %p519, %p520
      %p522 = scmp.ne.s32.totalorder %s510, %s511
      %p523 = scmp.eq.s32.totalorder %s39, 1
      %p524 = por %p522, %p523
      %p526 = scmp.ne.s32.totalorder %s511, %s525
      %p527 = scmp.eq.s32.totalorder %s39, 0
      %p528 = por %p526, %p527
      %s530 = sadd.s32 %s529, 1
      %p533 = scmp.eq.s32.totalorder %s33, 1
      %p534 = scmp.ne.s32.totalorder %s529, %s531
      %p535 = scmp.eq.s32.totalorder %s33, 0
      %p536 = por %p534, %p535
      %p537 = scmp.ne.s32.totalorder %s529, %s531
      %p538 = scmp.eq.s32.totalorder %s38, 1
      %p539 = por %p537, %p538
      %p540 = scmp.ne.s32.totalorder %s531, %s532
      %p541 = scmp.eq.s32.totalorder %s38, 0
      %p542 = por %p540, %p541
      %p543 = scmp.ne.s32.totalorder %s531, %s532
      %p544 = scmp.eq.s32.totalorder %s39, 1
      %p545 = por %p543, %p544
      %p547 = scmp.ne.s32.totalorder %s532, %s546
      %p548 = scmp.eq.s32.totalorder %s39, 0
      %p549 = por %p547, %p548
      %s550 = ssub.s32 %s33, %s40
      %p551 = scmp.eq.s32.totalorder %s550, 0
      %s553 = sadd.s32 %s552, 1
      %s554 = scalar_select %p551, %s552, %s553
      %p557 = pneg %p551
      %p558 = scmp.eq.s32.totalorder %s33, 1
      %p559 = por %p557, %p558
      %p560 = scmp.ne.s32.totalorder %s552, %s555
      %p561 = scmp.eq.s32.totalorder %s33, 0
      %p562 = por %p560, %p561
      %p563 = scmp.ne.s32.totalorder %s552, %s555
      %p564 = scmp.eq.s32.totalorder %s38, 1
      %p565 = por %p563, %p564
      %p566 = scmp.ne.s32.totalorder %s555, %s556
      %p567 = scmp.eq.s32.totalorder %s38, 0
      %p568 = por %p566, %p567
      %p569 = scmp.ne.s32.totalorder %s555, %s556
      %p570 = scmp.eq.s32.totalorder %s39, 1
      %p571 = por %p569, %p570
      %p573 = scmp.ne.s32.totalorder %s556, %s572
      %p574 = scmp.eq.s32.totalorder %s39, 0
      %p575 = por %p573, %p574
      %p576 = scmp.le.s32.totalorder 1, %s33
      %p577 = scmp.lt.s32.totalorder %s33, 3
      %p578 = pnand %p576, %p577
      %p579 = pneg %p578
      // Predicated region
      $region9: #{tpu_custom_call.1} parent=5 // pred_check
        _
      $region10: #{tpu_custom_call.1} parent=5 // pred_check_branch
        %581 = sbr.rel (%p578) target = $region12
      $region11: #{tpu_custom_call.1} parent=5 // pred_region
        %s582 = ssub.s32 %s33, 1
        // Predicated region
        $region13: #{tpu_custom_call.1} parent=11 // pred_check
          %p583 = pneg %p80
        $region14: #{tpu_custom_call.1} parent=11 // pred_check_branch
          %585 = sbr.rel (%p583) target = $region16
        $region15: #{tpu_custom_call.1} parent=11 // pred_region
          _
        $region16: #{tpu_custom_call.1} parent=11 // pred_fallthru
          _
        // Predicated region
        $region17: #{tpu_custom_call.1} parent=11 // pred_check
          %p586 = pneg %p101
        $region18: #{tpu_custom_call.1} parent=11 // pred_check_branch
          %588 = sbr.rel (%p586) target = $region20
        $region19: #{tpu_custom_call.1} parent=11 // pred_region
          _
        $region20: #{tpu_custom_call.1} parent=11 // pred_fallthru
          _
        // Predicated region
        $region21: #{tpu_custom_call.1} parent=11 // pred_check
          %p589 = pneg %p122
        $region22: #{tpu_custom_call.1} parent=11 // pred_check_branch
          %591 = sbr.rel (%p589) target = $region24
        $region23: #{tpu_custom_call.1} parent=11 // pred_region
          _
        $region24: #{tpu_custom_call.1} parent=11 // pred_fallthru
          _
        // Predicated region
        $region25: #{tpu_custom_call.1} parent=11 // pred_check
          %p592 = pneg %p143
        $region26: #{tpu_custom_call.1} parent=11 // pred_check_branch
          %594 = sbr.rel (%p592) target = $region28
        $region27: #{tpu_custom_call.1} parent=11 // pred_region
          _
        $region28: #{tpu_custom_call.1} parent=11 // pred_fallthru
          _
        // Predicated region
        $region29: #{tpu_custom_call.1} parent=11 // pred_check
          %p595 = pneg %p164
        $region30: #{tpu_custom_call.1} parent=11 // pred_check_branch
          %597 = sbr.rel (%p595) target = $region32
        $region31: #{tpu_custom_call.1} parent=11 // pred_region
          _
        $region32: #{tpu_custom_call.1} parent=11 // pred_fallthru
          _
        // Predicated region
        $region33: #{tpu_custom_call.1} parent=11 // pred_check
          %p598 = pneg %p185
        $region34: #{tpu_custom_call.1} parent=11 // pred_check_branch
          %600 = sbr.rel (%p598) target = $region36
        $region35: #{tpu_custom_call.1} parent=11 // pred_region
          _
        $region36: #{tpu_custom_call.1} parent=11 // pred_fallthru
          _
        // Predicated region
        $region37: #{tpu_custom_call.1} parent=11 // pred_check
          %p601 = pneg %p206
        $region38: #{tpu_custom_call.1} parent=11 // pred_check_branch
          %603 = sbr.rel (%p601) target = $region40
        $region39: #{tpu_custom_call.1} parent=11 // pred_region
          _
        $region40: #{tpu_custom_call.1} parent=11 // pred_fallthru
          _
        // Predicated region
        $region41: #{tpu_custom_call.1} parent=11 // pred_check
          %p604 = pneg %p227
        $region42: #{tpu_custom_call.1} parent=11 // pred_check_branch
          %606 = sbr.rel (%p604) target = $region44
        $region43: #{tpu_custom_call.1} parent=11 // pred_region
          _
        $region44: #{tpu_custom_call.1} parent=11 // pred_fallthru
          _
        // Predicated region
        $region45: #{tpu_custom_call.1} parent=11 // pred_check
          %p607 = pneg %p248
        $region46: #{tpu_custom_call.1} parent=11 // pred_check_branch
          %609 = sbr.rel (%p607) target = $region48
        $region47: #{tpu_custom_call.1} parent=11 // pred_region
          _
        $region48: #{tpu_custom_call.1} parent=11 // pred_fallthru
          _
        // Predicated region
        $region49: #{tpu_custom_call.1} parent=11 // pred_check
          %p610 = pneg %p269
        $region50: #{tpu_custom_call.1} parent=11 // pred_check_branch
          %612 = sbr.rel (%p610) target = $region52
        $region51: #{tpu_custom_call.1} parent=11 // pred_region
          _
        $region52: #{tpu_custom_call.1} parent=11 // pred_fallthru
          _
        // Predicated region
        $region53: #{tpu_custom_call.1} parent=11 // pred_check
          %p613 = pneg %p290
        $region54: #{tpu_custom_call.1} parent=11 // pred_check_branch
          %615 = sbr.rel (%p613) target = $region56
        $region55: #{tpu_custom_call.1} parent=11 // pred_region
          _
        $region56: #{tpu_custom_call.1} parent=11 // pred_fallthru
          _
        // Predicated region
        $region57: #{tpu_custom_call.1} parent=11 // pred_check
          %p616 = pneg %p311
        $region58: #{tpu_custom_call.1} parent=11 // pred_check_branch
          %618 = sbr.rel (%p616) target = $region60
        $region59: #{tpu_custom_call.1} parent=11 // pred_region
          _
        $region60: #{tpu_custom_call.1} parent=11 // pred_fallthru
          _
        // Predicated region
        $region61: #{tpu_custom_call.1} parent=11 // pred_check
          %p619 = pneg %p332
        $region62: #{tpu_custom_call.1} parent=11 // pred_check_branch
          %621 = sbr.rel (%p619) target = $region64
        $region63: #{tpu_custom_call.1} parent=11 // pred_region
          _
        $region64: #{tpu_custom_call.1} parent=11 // pred_fallthru
          _
        // Predicated region
        $region65: #{tpu_custom_call.1} parent=11 // pred_check
          %p622 = pneg %p353
        $region66: #{tpu_custom_call.1} parent=11 // pred_check_branch
          %624 = sbr.rel (%p622) target = $region68
        $region67: #{tpu_custom_call.1} parent=11 // pred_region
          _
        $region68: #{tpu_custom_call.1} parent=11 // pred_fallthru
          _
        // Predicated region
        $region69: #{tpu_custom_call.1} parent=11 // pred_check
          %p625 = pneg %p374
        $region70: #{tpu_custom_call.1} parent=11 // pred_check_branch
          %627 = sbr.rel (%p625) target = $region72
        $region71: #{tpu_custom_call.1} parent=11 // pred_region
          _
        $region72: #{tpu_custom_call.1} parent=11 // pred_fallthru
          _
        // Predicated region
        $region73: #{tpu_custom_call.1} parent=11 // pred_check
          %p628 = pneg %p395
        $region74: #{tpu_custom_call.1} parent=11 // pred_check_branch
          %630 = sbr.rel (%p628) target = $region76
        $region75: #{tpu_custom_call.1} parent=11 // pred_region
          _
        $region76: #{tpu_custom_call.1} parent=11 // pred_fallthru
          _
        // Predicated region
        $region77: #{tpu_custom_call.1} parent=11 // pred_check
          %p631 = pneg %p416
        $region78: #{tpu_custom_call.1} parent=11 // pred_check_branch
          %633 = sbr.rel (%p631) target = $region80
        $region79: #{tpu_custom_call.1} parent=11 // pred_region
          _
        $region80: #{tpu_custom_call.1} parent=11 // pred_fallthru
          _
        // Predicated region
        $region81: #{tpu_custom_call.1} parent=11 // pred_check
          %p634 = pneg %p437
        $region82: #{tpu_custom_call.1} parent=11 // pred_check_branch
          %636 = sbr.rel (%p634) target = $region84
        $region83: #{tpu_custom_call.1} parent=11 // pred_region
          _
        $region84: #{tpu_custom_call.1} parent=11 // pred_fallthru
          _
        // Predicated region
        $region85: #{tpu_custom_call.1} parent=11 // pred_check
          %p637 = pneg %p458
        $region86: #{tpu_custom_call.1} parent=11 // pred_check_branch
          %639 = sbr.rel (%p637) target = $region88
        $region87: #{tpu_custom_call.1} parent=11 // pred_region
          _
        $region88: #{tpu_custom_call.1} parent=11 // pred_fallthru
          _
        // Predicated region
        $region89: #{tpu_custom_call.1} parent=11 // pred_check
          %p640 = pneg %p479
        $region90: #{tpu_custom_call.1} parent=11 // pred_check_branch
          %642 = sbr.rel (%p640) target = $region92
        $region91: #{tpu_custom_call.1} parent=11 // pred_region
          _
        $region92: #{tpu_custom_call.1} parent=11 // pred_fallthru
          _
        // Predicated region
        $region93: #{tpu_custom_call.1} parent=11 // pred_check
          %p643 = pneg %p500
        $region94: #{tpu_custom_call.1} parent=11 // pred_check_branch
          %645 = sbr.rel (%p643) target = $region96
        $region95: #{tpu_custom_call.1} parent=11 // pred_region
          _
        $region96: #{tpu_custom_call.1} parent=11 // pred_fallthru
          _
        // Predicated region
        $region97: #{tpu_custom_call.1} parent=11 // pred_check
          %p646 = pneg %p521
        $region98: #{tpu_custom_call.1} parent=11 // pred_check_branch
          %648 = sbr.rel (%p646) target = $region100
        $region99: #{tpu_custom_call.1} parent=11 // pred_region
          _
        $region100: #{tpu_custom_call.1} parent=11 // pred_fallthru
          _
        // Predicated region
        $region101: #{tpu_custom_call.1} parent=11 // pred_check
          %p649 = pneg %p542
        $region102: #{tpu_custom_call.1} parent=11 // pred_check_branch
          %651 = sbr.rel (%p649) target = $region104
        $region103: #{tpu_custom_call.1} parent=11 // pred_region
          _
        $region104: #{tpu_custom_call.1} parent=11 // pred_fallthru
          _
      $region12: #{tpu_custom_call.1} parent=5 // pred_fallthru
        _
      %p652 = scmp.lt.s32.totalorder %s33, 2
      // Predicated region
      $region105: #{tpu_custom_call.1} parent=5 // pred_check
        %p653 = pneg %p652
      $region106: #{tpu_custom_call.1} parent=5 // pred_check_branch
        %655 = sbr.rel (%p653) target = $region108
      $region107: #{tpu_custom_call.1} parent=5 // pred_region
        // Predicated region
        $region109: #{tpu_custom_call.1} parent=107 // pred_check
          %p656 = pneg %p53
        $region110: #{tpu_custom_call.1} parent=107 // pred_check_branch
          %658 = sbr.rel (%p656) target = $region112
        $region111: #{tpu_custom_call.1} parent=107 // pred_region
          %p659 = scmp.lt.s32.totalorder %s33, 1
          %s660 = scalar_select %p659, %s33, 1
          %s661 = smul.addr %s660, 8
          %s662 = scalar_lea.vmem %s0, %s661
        $region112: #{tpu_custom_call.1} parent=107 // pred_fallthru
          _
      $region108: #{tpu_custom_call.1} parent=5 // pred_fallthru
        _
      %p663 = scmp.le.s32.totalorder 1, %s33
      %p664 = scmp.lt.s32.totalorder %s33, 3
      %p665 = pnand %p663, %p664
      %p666 = pneg %p665
      // Predicated region
      $region113: #{tpu_custom_call.1} parent=5 // pred_check
        _
      $region114: #{tpu_custom_call.1} parent=5 // pred_check_branch
        %668 = sbr.rel (%p665) target = $region116
      $region115: #{tpu_custom_call.1} parent=5 // pred_region
        %s669 = ssub.s32 %s33, 1
        %p670 = scmp.lt.s32.totalorder %s38, 1
        %s671 = scalar_select %p670, %s38, 1
        %s672 = smul.addr %s671, 8
        %s673 = scalar_lea.vmem %s0, %s672
        %p674 = pneg %p59
        %p675 = pneg %p56
        %p676 = pneg %p80
        %p677 = pneg %p77
        %p678 = pneg %p101
        %p679 = pneg %p98
        %p680 = pneg %p122
        %p681 = pneg %p119
        %p682 = pneg %p143
        %p683 = pneg %p140
        %p684 = pneg %p164
        %p685 = pneg %p161
        %p686 = pneg %p185
        %p687 = pneg %p182
        %p688 = pneg %p206
        %p689 = pneg %p203
        %p690 = pneg %p227
        %p691 = pneg %p224
        %p692 = pneg %p248
        %p693 = pneg %p245
        %p694 = pneg %p269
        %p695 = pneg %p266
        %p696 = pneg %p290
        %p697 = pneg %p287
        %p698 = pneg %p311
        %p699 = pneg %p308
        %p700 = pneg %p332
        %p701 = pneg %p329
        %p702 = pneg %p353
        %p703 = pneg %p350
        %p704 = pneg %p374
        %p705 = pneg %p371
        %p706 = pneg %p395
        %p707 = pneg %p392
        %p708 = pneg %p416
        %p709 = pneg %p413
        %p710 = pneg %p437
        %p711 = pneg %p434
        %p712 = pneg %p458
        %p713 = pneg %p455
        %p714 = pneg %p479
        %p715 = pneg %p476
        %p716 = pneg %p500
        %p717 = pneg %p497
        %p718 = pneg %p521
        %p719 = pneg %p518
        %p720 = pneg %p542
        %p721 = pneg %p539
        %p722 = pneg %p568
        %p723 = pneg %p565
        %s724 = sand.u32 %s555, 1
        %s725 = scalar_lea.sflag [#allocation3], %s724
        %s726 = sand.u32 %s555, 1
        %s727 = scalar_lea.vmem [#allocation2], %s726
        %p728 = scmp.lt.s32.totalorder %s38, 1
        %s729 = scalar_select %p728, %s38, 1
        %s730 = smul.addr %s729, 8
        %s731 = scalar_lea.vmem %s0, %s730
        %v732 = vld [vmem:[%s731] sm:$0xff]
        %v733 = vld [vmem:[%s2] sm:$0xff]
        %v734 = vld [vmem:[%s2 + $0x8] sm:$0xff]
        %v735 = vld [vmem:[%s3] sm:$0x1]
        %v737 = vlaneseq
        %v738 = vshrl.u32 %v737, 7
        %v739 = vsub.s32 0, %v738
        %v740 = vrot.slane %v735, %v739
        %vm742 = vcmask 130048
        %v744 = vsel %vm742, %v732, 0
        %746 = vmatprep.subr.mxu0 0.0
        %747 = vmatpush1.msra.mxu0 %v733
        %748 = vmatprep.subr.mxu0 0.0
        %749 = vmatpush1.msra.mxu0 %v734
        %750 = vmatprep.subr.mxu0 0.0
        %751 = vmatpush1.msra.mxu0 0.0
        %752 = vmatprep.subr.mxu0 0.0
        %753 = vmatpush1.msra.mxu0 0.0
        %754 = vmatprep.subr.mxu0 0.0
        %755 = vmatpush1.msra.mxu0 0.0
        %756 = vmatprep.subr.mxu0 0.0
        %757 = vmatpush1.msra.mxu0 0.0
        %758 = vmatprep.subr.mxu0 0.0
        %759 = vmatpush1.msra.mxu0 0.0
        %760 = vmatprep.subr.mxu0 0.0
        %761 = vmatpush1.msra.mxu0 0.0
        %762 = vmatprep.subr.mxu0 0.0
        %763 = vmatpush1.msra.mxu0 0.0
        %764 = vmatprep.subr.mxu0 0.0
        %765 = vmatpush1.msra.mxu0 0.0
        %766 = vmatprep.subr.mxu0 0.0
        %767 = vmatpush1.msra.mxu0 0.0
        %768 = vmatprep.subr.mxu0 0.0
        %769 = vmatpush1.msra.mxu0 0.0
        %770 = vmatprep.subr.mxu0 0.0
        %771 = vmatpush1.msra.mxu0 0.0
        %772 = vmatprep.subr.mxu0 0.0
        %773 = vmatpush1.msra.mxu0 0.0
        %774 = vmatprep.subr.mxu0 0.0
        %775 = vmatpush1.msra.mxu0 0.0
        %776 = vmatprep.subr.mxu0 0.0
        %777 = vmatpush1.msra.mxu0 0.0
        %778 = vmatprep.subr.mxu0 0.0
        %779 = vmatpush1.msra.mxu0 0.0
        %780 = vmatprep.subr.mxu0 0.0
        %781 = vmatpush1.msra.mxu0 0.0
        %782 = vmatprep.subr.mxu0 0.0
        %783 = vmatpush1.msra.mxu0 0.0
        %784 = vmatprep.subr.mxu0 0.0
        %785 = vmatpush1.msra.mxu0 0.0
        %786 = vmatprep.subr.mxu0 0.0
        %787 = vmatpush1.msra.mxu0 0.0
        %788 = vmatprep.subr.mxu0 0.0
        %789 = vmatpush1.msra.mxu0 0.0
        %790 = vmatprep.subr.mxu0 0.0
        %791 = vmatpush1.msra.mxu0 0.0
        %792 = vmatprep.subr.mxu0 0.0
        %793 = vmatpush1.msra.mxu0 0.0
        %794 = vmatprep.subr.mxu0 0.0
        %795 = vmatpush1.msra.mxu0 0.0
        %796 = vmatprep.subr.mxu0 0.0
        %797 = vmatpush1.msra.mxu0 0.0
        %798 = vmatprep.subr.mxu0 0.0
        %799 = vmatpush1.msra.mxu0 0.0
        %800 = vmatprep.subr.mxu0 0.0
        %801 = vmatpush1.msra.mxu0 0.0
        %802 = vmatprep.subr.mxu0 0.0
        %803 = vmatpush1.msra.mxu0 0.0
        %804 = vmatprep.subr.mxu0 0.0
        %805 = vmatpush1.msra.mxu0 0.0
        %806 = vmatprep.subr.mxu0 0.0
        %807 = vmatpush1.msra.mxu0 0.0
        %808 = vmatprep.subr.mxu0 0.0
        %809 = vmatpush1.msra.mxu0 0.0
        %810 = vmatprep.mubr.f32.mxu0 0.0
        %811 = vmatmul.mubr.f32.gmra.mrb[0].mxu0 %v744
        %v812 = vpop.f32.mrb[0].mxu0
        %v813 = vadd.f32 %v740, %v812
        %v814 = vpop.f32.mrb[0].mxu0
        %815 = vdwg.mxu0
        %v816 = vld [vmem:[%s1] sm:$0xff]
        %v817 = vadd.f32 %v813, %v816
        %v818 = vld [vmem:[%s4] sm:$0xff]
        %v819 = vld [vmem:[%s4 + $0x8] sm:$0xff]
        %v820 = vld [vmem:[%s4 + $0x10] sm:$0xff]
        %v821 = vld [vmem:[%s4 + $0x18] sm:$0xff]
        %v822 = vld [vmem:[%s5] sm:$0x1]
        %v823 = vld [vmem:[%s6] sm:$0xff]
        %v824 = vld [vmem:[%s6 + $0x8] sm:$0xff]
        %v825 = vld [vmem:[%s6 + $0x10] sm:$0xff]
        %v826 = vld [vmem:[%s6 + $0x18] sm:$0xff]
        %v827 = vld [vmem:[%s7] sm:$0x1]
        %v829 = vlaneseq
        %v830 = vshrl.u32 %v829, 7
        %v831 = vsub.s32 0, %v830
        %v832 = vrot.slane %v822, %v831
        %vm834 = vcmask 261120
        %v836 = vsel %vm834, %v817, 0
        %838 = vmatprep.subr.mxu0 0.0
        %839 = vmatpush1.msra.mxu0 %v818
        %840 = vmatprep.subr.mxu0 0.0
        %841 = vmatpush1.msra.mxu0 %v819
        %842 = vmatprep.subr.mxu0 0.0
        %843 = vmatpush1.msra.mxu0 %v820
        %844 = vmatprep.subr.mxu0 0.0
        %845 = vmatpush1.msra.mxu0 %v821
        %846 = vmatprep.subr.mxu0 0.0
        %847 = vmatpush1.msra.mxu0 0.0
        %848 = vmatprep.subr.mxu0 0.0
        %849 = vmatpush1.msra.mxu0 0.0
        %850 = vmatprep.subr.mxu0 0.0
        %851 = vmatpush1.msra.mxu0 0.0
        %852 = vmatprep.subr.mxu0 0.0
        %853 = vmatpush1.msra.mxu0 0.0
        %854 = vmatprep.subr.mxu0 0.0
        %855 = vmatpush1.msra.mxu0 0.0
        %856 = vmatprep.subr.mxu0 0.0
        %857 = vmatpush1.msra.mxu0 0.0
        %858 = vmatprep.subr.mxu0 0.0
        %859 = vmatpush1.msra.mxu0 0.0
        %860 = vmatprep.subr.mxu0 0.0
        %861 = vmatpush1.msra.mxu0 0.0
        %862 = vmatprep.subr.mxu0 0.0
        %863 = vmatpush1.msra.mxu0 0.0
        %864 = vmatprep.subr.mxu0 0.0
        %865 = vmatpush1.msra.mxu0 0.0
        %866 = vmatprep.subr.mxu0 0.0
        %867 = vmatpush1.msra.mxu0 0.0
        %868 = vmatprep.subr.mxu0 0.0
        %869 = vmatpush1.msra.mxu0 0.0
        %870 = vmatprep.subr.mxu0 0.0
        %871 = vmatpush1.msra.mxu0 0.0
        %872 = vmatprep.subr.mxu0 0.0
        %873 = vmatpush1.msra.mxu0 0.0
        %874 = vmatprep.subr.mxu0 0.0
        %875 = vmatpush1.msra.mxu0 0.0
        %876 = vmatprep.subr.mxu0 0.0
        %877 = vmatpush1.msra.mxu0 0.0
        %878 = vmatprep.subr.mxu0 0.0
        %879 = vmatpush1.msra.mxu0 0.0
        %880 = vmatprep.subr.mxu0 0.0
        %881 = vmatpush1.msra.mxu0 0.0
        %882 = vmatprep.subr.mxu0 0.0
        %883 = vmatpush1.msra.mxu0 0.0
        %884 = vmatprep.subr.mxu0 0.0
        %885 = vmatpush1.msra.mxu0 0.0
        %886 = vmatprep.subr.mxu0 0.0
        %887 = vmatpush1.msra.mxu0 0.0
        %888 = vmatprep.subr.mxu0 0.0
        %889 = vmatpush1.msra.mxu0 0.0
        %890 = vmatprep.subr.mxu0 0.0
        %891 = vmatpush1.msra.mxu0 0.0
        %892 = vmatprep.subr.mxu0 0.0
        %893 = vmatpush1.msra.mxu0 0.0
        %894 = vmatprep.subr.mxu0 0.0
        %895 = vmatpush1.msra.mxu0 0.0
        %896 = vmatprep.subr.mxu0 0.0
        %897 = vmatpush1.msra.mxu0 0.0
        %898 = vmatprep.subr.mxu0 0.0
        %899 = vmatpush1.msra.mxu0 0.0
        %900 = vmatprep.subr.mxu0 0.0
        %901 = vmatpush1.msra.mxu0 0.0
        %902 = vmatprep.mubr.f32.mxu0 0.0
        %903 = vmatmul.mubr.f32.gmra.mrb[0].mxu0 %v836
        %v904 = vpop.f32.mrb[0].mxu0
        %v905 = vadd.f32 %v832, %v904
        %v906 = vpop.f32.mrb[0].mxu0
        %907 = vdwg.mxu0
        %909 = vrot.lane.b32.xlu0 %v905, 96
        %v910 = vpop.permute.xlu0 %909
        %vm911 = vcmask 64512
        %v912 = vsel %vm911, %v905, 0
        %v914 = vsel %vm911, %v910, 0
        %916 = vmatprep.subr.mxu0 0.0
        %917 = vmatpush1.xpose.msra.mxu0 %v914
        %918 = vmatprep.subr.mxu0 0.0
        %919 = vmatpush1.xpose.msra.mxu0 0.0
        %920 = vmatprep.subr.mxu0 0.0
        %921 = vmatpush1.xpose.msra.mxu0 0.0
        %922 = vmatprep.subr.mxu0 0.0
        %923 = vmatpush1.xpose.msra.mxu0 0.0
        %924 = vmatprep.subr.mxu0 0.0
        %925 = vmatpush1.xpose.msra.mxu0 0.0
        %926 = vmatprep.subr.mxu0 0.0
        %927 = vmatpush1.xpose.msra.mxu0 0.0
        %928 = vmatprep.subr.mxu0 0.0
        %929 = vmatpush1.xpose.msra.mxu0 0.0
        %930 = vmatprep.subr.mxu0 0.0
        %931 = vmatpush1.xpose.msra.mxu0 0.0
        %932 = vmatprep.subr.mxu0 0.0
        %933 = vmatpush1.xpose.msra.mxu0 0.0
        %934 = vmatprep.subr.mxu0 0.0
        %935 = vmatpush1.xpose.msra.mxu0 0.0
        %936 = vmatprep.subr.mxu0 0.0
        %937 = vmatpush1.xpose.msra.mxu0 0.0
        %938 = vmatprep.subr.mxu0 0.0
        %939 = vmatpush1.xpose.msra.mxu0 0.0
        %940 = vmatprep.subr.mxu0 0.0
        %941 = vmatpush1.xpose.msra.mxu0 0.0
        %942 = vmatprep.subr.mxu0 0.0
        %943 = vmatpush1.xpose.msra.mxu0 0.0
        %944 = vmatprep.subr.mxu0 0.0
        %945 = vmatpush1.xpose.msra.mxu0 0.0
        %946 = vmatprep.subr.mxu0 0.0
        %947 = vmatpush1.xpose.msra.mxu0 0.0
        %948 = vmatprep.subr.mxu0 0.0
        %949 = vmatpush1.xpose.msra.mxu0 0.0
        %950 = vmatprep.subr.mxu0 0.0
        %951 = vmatpush1.xpose.msra.mxu0 0.0
        %952 = vmatprep.subr.mxu0 0.0
        %953 = vmatpush1.xpose.msra.mxu0 0.0
        %954 = vmatprep.subr.mxu0 0.0
        %955 = vmatpush1.xpose.msra.mxu0 0.0
        %956 = vmatprep.subr.mxu0 0.0
        %957 = vmatpush1.xpose.msra.mxu0 0.0
        %958 = vmatprep.subr.mxu0 0.0
        %959 = vmatpush1.xpose.msra.mxu0 0.0
        %960 = vmatprep.subr.mxu0 0.0
        %961 = vmatpush1.xpose.msra.mxu0 0.0
        %962 = vmatprep.subr.mxu0 0.0
        %963 = vmatpush1.xpose.msra.mxu0 0.0
        %964 = vmatprep.subr.mxu0 0.0
        %965 = vmatpush1.xpose.msra.mxu0 0.0
        %966 = vmatprep.subr.mxu0 0.0
        %967 = vmatpush1.xpose.msra.mxu0 0.0
        %968 = vmatprep.subr.mxu0 0.0
        %969 = vmatpush1.xpose.msra.mxu0 0.0
        %970 = vmatprep.subr.mxu0 0.0
        %971 = vmatpush1.xpose.msra.mxu0 0.0
        %972 = vmatprep.subr.mxu0 0.0
        %973 = vmatpush1.xpose.msra.mxu0 0.0
        %974 = vmatprep.subr.mxu0 0.0
        %975 = vmatpush1.xpose.msra.mxu0 0.0
        %976 = vmatprep.subr.mxu0 0.0
        %977 = vmatpush1.xpose.msra.mxu0 0.0
        %978 = vmatprep.subr.mxu0 0.0
        %979 = vmatpush1.xpose.msra.mxu0 0.0
        %980 = vmatprep.mubr.f32.mxu0 0.0
        %981 = vmatmul.mubr.f32.gmra.mrb[0].mxu0 %v912
        %v982 = vpop.f32.mrb[0].mxu0
        %v983 = vadd.f32 0.0, %v982
        %v984 = vpop.f32.mrb[0].mxu0
        %985 = vdwg.mxu0
        %v986 = vmul.f32 %v983, 0.35355338
        %v987 = vsel %vm911, %v986, -inf
        %988 = vmax.xlane.f32.xlu0 %v987
        %v989 = vpop.xlane.xlu0 %988
        %v990 = vsub.f32 %v986, %v989
        %v991 = vmul.f32 %v990, 1.442695
        %v992 = vpow.pop %v991
        %v993 = vsel %vm911, %v992, 0.0
        %994 = vadd.xlane.f32.xlu0 %v993
        %v995 = vpop.xlane.xlu0 %994
        %v996 = vrcp.pop %v995
        %v997 = vmul.f32 %v992, %v996
        %998 = vrot.lane.b32.xlu0 %v905, 64
        %v999 = vpop.permute.xlu0 %998
        %v1002 = vsel %vm911, %v997, 0
        %1004 = vmatprep.subr.mxu0 0.0
        %1005 = vmatpush1.msra.mxu0 %v999
        %1006 = vmatprep.subr.mxu0 0.0
        %1007 = vmatpush1.msra.mxu0 0.0
        %1008 = vmatprep.subr.mxu0 0.0
        %1009 = vmatpush1.msra.mxu0 0.0
        %1010 = vmatprep.subr.mxu0 0.0
        %1011 = vmatpush1.msra.mxu0 0.0
        %1012 = vmatprep.subr.mxu0 0.0
        %1013 = vmatpush1.msra.mxu0 0.0
        %1014 = vmatprep.subr.mxu0 0.0
        %1015 = vmatpush1.msra.mxu0 0.0
        %1016 = vmatprep.subr.mxu0 0.0
        %1017 = vmatpush1.msra.mxu0 0.0
        %1018 = vmatprep.subr.mxu0 0.0
        %1019 = vmatpush1.msra.mxu0 0.0
        %1020 = vmatprep.subr.mxu0 0.0
        %1021 = vmatpush1.msra.mxu0 0.0
        %1022 = vmatprep.subr.mxu0 0.0
        %1023 = vmatpush1.msra.mxu0 0.0
        %1024 = vmatprep.subr.mxu0 0.0
        %1025 = vmatpush1.msra.mxu0 0.0
        %1026 = vmatprep.subr.mxu0 0.0
        %1027 = vmatpush1.msra.mxu0 0.0
        %1028 = vmatprep.subr.mxu0 0.0
        %1029 = vmatpush1.msra.mxu0 0.0
        %1030 = vmatprep.subr.mxu0 0.0
        %1031 = vmatpush1.msra.mxu0 0.0
        %1032 = vmatprep.subr.mxu0 0.0
        %1033 = vmatpush1.msra.mxu0 0.0
        %1034 = vmatprep.subr.mxu0 0.0
        %1035 = vmatpush1.msra.mxu0 0.0
        %1036 = vmatprep.subr.mxu0 0.0
        %1037 = vmatpush1.msra.mxu0 0.0
        %1038 = vmatprep.subr.mxu0 0.0
        %1039 = vmatpush1.msra.mxu0 0.0
        %1040 = vmatprep.subr.mxu0 0.0
        %1041 = vmatpush1.msra.mxu0 0.0
        %1042 = vmatprep.subr.mxu0 0.0
        %1043 = vmatpush1.msra.mxu0 0.0
        %1044 = vmatprep.subr.mxu0 0.0
        %1045 = vmatpush1.msra.mxu0 0.0
        %1046 = vmatprep.subr.mxu0 0.0
        %1047 = vmatpush1.msra.mxu0 0.0
        %1048 = vmatprep.subr.mxu0 0.0
        %1049 = vmatpush1.msra.mxu0 0.0
        %1050 = vmatprep.subr.mxu0 0.0
        %1051 = vmatpush1.msra.mxu0 0.0
        %1052 = vmatprep.subr.mxu0 0.0
        %1053 = vmatpush1.msra.mxu0 0.0
        %1054 = vmatprep.subr.mxu0 0.0
        %1055 = vmatpush1.msra.mxu0 0.0
        %1056 = vmatprep.subr.mxu0 0.0
        %1057 = vmatpush1.msra.mxu0 0.0
        %1058 = vmatprep.subr.mxu0 0.0
        %1059 = vmatpush1.msra.mxu0 0.0
        %1060 = vmatprep.subr.mxu0 0.0
        %1061 = vmatpush1.msra.mxu0 0.0
        %1062 = vmatprep.subr.mxu0 0.0
        %1063 = vmatpush1.msra.mxu0 0.0
        %1064 = vmatprep.subr.mxu0 0.0
        %1065 = vmatpush1.msra.mxu0 0.0
        %1066 = vmatprep.subr.mxu0 0.0
        %1067 = vmatpush1.msra.mxu0 0.0
        %1068 = vmatprep.mubr.f32.mxu0 0.0
        %1069 = vmatmul.mubr.f32.gmra.mrb[0].mxu0 %v1002
        %v1070 = vpop.f32.mrb[0].mxu0
        %v1071 = vadd.f32 0.0, %v1070
        %v1072 = vpop.f32.mrb[0].mxu0
        %1073 = vdwg.mxu0
        %1074 = vrot.lane.b32.xlu0 %v905, 120
        %v1075 = vpop.permute.xlu0 %1074
        %1076 = vrot.lane.b32.xlu0 %v905, 88
        %v1077 = vpop.permute.xlu0 %1076
        %v1078 = vsel %vm911, %v1075, 0
        %v1080 = vsel %vm911, %v1077, 0
        %1082 = vmatprep.subr.mxu0 0.0
        %1083 = vmatpush1.xpose.msra.mxu0 %v1080
        %1084 = vmatprep.subr.mxu0 0.0
        %1085 = vmatpush1.xpose.msra.mxu0 0.0
        %1086 = vmatprep.subr.mxu0 0.0
        %1087 = vmatpush1.xpose.msra.mxu0 0.0
        %1088 = vmatprep.subr.mxu0 0.0
        %1089 = vmatpush1.xpose.msra.mxu0 0.0
        %1090 = vmatprep.subr.mxu0 0.0
        %1091 = vmatpush1.xpose.msra.mxu0 0.0
        %1092 = vmatprep.subr.mxu0 0.0
        %1093 = vmatpush1.xpose.msra.mxu0 0.0
        %1094 = vmatprep.subr.mxu0 0.0
        %1095 = vmatpush1.xpose.msra.mxu0 0.0
        %1096 = vmatprep.subr.mxu0 0.0
        %1097 = vmatpush1.xpose.msra.mxu0 0.0
        %1098 = vmatprep.subr.mxu0 0.0
        %1099 = vmatpush1.xpose.msra.mxu0 0.0
        %1100 = vmatprep.subr.mxu0 0.0
        %1101 = vmatpush1.xpose.msra.mxu0 0.0
        %1102 = vmatprep.subr.mxu0 0.0
        %1103 = vmatpush1.xpose.msra.mxu0 0.0
        %1104 = vmatprep.subr.mxu0 0.0
        %1105 = vmatpush1.xpose.msra.mxu0 0.0
        %1106 = vmatprep.subr.mxu0 0.0
        %1107 = vmatpush1.xpose.msra.mxu0 0.0
        %1108 = vmatprep.subr.mxu0 0.0
        %1109 = vmatpush1.xpose.msra.mxu0 0.0
        %1110 = vmatprep.subr.mxu0 0.0
        %1111 = vmatpush1.xpose.msra.mxu0 0.0
        %1112 = vmatprep.subr.mxu0 0.0
        %1113 = vmatpush1.xpose.msra.mxu0 0.0
        %1114 = vmatprep.subr.mxu0 0.0
        %1115 = vmatpush1.xpose.msra.mxu0 0.0
        %1116 = vmatprep.subr.mxu0 0.0
        %1117 = vmatpush1.xpose.msra.mxu0 0.0
        %1118 = vmatprep.subr.mxu0 0.0
        %1119 = vmatpush1.xpose.msra.mxu0 0.0
        %1120 = vmatprep.subr.mxu0 0.0
        %1121 = vmatpush1.xpose.msra.mxu0 0.0
        %1122 = vmatprep.subr.mxu0 0.0
        %1123 = vmatpush1.xpose.msra.mxu0 0.0
        %1124 = vmatprep.subr.mxu0 0.0
        %1125 = vmatpush1.xpose.msra.mxu0 0.0
        %1126 = vmatprep.subr.mxu0 0.0
        %1127 = vmatpush1.xpose.msra.mxu0 0.0
        %1128 = vmatprep.subr.mxu0 0.0
        %1129 = vmatpush1.xpose.msra.mxu0 0.0
        %1130 = vmatprep.subr.mxu0 0.0
        %1131 = vmatpush1.xpose.msra.mxu0 0.0
        %1132 = vmatprep.subr.mxu0 0.0
        %1133 = vmatpush1.xpose.msra.mxu0 0.0
        %1134 = vmatprep.subr.mxu0 0.0
        %1135 = vmatpush1.xpose.msra.mxu0 0.0
        %1136 = vmatprep.subr.mxu0 0.0
        %1137 = vmatpush1.xpose.msra.mxu0 0.0
        %1138 = vmatprep.subr.mxu0 0.0
        %1139 = vmatpush1.xpose.msra.mxu0 0.0
        %1140 = vmatprep.subr.mxu0 0.0
        %1141 = vmatpush1.xpose.msra.mxu0 0.0
        %1142 = vmatprep.subr.mxu0 0.0
        %1143 = vmatpush1.xpose.msra.mxu0 0.0
        %1144 = vmatprep.subr.mxu0 0.0
        %1145 = vmatpush1.xpose.msra.mxu0 0.0
        %1146 = vmatprep.mubr.f32.mxu0 0.0
        %1147 = vmatmul.mubr.f32.gmra.mrb[0].mxu0 %v1078
        %v1148 = vpop.f32.mrb[0].mxu0
        %v1149 = vadd.f32 0.0, %v1148
        %v1150 = vpop.f32.mrb[0].mxu0
        %1151 = vdwg.mxu0
        %v1152 = vmul.f32 %v1149, 0.35355338
        %v1153 = vsel %vm911, %v1152, -inf
        %1154 = vmax.xlane.f32.xlu0 %v1153
        %v1155 = vpop.xlane.xlu0 %1154
        %v1156 = vsub.f32 %v1152, %v1155
        %v1157 = vmul.f32 %v1156, 1.442695
        %v1158 = vpow.pop %v1157
        %v1159 = vsel %vm911, %v1158, 0.0
        %1160 = vadd.xlane.f32.xlu0 %v1159
        %v1161 = vpop.xlane.xlu0 %1160
        %v1162 = vrcp.pop %v1161
        %v1163 = vmul.f32 %v1158, %v1162
        %1164 = vrot.lane.b32.xlu0 %v905, 56
        %v1165 = vpop.permute.xlu0 %1164
        %v1168 = vsel %vm911, %v1163, 0
        %1170 = vmatprep.subr.mxu0 0.0
        %1171 = vmatpush1.msra.mxu0 %v1165
        %1172 = vmatprep.subr.mxu0 0.0
        %1173 = vmatpush1.msra.mxu0 0.0
        %1174 = vmatprep.subr.mxu0 0.0
        %1175 = vmatpush1.msra.mxu0 0.0
        %1176 = vmatprep.subr.mxu0 0.0
        %1177 = vmatpush1.msra.mxu0 0.0
        %1178 = vmatprep.subr.mxu0 0.0
        %1179 = vmatpush1.msra.mxu0 0.0
        %1180 = vmatprep.subr.mxu0 0.0
        %1181 = vmatpush1.msra.mxu0 0.0
        %1182 = vmatprep.subr.mxu0 0.0
        %1183 = vmatpush1.msra.mxu0 0.0
        %1184 = vmatprep.subr.mxu0 0.0
        %1185 = vmatpush1.msra.mxu0 0.0
        %1186 = vmatprep.subr.mxu0 0.0
        %1187 = vmatpush1.msra.mxu0 0.0
        %1188 = vmatprep.subr.mxu0 0.0
        %1189 = vmatpush1.msra.mxu0 0.0
        %1190 = vmatprep.subr.mxu0 0.0
        %1191 = vmatpush1.msra.mxu0 0.0
        %1192 = vmatprep.subr.mxu0 0.0
        %1193 = vmatpush1.msra.mxu0 0.0
        %1194 = vmatprep.subr.mxu0 0.0
        %1195 = vmatpush1.msra.mxu0 0.0
        %1196 = vmatprep.subr.mxu0 0.0
        %1197 = vmatpush1.msra.mxu0 0.0
        %1198 = vmatprep.subr.mxu0 0.0
        %1199 = vmatpush1.msra.mxu0 0.0
        %1200 = vmatprep.subr.mxu0 0.0
        %1201 = vmatpush1.msra.mxu0 0.0
        %1202 = vmatprep.subr.mxu0 0.0
        %1203 = vmatpush1.msra.mxu0 0.0
        %1204 = vmatprep.subr.mxu0 0.0
        %1205 = vmatpush1.msra.mxu0 0.0
        %1206 = vmatprep.subr.mxu0 0.0
        %1207 = vmatpush1.msra.mxu0 0.0
        %1208 = vmatprep.subr.mxu0 0.0
        %1209 = vmatpush1.msra.mxu0 0.0
        %1210 = vmatprep.subr.mxu0 0.0
        %1211 = vmatpush1.msra.mxu0 0.0
        %1212 = vmatprep.subr.mxu0 0.0
        %1213 = vmatpush1.msra.mxu0 0.0
        %1214 = vmatprep.subr.mxu0 0.0
        %1215 = vmatpush1.msra.mxu0 0.0
        %1216 = vmatprep.subr.mxu0 0.0
        %1217 = vmatpush1.msra.mxu0 0.0
        %1218 = vmatprep.subr.mxu0 0.0
        %1219 = vmatpush1.msra.mxu0 0.0
        %1220 = vmatprep.subr.mxu0 0.0
        %1221 = vmatpush1.msra.mxu0 0.0
        %1222 = vmatprep.subr.mxu0 0.0
        %1223 = vmatpush1.msra.mxu0 0.0
        %1224 = vmatprep.subr.mxu0 0.0
        %1225 = vmatpush1.msra.mxu0 0.0
        %1226 = vmatprep.subr.mxu0 0.0
        %1227 = vmatpush1.msra.mxu0 0.0
        %1228 = vmatprep.subr.mxu0 0.0
        %1229 = vmatpush1.msra.mxu0 0.0
        %1230 = vmatprep.subr.mxu0 0.0
        %1231 = vmatpush1.msra.mxu0 0.0
        %1232 = vmatprep.subr.mxu0 0.0
        %1233 = vmatpush1.msra.mxu0 0.0
        %1234 = vmatprep.mubr.f32.mxu0 0.0
        %1235 = vmatmul.mubr.f32.gmra.mrb[0].mxu0 %v1168
        %v1236 = vpop.f32.mrb[0].mxu0
        %v1237 = vadd.f32 0.0, %v1236
        %v1238 = vpop.f32.mrb[0].mxu0
        %1239 = vdwg.mxu0
        %1240 = vrot.lane.b32.xlu0 %v905, 112
        %v1241 = vpop.permute.xlu0 %1240
        %1242 = vrot.lane.b32.xlu0 %v905, 80
        %v1243 = vpop.permute.xlu0 %1242
        %v1244 = vsel %vm911, %v1241, 0
        %v1246 = vsel %vm911, %v1243, 0
        %1248 = vmatprep.subr.mxu0 0.0
        %1249 = vmatpush1.xpose.msra.mxu0 %v1246
        %1250 = vmatprep.subr.mxu0 0.0
        %1251 = vmatpush1.xpose.msra.mxu0 0.0
        %1252 = vmatprep.subr.mxu0 0.0
        %1253 = vmatpush1.xpose.msra.mxu0 0.0
        %1254 = vmatprep.subr.mxu0 0.0
        %1255 = vmatpush1.xpose.msra.mxu0 0.0
        %1256 = vmatprep.subr.mxu0 0.0
        %1257 = vmatpush1.xpose.msra.mxu0 0.0
        %1258 = vmatprep.subr.mxu0 0.0
        %1259 = vmatpush1.xpose.msra.mxu0 0.0
        %1260 = vmatprep.subr.mxu0 0.0
        %1261 = vmatpush1.xpose.msra.mxu0 0.0
        %1262 = vmatprep.subr.mxu0 0.0
        %1263 = vmatpush1.xpose.msra.mxu0 0.0
        %1264 = vmatprep.subr.mxu0 0.0
        %1265 = vmatpush1.xpose.msra.mxu0 0.0
        %1266 = vmatprep.subr.mxu0 0.0
        %1267 = vmatpush1.xpose.msra.mxu0 0.0
        %1268 = vmatprep.subr.mxu0 0.0
        %1269 = vmatpush1.xpose.msra.mxu0 0.0
        %1270 = vmatprep.subr.mxu0 0.0
        %1271 = vmatpush1.xpose.msra.mxu0 0.0
        %1272 = vmatprep.subr.mxu0 0.0
        %1273 = vmatpush1.xpose.msra.mxu0 0.0
        %1274 = vmatprep.subr.mxu0 0.0
        %1275 = vmatpush1.xpose.msra.mxu0 0.0
        %1276 = vmatprep.subr.mxu0 0.0
        %1277 = vmatpush1.xpose.msra.mxu0 0.0
        %1278 = vmatprep.subr.mxu0 0.0
        %1279 = vmatpush1.xpose.msra.mxu0 0.0
        %1280 = vmatprep.subr.mxu0 0.0
        %1281 = vmatpush1.xpose.msra.mxu0 0.0
        %1282 = vmatprep.subr.mxu0 0.0
        %1283 = vmatpush1.xpose.msra.mxu0 0.0
        %1284 = vmatprep.subr.mxu0 0.0
        %1285 = vmatpush1.xpose.msra.mxu0 0.0
        %1286 = vmatprep.subr.mxu0 0.0
        %1287 = vmatpush1.xpose.msra.mxu0 0.0
        %1288 = vmatprep.subr.mxu0 0.0
        %1289 = vmatpush1.xpose.msra.mxu0 0.0
        %1290 = vmatprep.subr.mxu0 0.0
        %1291 = vmatpush1.xpose.msra.mxu0 0.0
        %1292 = vmatprep.subr.mxu0 0.0
        %1293 = vmatpush1.xpose.msra.mxu0 0.0
        %1294 = vmatprep.subr.mxu0 0.0
        %1295 = vmatpush1.xpose.msra.mxu0 0.0
        %1296 = vmatprep.subr.mxu0 0.0
        %1297 = vmatpush1.xpose.msra.mxu0 0.0
        %1298 = vmatprep.subr.mxu0 0.0
        %1299 = vmatpush1.xpose.msra.mxu0 0.0
        %1300 = vmatprep.subr.mxu0 0.0
        %1301 = vmatpush1.xpose.msra.mxu0 0.0
        %1302 = vmatprep.subr.mxu0 0.0
        %1303 = vmatpush1.xpose.msra.mxu0 0.0
        %1304 = vmatprep.subr.mxu0 0.0
        %1305 = vmatpush1.xpose.msra.mxu0 0.0
        %1306 = vmatprep.subr.mxu0 0.0
        %1307 = vmatpush1.xpose.msra.mxu0 0.0
        %1308 = vmatprep.subr.mxu0 0.0
        %1309 = vmatpush1.xpose.msra.mxu0 0.0
        %1310 = vmatprep.subr.mxu0 0.0
        %1311 = vmatpush1.xpose.msra.mxu0 0.0
        %1312 = vmatprep.mubr.f32.mxu0 0.0
        %1313 = vmatmul.mubr.f32.gmra.mrb[0].mxu0 %v1244
        %v1314 = vpop.f32.mrb[0].mxu0
        %v1315 = vadd.f32 0.0, %v1314
        %v1316 = vpop.f32.mrb[0].mxu0
        %1317 = vdwg.mxu0
        %v1318 = vmul.f32 %v1315, 0.35355338
        %v1319 = vsel %vm911, %v1318, -inf
        %1320 = vmax.xlane.f32.xlu0 %v1319
        %v1321 = vpop.xlane.xlu0 %1320
        %v1322 = vsub.f32 %v1318, %v1321
        %v1323 = vmul.f32 %v1322, 1.442695
        %v1324 = vpow.pop %v1323
        %v1325 = vsel %vm911, %v1324, 0.0
        %1326 = vadd.xlane.f32.xlu0 %v1325
        %v1327 = vpop.xlane.xlu0 %1326
        %v1328 = vrcp.pop %v1327
        %v1329 = vmul.f32 %v1324, %v1328
        %1330 = vrot.lane.b32.xlu0 %v905, 48
        %v1331 = vpop.permute.xlu0 %1330
        %v1334 = vsel %vm911, %v1329, 0
        %1336 = vmatprep.subr.mxu0 0.0
        %1337 = vmatpush1.msra.mxu0 %v1331
        %1338 = vmatprep.subr.mxu0 0.0
        %1339 = vmatpush1.msra.mxu0 0.0
        %1340 = vmatprep.subr.mxu0 0.0
        %1341 = vmatpush1.msra.mxu0 0.0
        %1342 = vmatprep.subr.mxu0 0.0
        %1343 = vmatpush1.msra.mxu0 0.0
        %1344 = vmatprep.subr.mxu0 0.0
        %1345 = vmatpush1.msra.mxu0 0.0
        %1346 = vmatprep.subr.mxu0 0.0
        %1347 = vmatpush1.msra.mxu0 0.0
        %1348 = vmatprep.subr.mxu0 0.0
        %1349 = vmatpush1.msra.mxu0 0.0
        %1350 = vmatprep.subr.mxu0 0.0
        %1351 = vmatpush1.msra.mxu0 0.0
        %1352 = vmatprep.subr.mxu0 0.0
        %1353 = vmatpush1.msra.mxu0 0.0
        %1354 = vmatprep.subr.mxu0 0.0
        %1355 = vmatpush1.msra.mxu0 0.0
        %1356 = vmatprep.subr.mxu0 0.0
        %1357 = vmatpush1.msra.mxu0 0.0
        %1358 = vmatprep.subr.mxu0 0.0
        %1359 = vmatpush1.msra.mxu0 0.0
        %1360 = vmatprep.subr.mxu0 0.0
        %1361 = vmatpush1.msra.mxu0 0.0
        %1362 = vmatprep.subr.mxu0 0.0
        %1363 = vmatpush1.msra.mxu0 0.0
        %1364 = vmatprep.subr.mxu0 0.0
        %1365 = vmatpush1.msra.mxu0 0.0
        %1366 = vmatprep.subr.mxu0 0.0
        %1367 = vmatpush1.msra.mxu0 0.0
        %1368 = vmatprep.subr.mxu0 0.0
        %1369 = vmatpush1.msra.mxu0 0.0
        %1370 = vmatprep.subr.mxu0 0.0
        %1371 = vmatpush1.msra.mxu0 0.0
        %1372 = vmatprep.subr.mxu0 0.0
        %1373 = vmatpush1.msra.mxu0 0.0
        %1374 = vmatprep.subr.mxu0 0.0
        %1375 = vmatpush1.msra.mxu0 0.0
        %1376 = vmatprep.subr.mxu0 0.0
        %1377 = vmatpush1.msra.mxu0 0.0
        %1378 = vmatprep.subr.mxu0 0.0
        %1379 = vmatpush1.msra.mxu0 0.0
        %1380 = vmatprep.subr.mxu0 0.0
        %1381 = vmatpush1.msra.mxu0 0.0
        %1382 = vmatprep.subr.mxu0 0.0
        %1383 = vmatpush1.msra.mxu0 0.0
        %1384 = vmatprep.subr.mxu0 0.0
        %1385 = vmatpush1.msra.mxu0 0.0
        %1386 = vmatprep.subr.mxu0 0.0
        %1387 = vmatpush1.msra.mxu0 0.0
        %1388 = vmatprep.subr.mxu0 0.0
        %1389 = vmatpush1.msra.mxu0 0.0
        %1390 = vmatprep.subr.mxu0 0.0
        %1391 = vmatpush1.msra.mxu0 0.0
        %1392 = vmatprep.subr.mxu0 0.0
        %1393 = vmatpush1.msra.mxu0 0.0
        %1394 = vmatprep.subr.mxu0 0.0
        %1395 = vmatpush1.msra.mxu0 0.0
        %1396 = vmatprep.subr.mxu0 0.0
        %1397 = vmatpush1.msra.mxu0 0.0
        %1398 = vmatprep.subr.mxu0 0.0
        %1399 = vmatpush1.msra.mxu0 0.0
        %1400 = vmatprep.mubr.f32.mxu0 0.0
        %1401 = vmatmul.mubr.f32.gmra.mrb[0].mxu0 %v1334
        %v1402 = vpop.f32.mrb[0].mxu0
        %v1403 = vadd.f32 0.0, %v1402
        %v1404 = vpop.f32.mrb[0].mxu0
        %1405 = vdwg.mxu0
        %1406 = vrot.lane.b32.xlu0 %v905, 104
        %v1407 = vpop.permute.xlu0 %1406
        %1408 = vrot.lane.b32.xlu0 %v905, 72
        %v1409 = vpop.permute.xlu0 %1408
        %v1410 = vsel %vm911, %v1407, 0
        %v1412 = vsel %vm911, %v1409, 0
        %1414 = vmatprep.subr.mxu0 0.0
        %1415 = vmatpush1.xpose.msra.mxu0 %v1412
        %1416 = vmatprep.subr.mxu0 0.0
        %1417 = vmatpush1.xpose.msra.mxu0 0.0
        %1418 = vmatprep.subr.mxu0 0.0
        %1419 = vmatpush1.xpose.msra.mxu0 0.0
        %1420 = vmatprep.subr.mxu0 0.0
        %1421 = vmatpush1.xpose.msra.mxu0 0.0
        %1422 = vmatprep.subr.mxu0 0.0
        %1423 = vmatpush1.xpose.msra.mxu0 0.0
        %1424 = vmatprep.subr.mxu0 0.0
        %1425 = vmatpush1.xpose.msra.mxu0 0.0
        %1426 = vmatprep.subr.mxu0 0.0
        %1427 = vmatpush1.xpose.msra.mxu0 0.0
        %1428 = vmatprep.subr.mxu0 0.0
        %1429 = vmatpush1.xpose.msra.mxu0 0.0
        %1430 = vmatprep.subr.mxu0 0.0
        %1431 = vmatpush1.xpose.msra.mxu0 0.0
        %1432 = vmatprep.subr.mxu0 0.0
        %1433 = vmatpush1.xpose.msra.mxu0 0.0
        %1434 = vmatprep.subr.mxu0 0.0
        %1435 = vmatpush1.xpose.msra.mxu0 0.0
        %1436 = vmatprep.subr.mxu0 0.0
        %1437 = vmatpush1.xpose.msra.mxu0 0.0
        %1438 = vmatprep.subr.mxu0 0.0
        %1439 = vmatpush1.xpose.msra.mxu0 0.0
        %1440 = vmatprep.subr.mxu0 0.0
        %1441 = vmatpush1.xpose.msra.mxu0 0.0
        %1442 = vmatprep.subr.mxu0 0.0
        %1443 = vmatpush1.xpose.msra.mxu0 0.0
        %1444 = vmatprep.subr.mxu0 0.0
        %1445 = vmatpush1.xpose.msra.mxu0 0.0
        %1446 = vmatprep.subr.mxu0 0.0
        %1447 = vmatpush1.xpose.msra.mxu0 0.0
        %1448 = vmatprep.subr.mxu0 0.0
        %1449 = vmatpush1.xpose.msra.mxu0 0.0
        %1450 = vmatprep.subr.mxu0 0.0
        %1451 = vmatpush1.xpose.msra.mxu0 0.0
        %1452 = vmatprep.subr.mxu0 0.0
        %1453 = vmatpush1.xpose.msra.mxu0 0.0
        %1454 = vmatprep.subr.mxu0 0.0
        %1455 = vmatpush1.xpose.msra.mxu0 0.0
        %1456 = vmatprep.subr.mxu0 0.0
        %1457 = vmatpush1.xpose.msra.mxu0 0.0
        %1458 = vmatprep.subr.mxu0 0.0
        %1459 = vmatpush1.xpose.msra.mxu0 0.0
        %1460 = vmatprep.subr.mxu0 0.0
        %1461 = vmatpush1.xpose.msra.mxu0 0.0
        %1462 = vmatprep.subr.mxu0 0.0
        %1463 = vmatpush1.xpose.msra.mxu0 0.0
        %1464 = vmatprep.subr.mxu0 0.0
        %1465 = vmatpush1.xpose.msra.mxu0 0.0
        %1466 = vmatprep.subr.mxu0 0.0
        %1467 = vmatpush1.xpose.msra.mxu0 0.0
        %1468 = vmatprep.subr.mxu0 0.0
        %1469 = vmatpush1.xpose.msra.mxu0 0.0
        %1470 = vmatprep.subr.mxu0 0.0
        %1471 = vmatpush1.xpose.msra.mxu0 0.0
        %1472 = vmatprep.subr.mxu0 0.0
        %1473 = vmatpush1.xpose.msra.mxu0 0.0
        %1474 = vmatprep.subr.mxu0 0.0
        %1475 = vmatpush1.xpose.msra.mxu0 0.0
        %1476 = vmatprep.subr.mxu0 0.0
        %1477 = vmatpush1.xpose.msra.mxu0 0.0
        %1478 = vmatprep.mubr.f32.mxu0 0.0
        %1479 = vmatmul.mubr.f32.gmra.mrb[0].mxu0 %v1410
        %v1480 = vpop.f32.mrb[0].mxu0
        %v1481 = vadd.f32 0.0, %v1480
        %v1482 = vpop.f32.mrb[0].mxu0
        %1483 = vdwg.mxu0
        %v1484 = vmul.f32 %v1481, 0.35355338
        %v1485 = vsel %vm911, %v1484, -inf
        %1486 = vmax.xlane.f32.xlu0 %v1485
        %v1487 = vpop.xlane.xlu0 %1486
        %v1488 = vsub.f32 %v1484, %v1487
        %v1489 = vmul.f32 %v1488, 1.442695
        %v1490 = vpow.pop %v1489
        %v1491 = vsel %vm911, %v1490, 0.0
        %1492 = vadd.xlane.f32.xlu0 %v1491
        %v1493 = vpop.xlane.xlu0 %1492
        %v1494 = vrcp.pop %v1493
        %v1495 = vmul.f32 %v1490, %v1494
        %1496 = vrot.lane.b32.xlu0 %v905, 40
        %v1497 = vpop.permute.xlu0 %1496
        %v1500 = vsel %vm911, %v1495, 0
        %1502 = vmatprep.subr.mxu0 0.0
        %1503 = vmatpush1.msra.mxu0 %v1497
        %1504 = vmatprep.subr.mxu0 0.0
        %1505 = vmatpush1.msra.mxu0 0.0
        %1506 = vmatprep.subr.mxu0 0.0
        %1507 = vmatpush1.msra.mxu0 0.0
        %1508 = vmatprep.subr.mxu0 0.0
        %1509 = vmatpush1.msra.mxu0 0.0
        %1510 = vmatprep.subr.mxu0 0.0
        %1511 = vmatpush1.msra.mxu0 0.0
        %1512 = vmatprep.subr.mxu0 0.0
        %1513 = vmatpush1.msra.mxu0 0.0
        %1514 = vmatprep.subr.mxu0 0.0
        %1515 = vmatpush1.msra.mxu0 0.0
        %1516 = vmatprep.subr.mxu0 0.0
        %1517 = vmatpush1.msra.mxu0 0.0
        %1518 = vmatprep.subr.mxu0 0.0
        %1519 = vmatpush1.msra.mxu0 0.0
        %1520 = vmatprep.subr.mxu0 0.0
        %1521 = vmatpush1.msra.mxu0 0.0
        %1522 = vmatprep.subr.mxu0 0.0
        %1523 = vmatpush1.msra.mxu0 0.0
        %1524 = vmatprep.subr.mxu0 0.0
        %1525 = vmatpush1.msra.mxu0 0.0
        %1526 = vmatprep.subr.mxu0 0.0
        %1527 = vmatpush1.msra.mxu0 0.0
        %1528 = vmatprep.subr.mxu0 0.0
        %1529 = vmatpush1.msra.mxu0 0.0
        %1530 = vmatprep.subr.mxu0 0.0
        %1531 = vmatpush1.msra.mxu0 0.0
        %1532 = vmatprep.subr.mxu0 0.0
        %1533 = vmatpush1.msra.mxu0 0.0
        %1534 = vmatprep.subr.mxu0 0.0
        %1535 = vmatpush1.msra.mxu0 0.0
        %1536 = vmatprep.subr.mxu0 0.0
        %1537 = vmatpush1.msra.mxu0 0.0
        %1538 = vmatprep.subr.mxu0 0.0
        %1539 = vmatpush1.msra.mxu0 0.0
        %1540 = vmatprep.subr.mxu0 0.0
        %1541 = vmatpush1.msra.mxu0 0.0
        %1542 = vmatprep.subr.mxu0 0.0
        %1543 = vmatpush1.msra.mxu0 0.0
        %1544 = vmatprep.subr.mxu0 0.0
        %1545 = vmatpush1.msra.mxu0 0.0
        %1546 = vmatprep.subr.mxu0 0.0
        %1547 = vmatpush1.msra.mxu0 0.0
        %1548 = vmatprep.subr.mxu0 0.0
        %1549 = vmatpush1.msra.mxu0 0.0
        %1550 = vmatprep.subr.mxu0 0.0
        %1551 = vmatpush1.msra.mxu0 0.0
        %1552 = vmatprep.subr.mxu0 0.0
        %1553 = vmatpush1.msra.mxu0 0.0
        %1554 = vmatprep.subr.mxu0 0.0
        %1555 = vmatpush1.msra.mxu0 0.0
        %1556 = vmatprep.subr.mxu0 0.0
        %1557 = vmatpush1.msra.mxu0 0.0
        %1558 = vmatprep.subr.mxu0 0.0
        %1559 = vmatpush1.msra.mxu0 0.0
        %1560 = vmatprep.subr.mxu0 0.0
        %1561 = vmatpush1.msra.mxu0 0.0
        %1562 = vmatprep.subr.mxu0 0.0
        %1563 = vmatpush1.msra.mxu0 0.0
        %1564 = vmatprep.subr.mxu0 0.0
        %1565 = vmatpush1.msra.mxu0 0.0
        %1566 = vmatprep.mubr.f32.mxu0 0.0
        %1567 = vmatmul.mubr.f32.gmra.mrb[0].mxu0 %v1500
        %v1568 = vpop.f32.mrb[0].mxu0
        %v1569 = vadd.f32 0.0, %v1568
        %v1570 = vpop.f32.mrb[0].mxu0
        %1571 = vdwg.mxu0
        %1573 = vrot.lane.b32.xlu0 %v1237, 8
        %v1574 = vpop.permute.xlu0 %1573
        %1577 = vrot.lane.b32.xlu0 %v1403, 16
        %v1578 = vpop.permute.xlu0 %1577
        %1581 = vrot.lane.b32.xlu0 %v1569, 24
        %v1582 = vpop.permute.xlu0 %1581
        %v1584 = vsel %vm911, %v1071, %v1574
        %v1585 = vsel %vm742, %v1584, %v1578
        %vm1586 = vcmask 195584
        %v1587 = vsel %vm1586, %v1585, %v1582
        %v1589 = vlaneseq
        %v1590 = vshrl.u32 %v1589, 7
        %v1591 = vsub.s32 0, %v1590
        %v1592 = vrot.slane %v827, %v1591
        %v1595 = vsel %vm834, %v1587, 0
        %1597 = vmatprep.subr.mxu0 0.0
        %1598 = vmatpush1.msra.mxu0 %v823
        %1599 = vmatprep.subr.mxu0 0.0
        %1600 = vmatpush1.msra.mxu0 %v824
        %1601 = vmatprep.subr.mxu0 0.0
        %1602 = vmatpush1.msra.mxu0 %v825
        %1603 = vmatprep.subr.mxu0 0.0
        %1604 = vmatpush1.msra.mxu0 %v826
        %1605 = vmatprep.subr.mxu0 0.0
        %1606 = vmatpush1.msra.mxu0 0.0
        %1607 = vmatprep.subr.mxu0 0.0
        %1608 = vmatpush1.msra.mxu0 0.0
        %1609 = vmatprep.subr.mxu0 0.0
        %1610 = vmatpush1.msra.mxu0 0.0
        %1611 = vmatprep.subr.mxu0 0.0
        %1612 = vmatpush1.msra.mxu0 0.0
        %1613 = vmatprep.subr.mxu0 0.0
        %1614 = vmatpush1.msra.mxu0 0.0
        %1615 = vmatprep.subr.mxu0 0.0
        %1616 = vmatpush1.msra.mxu0 0.0
        %1617 = vmatprep.subr.mxu0 0.0
        %1618 = vmatpush1.msra.mxu0 0.0
        %1619 = vmatprep.subr.mxu0 0.0
        %1620 = vmatpush1.msra.mxu0 0.0
        %1621 = vmatprep.subr.mxu0 0.0
        %1622 = vmatpush1.msra.mxu0 0.0
        %1623 = vmatprep.subr.mxu0 0.0
        %1624 = vmatpush1.msra.mxu0 0.0
        %1625 = vmatprep.subr.mxu0 0.0
        %1626 = vmatpush1.msra.mxu0 0.0
        %1627 = vmatprep.subr.mxu0 0.0
        %1628 = vmatpush1.msra.mxu0 0.0
        %1629 = vmatprep.subr.mxu0 0.0
        %1630 = vmatpush1.msra.mxu0 0.0
        %1631 = vmatprep.subr.mxu0 0.0
        %1632 = vmatpush1.msra.mxu0 0.0
        %1633 = vmatprep.subr.mxu0 0.0
        %1634 = vmatpush1.msra.mxu0 0.0
        %1635 = vmatprep.subr.mxu0 0.0
        %1636 = vmatpush1.msra.mxu0 0.0
        %1637 = vmatprep.subr.mxu0 0.0
        %1638 = vmatpush1.msra.mxu0 0.0
        %1639 = vmatprep.subr.mxu0 0.0
        %1640 = vmatpush1.msra.mxu0 0.0
        %1641 = vmatprep.subr.mxu0 0.0
        %1642 = vmatpush1.msra.mxu0 0.0
        %1643 = vmatprep.subr.mxu0 0.0
        %1644 = vmatpush1.msra.mxu0 0.0
        %1645 = vmatprep.subr.mxu0 0.0
        %1646 = vmatpush1.msra.mxu0 0.0
        %1647 = vmatprep.subr.mxu0 0.0
        %1648 = vmatpush1.msra.mxu0 0.0
        %1649 = vmatprep.subr.mxu0 0.0
        %1650 = vmatpush1.msra.mxu0 0.0
        %1651 = vmatprep.subr.mxu0 0.0
        %1652 = vmatpush1.msra.mxu0 0.0
        %1653 = vmatprep.subr.mxu0 0.0
        %1654 = vmatpush1.msra.mxu0 0.0
        %1655 = vmatprep.subr.mxu0 0.0
        %1656 = vmatpush1.msra.mxu0 0.0
        %1657 = vmatprep.subr.mxu0 0.0
        %1658 = vmatpush1.msra.mxu0 0.0
        %1659 = vmatprep.subr.mxu0 0.0
        %1660 = vmatpush1.msra.mxu0 0.0
        %1661 = vmatprep.mubr.f32.mxu0 0.0
        %1662 = vmatmul.mubr.f32.gmra.mrb[0].mxu0 %v1595
        %v1663 = vpop.f32.mrb[0].mxu0
        %v1664 = vadd.f32 %v1592, %v1663
        %v1665 = vpop.f32.mrb[0].mxu0
        %1666 = vdwg.mxu0
        %v1667 = vadd.f32 %v817, %v1664
        %v1668 = vld [vmem:[%s8] sm:$0x1]
        %v1669 = vld [vmem:[%s9] sm:$0x1]
        %v1670 = vsel %vm834, %v1667, 0.0
        %1671 = vadd.xlane.f32.xlu0 %v1670
        %v1672 = vpop.xlane.xlu0 %1671
        %v1673 = vrcp.pop 32.0
        %v1674 = vmul.f32 %v1672, %v1673
        %v1675 = vsub.f32 %v1667, %v1674
        %v1676 = vmul.f32 %v1675, %v1675
        %v1677 = vsel %vm834, %v1676, 0.0
        %1678 = vadd.xlane.f32.xlu0 %v1677
        %v1679 = vpop.xlane.xlu0 %1678
        %v1680 = vmul.f32 %v1679, %v1673
        %v1681 = vadd.f32 %v1680, 1e-05
        %v1682 = vrsqrt.pop %v1681
        %v1683 = vmul.f32 %v1675, %v1682
        %v1685 = vlaneseq
        %v1686 = vshrl.u32 %v1685, 7
        %v1687 = vsub.s32 0, %v1686
        %v1688 = vrot.slane %v1668, %v1687
        %v1690 = vmul.f32 %v1683, %v1688
        %v1692 = vlaneseq
        %v1693 = vshrl.u32 %v1692, 7
        %v1694 = vsub.s32 0, %v1693
        %v1695 = vrot.slane %v1669, %v1694
        %v1697 = vadd.f32 %v1690, %v1695
        %v1698 = vld [vmem:[%s10] sm:$0xff]
        %v1699 = vld [vmem:[%s10 + $0x8] sm:$0xff]
        %v1700 = vld [vmem:[%s10 + $0x10] sm:$0xff]
        %v1701 = vld [vmem:[%s10 + $0x18] sm:$0xff]
        %v1702 = vld [vmem:[%s11] sm:$0x1]
        %v1704 = vlaneseq
        %v1705 = vshrl.u32 %v1704, 7
        %v1706 = vsub.s32 0, %v1705
        %v1707 = vrot.slane %v1702, %v1706
        %v1710 = vsel %vm834, %v1697, 0
        %1712 = vmatprep.subr.mxu0 0.0
        %1713 = vmatpush1.msra.mxu0 %v1698
        %1714 = vmatprep.subr.mxu0 0.0
        %1715 = vmatpush1.msra.mxu0 %v1699
        %1716 = vmatprep.subr.mxu0 0.0
        %1717 = vmatpush1.msra.mxu0 %v1700
        %1718 = vmatprep.subr.mxu0 0.0
        %1719 = vmatpush1.msra.mxu0 %v1701
        %1720 = vmatprep.subr.mxu0 0.0
        %1721 = vmatpush1.msra.mxu0 0.0
        %1722 = vmatprep.subr.mxu0 0.0
        %1723 = vmatpush1.msra.mxu0 0.0
        %1724 = vmatprep.subr.mxu0 0.0
        %1725 = vmatpush1.msra.mxu0 0.0
        %1726 = vmatprep.subr.mxu0 0.0
        %1727 = vmatpush1.msra.mxu0 0.0
        %1728 = vmatprep.subr.mxu0 0.0
        %1729 = vmatpush1.msra.mxu0 0.0
        %1730 = vmatprep.subr.mxu0 0.0
        %1731 = vmatpush1.msra.mxu0 0.0
        %1732 = vmatprep.subr.mxu0 0.0
        %1733 = vmatpush1.msra.mxu0 0.0
        %1734 = vmatprep.subr.mxu0 0.0
        %1735 = vmatpush1.msra.mxu0 0.0
        %1736 = vmatprep.subr.mxu0 0.0
        %1737 = vmatpush1.msra.mxu0 0.0
        %1738 = vmatprep.subr.mxu0 0.0
        %1739 = vmatpush1.msra.mxu0 0.0
        %1740 = vmatprep.subr.mxu0 0.0
        %1741 = vmatpush1.msra.mxu0 0.0
        %1742 = vmatprep.subr.mxu0 0.0
        %1743 = vmatpush1.msra.mxu0 0.0
        %1744 = vmatprep.subr.mxu0 0.0
        %1745 = vmatpush1.msra.mxu0 0.0
        %1746 = vmatprep.subr.mxu0 0.0
        %1747 = vmatpush1.msra.mxu0 0.0
        %1748 = vmatprep.subr.mxu0 0.0
        %1749 = vmatpush1.msra.mxu0 0.0
        %1750 = vmatprep.subr.mxu0 0.0
        %1751 = vmatpush1.msra.mxu0 0.0
        %1752 = vmatprep.subr.mxu0 0.0
        %1753 = vmatpush1.msra.mxu0 0.0
        %1754 = vmatprep.subr.mxu0 0.0
        %1755 = vmatpush1.msra.mxu0 0.0
        %1756 = vmatprep.subr.mxu0 0.0
        %1757 = vmatpush1.msra.mxu0 0.0
        %1758 = vmatprep.subr.mxu0 0.0
        %1759 = vmatpush1.msra.mxu0 0.0
        %1760 = vmatprep.subr.mxu0 0.0
        %1761 = vmatpush1.msra.mxu0 0.0
        %1762 = vmatprep.subr.mxu0 0.0
        %1763 = vmatpush1.msra.mxu0 0.0
        %1764 = vmatprep.subr.mxu0 0.0
        %1765 = vmatpush1.msra.mxu0 0.0
        %1766 = vmatprep.subr.mxu0 0.0
        %1767 = vmatpush1.msra.mxu0 0.0
        %1768 = vmatprep.subr.mxu0 0.0
        %1769 = vmatpush1.msra.mxu0 0.0
        %1770 = vmatprep.subr.mxu0 0.0
        %1771 = vmatpush1.msra.mxu0 0.0
        %1772 = vmatprep.subr.mxu0 0.0
        %1773 = vmatpush1.msra.mxu0 0.0
        %1774 = vmatprep.subr.mxu0 0.0
        %1775 = vmatpush1.msra.mxu0 0.0
        %1776 = vmatprep.mubr.f32.mxu0 0.0
        %1777 = vmatmul.mubr.f32.gmra.mrb[0].mxu0 %v1710
        %v1778 = vpop.f32.mrb[0].mxu0
        %v1779 = vadd.f32 %v1707, %v1778
        %v1780 = vpop.f32.mrb[0].mxu0
        %1781 = vdwg.mxu0
        %v1782 = vmax.f32 %v1779, 0.0
        %v1783 = vld [vmem:[%s12] sm:$0xff]
        %v1784 = vld [vmem:[%s12 + $0x8] sm:$0xff]
        %v1785 = vld [vmem:[%s12 + $0x10] sm:$0xff]
        %v1786 = vld [vmem:[%s12 + $0x18] sm:$0xff]
        %v1787 = vld [vmem:[%s12 + $0x20] sm:$0xff]
        %v1788 = vld [vmem:[%s12 + $0x28] sm:$0xff]
        %v1789 = vld [vmem:[%s12 + $0x30] sm:$0xff]
        %v1790 = vld [vmem:[%s12 + $0x38] sm:$0xff]
        %v1791 = vld [vmem:[%s12 + $0x40] sm:$0xff]
        %v1792 = vld [vmem:[%s12 + $0x48] sm:$0xff]
        %v1793 = vld [vmem:[%s12 + $0x50] sm:$0xff]
        %v1794 = vld [vmem:[%s12 + $0x58] sm:$0xff]
        %v1795 = vld [vmem:[%s12 + $0x60] sm:$0xff]
        %v1796 = vld [vmem:[%s12 + $0x68] sm:$0xff]
        %v1797 = vld [vmem:[%s12 + $0x70] sm:$0xff]
        %v1798 = vld [vmem:[%s12 + $0x78] sm:$0xff]
        %v1799 = vld [vmem:[%s13] sm:$0x1]
        %v1801 = vlaneseq
        %v1802 = vshrl.u32 %v1801, 7
        %v1803 = vsub.s32 0, %v1802
        %v1804 = vrot.slane %v1799, %v1803
        %1806 = vmatprep.subr.mxu0 0.0
        %1807 = vmatpush1.msra.mxu0 %v1783
        %1808 = vmatprep.subr.mxu0 0.0
        %1809 = vmatpush1.msra.mxu0 %v1784
        %1810 = vmatprep.subr.mxu0 0.0
        %1811 = vmatpush1.msra.mxu0 %v1785
        %1812 = vmatprep.subr.mxu0 0.0
        %1813 = vmatpush1.msra.mxu0 %v1786
        %1814 = vmatprep.subr.mxu0 0.0
        %1815 = vmatpush1.msra.mxu0 %v1787
        %1816 = vmatprep.subr.mxu0 0.0
        %1817 = vmatpush1.msra.mxu0 %v1788
        %1818 = vmatprep.subr.mxu0 0.0
        %1819 = vmatpush1.msra.mxu0 %v1789
        %1820 = vmatprep.subr.mxu0 0.0
        %1821 = vmatpush1.msra.mxu0 %v1790
        %1822 = vmatprep.subr.mxu0 0.0
        %1823 = vmatpush1.msra.mxu0 %v1791
        %1824 = vmatprep.subr.mxu0 0.0
        %1825 = vmatpush1.msra.mxu0 %v1792
        %1826 = vmatprep.subr.mxu0 0.0
        %1827 = vmatpush1.msra.mxu0 %v1793
        %1828 = vmatprep.subr.mxu0 0.0
        %1829 = vmatpush1.msra.mxu0 %v1794
        %1830 = vmatprep.subr.mxu0 0.0
        %1831 = vmatpush1.msra.mxu0 %v1795
        %1832 = vmatprep.subr.mxu0 0.0
        %1833 = vmatpush1.msra.mxu0 %v1796
        %1834 = vmatprep.subr.mxu0 0.0
        %1835 = vmatpush1.msra.mxu0 %v1797
        %1836 = vmatprep.subr.mxu0 0.0
        %1837 = vmatpush1.msra.mxu0 %v1798
        %1838 = vmatprep.subr.mxu0 0.0
        %1839 = vmatpush1.msra.mxu0 0.0
        %1840 = vmatprep.subr.mxu0 0.0
        %1841 = vmatpush1.msra.mxu0 0.0
        %1842 = vmatprep.subr.mxu0 0.0
        %1843 = vmatpush1.msra.mxu0 0.0
        %1844 = vmatprep.subr.mxu0 0.0
        %1845 = vmatpush1.msra.mxu0 0.0
        %1846 = vmatprep.subr.mxu0 0.0
        %1847 = vmatpush1.msra.mxu0 0.0
        %1848 = vmatprep.subr.mxu0 0.0
        %1849 = vmatpush1.msra.mxu0 0.0
        %1850 = vmatprep.subr.mxu0 0.0
        %1851 = vmatpush1.msra.mxu0 0.0
        %1852 = vmatprep.subr.mxu0 0.0
        %1853 = vmatpush1.msra.mxu0 0.0
        %1854 = vmatprep.subr.mxu0 0.0
        %1855 = vmatpush1.msra.mxu0 0.0
        %1856 = vmatprep.subr.mxu0 0.0
        %1857 = vmatpush1.msra.mxu0 0.0
        %1858 = vmatprep.subr.mxu0 0.0
        %1859 = vmatpush1.msra.mxu0 0.0
        %1860 = vmatprep.subr.mxu0 0.0
        %1861 = vmatpush1.msra.mxu0 0.0
        %1862 = vmatprep.subr.mxu0 0.0
        %1863 = vmatpush1.msra.mxu0 0.0
        %1864 = vmatprep.subr.mxu0 0.0
        %1865 = vmatpush1.msra.mxu0 0.0
        %1866 = vmatprep.subr.mxu0 0.0
        %1867 = vmatpush1.msra.mxu0 0.0
        %1868 = vmatprep.subr.mxu0 0.0
        %1869 = vmatpush1.msra.mxu0 0.0
        %1870 = vmatprep.mubr.f32.mxu0 0.0
        %1871 = vmatmul.mubr.f32.gmra.mrb[0].mxu0 %v1782
        %v1872 = vpop.f32.mrb[0].mxu0
        %v1873 = vadd.f32 %v1804, %v1872
        %v1874 = vpop.f32.mrb[0].mxu0
        %1875 = vdwg.mxu0
        %v1876 = vadd.f32 %v1697, %v1873
        %v1877 = vld [vmem:[%s14] sm:$0x1]
        %v1878 = vld [vmem:[%s15] sm:$0x1]
        %v1879 = vsel %vm834, %v1876, 0.0
        %1880 = vadd.xlane.f32.xlu0 %v1879
        %v1881 = vpop.xlane.xlu0 %1880
        %v1882 = vmul.f32 %v1881, %v1673
        %v1883 = vsub.f32 %v1876, %v1882
        %v1884 = vmul.f32 %v1883, %v1883
        %v1885 = vsel %vm834, %v1884, 0.0
        %1886 = vadd.xlane.f32.xlu0 %v1885
        %v1887 = vpop.xlane.xlu0 %1886
        %v1888 = vmul.f32 %v1887, %v1673
        %v1889 = vadd.f32 %v1888, 1e-05
        %v1890 = vrsqrt.pop %v1889
        %v1891 = vmul.f32 %v1883, %v1890
        %v1893 = vlaneseq
        %v1894 = vshrl.u32 %v1893, 7
        %v1895 = vsub.s32 0, %v1894
        %v1896 = vrot.slane %v1877, %v1895
        %v1898 = vmul.f32 %v1891, %v1896
        %v1900 = vlaneseq
        %v1901 = vshrl.u32 %v1900, 7
        %v1902 = vsub.s32 0, %v1901
        %v1903 = vrot.slane %v1878, %v1902
        %v1905 = vadd.f32 %v1898, %v1903
        %s1906 = scalar_lea.vmem %s4, 32
        %v1907 = vld [vmem:[%s1906] sm:$0xff]
        %v1908 = vld [vmem:[%s1906 + $0x8] sm:$0xff]
        %v1909 = vld [vmem:[%s1906 + $0x10] sm:$0xff]
        %v1910 = vld [vmem:[%s1906 + $0x18] sm:$0xff]
        %s1911 = scalar_lea.vmem %s5, 1
        %v1912 = vld [vmem:[%s1911] sm:$0x1]
        %s1913 = scalar_lea.vmem %s6, 32
        %v1914 = vld [vmem:[%s1913] sm:$0xff]
        %v1915 = vld [vmem:[%s1913 + $0x8] sm:$0xff]
        %v1916 = vld [vmem:[%s1913 + $0x10] sm:$0xff]
        %v1917 = vld [vmem:[%s1913 + $0x18] sm:$0xff]
        %s1918 = scalar_lea.vmem %s7, 1
        %v1919 = vld [vmem:[%s1918] sm:$0x1]
        %v1921 = vlaneseq
        %v1922 = vshrl.u32 %v1921, 7
        %v1923 = vsub.s32 0, %v1922
        %v1924 = vrot.slane %v1912, %v1923
        %v1927 = vsel %vm834, %v1905, 0
        %1929 = vmatprep.subr.mxu0 0.0
        %1930 = vmatpush1.msra.mxu0 %v1907
        %1931 = vmatprep.subr.mxu0 0.0
        %1932 = vmatpush1.msra.mxu0 %v1908
        %1933 = vmatprep.subr.mxu0 0.0
        %1934 = vmatpush1.msra.mxu0 %v1909
        %1935 = vmatprep.subr.mxu0 0.0
        %1936 = vmatpush1.msra.mxu0 %v1910
        %1937 = vmatprep.subr.mxu0 0.0
        %1938 = vmatpush1.msra.mxu0 0.0
        %1939 = vmatprep.subr.mxu0 0.0
        %1940 = vmatpush1.msra.mxu0 0.0
        %1941 = vmatprep.subr.mxu0 0.0
        %1942 = vmatpush1.msra.mxu0 0.0
        %1943 = vmatprep.subr.mxu0 0.0
        %1944 = vmatpush1.msra.mxu0 0.0
        %1945 = vmatprep.subr.mxu0 0.0
        %1946 = vmatpush1.msra.mxu0 0.0
        %1947 = vmatprep.subr.mxu0 0.0
        %1948 = vmatpush1.msra.mxu0 0.0
        %1949 = vmatprep.subr.mxu0 0.0
        %1950 = vmatpush1.msra.mxu0 0.0
        %1951 = vmatprep.subr.mxu0 0.0
        %1952 = vmatpush1.msra.mxu0 0.0
        %1953 = vmatprep.subr.mxu0 0.0
        %1954 = vmatpush1.msra.mxu0 0.0
        %1955 = vmatprep.subr.mxu0 0.0
        %1956 = vmatpush1.msra.mxu0 0.0
        %1957 = vmatprep.subr.mxu0 0.0
        %1958 = vmatpush1.msra.mxu0 0.0
        %1959 = vmatprep.subr.mxu0 0.0
        %1960 = vmatpush1.msra.mxu0 0.0
        %1961 = vmatprep.subr.mxu0 0.0
        %1962 = vmatpush1.msra.mxu0 0.0
        %1963 = vmatprep.subr.mxu0 0.0
        %1964 = vmatpush1.msra.mxu0 0.0
        %1965 = vmatprep.subr.mxu0 0.0
        %1966 = vmatpush1.msra.mxu0 0.0
        %1967 = vmatprep.subr.mxu0 0.0
        %1968 = vmatpush1.msra.mxu0 0.0
        %1969 = vmatprep.subr.mxu0 0.0
        %1970 = vmatpush1.msra.mxu0 0.0
        %1971 = vmatprep.subr.mxu0 0.0
        %1972 = vmatpush1.msra.mxu0 0.0
        %1973 = vmatprep.subr.mxu0 0.0
        %1974 = vmatpush1.msra.mxu0 0.0
        %1975 = vmatprep.subr.mxu0 0.0
        %1976 = vmatpush1.msra.mxu0 0.0
        %1977 = vmatprep.subr.mxu0 0.0
        %1978 = vmatpush1.msra.mxu0 0.0
        %1979 = vmatprep.subr.mxu0 0.0
        %1980 = vmatpush1.msra.mxu0 0.0
        %1981 = vmatprep.subr.mxu0 0.0
        %1982 = vmatpush1.msra.mxu0 0.0
        %1983 = vmatprep.subr.mxu0 0.0
        %1984 = vmatpush1.msra.mxu0 0.0
        %1985 = vmatprep.subr.mxu0 0.0
        %1986 = vmatpush1.msra.mxu0 0.0
        %1987 = vmatprep.subr.mxu0 0.0
        %1988 = vmatpush1.msra.mxu0 0.0
        %1989 = vmatprep.subr.mxu0 0.0
        %1990 = vmatpush1.msra.mxu0 0.0
        %1991 = vmatprep.subr.mxu0 0.0
        %1992 = vmatpush1.msra.mxu0 0.0
        %1993 = vmatprep.mubr.f32.mxu0 0.0
        %1994 = vmatmul.mubr.f32.gmra.mrb[0].mxu0 %v1927
        %v1995 = vpop.f32.mrb[0].mxu0
        %v1996 = vadd.f32 %v1924, %v1995
        %v1997 = vpop.f32.mrb[0].mxu0
        %1998 = vdwg.mxu0
        %2000 = vrot.lane.b32.xlu0 %v1996, 96
        %v2001 = vpop.permute.xlu0 %2000
        %v2002 = vsel %vm911, %v1996, 0
        %v2004 = vsel %vm911, %v2001, 0
        %2006 = vmatprep.subr.mxu0 0.0
        %2007 = vmatpush1.xpose.msra.mxu0 %v2004
        %2008 = vmatprep.subr.mxu0 0.0
        %2009 = vmatpush1.xpose.msra.mxu0 0.0
        %2010 = vmatprep.subr.mxu0 0.0
        %2011 = vmatpush1.xpose.msra.mxu0 0.0
        %2012 = vmatprep.subr.mxu0 0.0
        %2013 = vmatpush1.xpose.msra.mxu0 0.0
        %2014 = vmatprep.subr.mxu0 0.0
        %2015 = vmatpush1.xpose.msra.mxu0 0.0
        %2016 = vmatprep.subr.mxu0 0.0
        %2017 = vmatpush1.xpose.msra.mxu0 0.0
        %2018 = vmatprep.subr.mxu0 0.0
        %2019 = vmatpush1.xpose.msra.mxu0 0.0
        %2020 = vmatprep.subr.mxu0 0.0
        %2021 = vmatpush1.xpose.msra.mxu0 0.0
        %2022 = vmatprep.subr.mxu0 0.0
        %2023 = vmatpush1.xpose.msra.mxu0 0.0
        %2024 = vmatprep.subr.mxu0 0.0
        %2025 = vmatpush1.xpose.msra.mxu0 0.0
        %2026 = vmatprep.subr.mxu0 0.0
        %2027 = vmatpush1.xpose.msra.mxu0 0.0
        %2028 = vmatprep.subr.mxu0 0.0
        %2029 = vmatpush1.xpose.msra.mxu0 0.0
        %2030 = vmatprep.subr.mxu0 0.0
        %2031 = vmatpush1.xpose.msra.mxu0 0.0
        %2032 = vmatprep.subr.mxu0 0.0
        %2033 = vmatpush1.xpose.msra.mxu0 0.0
        %2034 = vmatprep.subr.mxu0 0.0
        %2035 = vmatpush1.xpose.msra.mxu0 0.0
        %2036 = vmatprep.subr.mxu0 0.0
        %2037 = vmatpush1.xpose.msra.mxu0 0.0
        %2038 = vmatprep.subr.mxu0 0.0
        %2039 = vmatpush1.xpose.msra.mxu0 0.0
        %2040 = vmatprep.subr.mxu0 0.0
        %2041 = vmatpush1.xpose.msra.mxu0 0.0
        %2042 = vmatprep.subr.mxu0 0.0
        %2043 = vmatpush1.xpose.msra.mxu0 0.0
        %2044 = vmatprep.subr.mxu0 0.0
        %2045 = vmatpush1.xpose.msra.mxu0 0.0
        %2046 = vmatprep.subr.mxu0 0.0
        %2047 = vmatpush1.xpose.msra.mxu0 0.0
        %2048 = vmatprep.subr.mxu0 0.0
        %2049 = vmatpush1.xpose.msra.mxu0 0.0
        %2050 = vmatprep.subr.mxu0 0.0
        %2051 = vmatpush1.xpose.msra.mxu0 0.0
        %2052 = vmatprep.subr.mxu0 0.0
        %2053 = vmatpush1.xpose.msra.mxu0 0.0
        %2054 = vmatprep.subr.mxu0 0.0
        %2055 = vmatpush1.xpose.msra.mxu0 0.0
        %2056 = vmatprep.subr.mxu0 0.0
        %2057 = vmatpush1.xpose.msra.mxu0 0.0
        %2058 = vmatprep.subr.mxu0 0.0
        %2059 = vmatpush1.xpose.msra.mxu0 0.0
        %2060 = vmatprep.subr.mxu0 0.0
        %2061 = vmatpush1.xpose.msra.mxu0 0.0
        %2062 = vmatprep.subr.mxu0 0.0
        %2063 = vmatpush1.xpose.msra.mxu0 0.0
        %2064 = vmatprep.subr.mxu0 0.0
        %2065 = vmatpush1.xpose.msra.mxu0 0.0
        %2066 = vmatprep.subr.mxu0 0.0
        %2067 = vmatpush1.xpose.msra.mxu0 0.0
        %2068 = vmatprep.subr.mxu0 0.0
        %2069 = vmatpush1.xpose.msra.mxu0 0.0
        %2070 = vmatprep.mubr.f32.mxu0 0.0
        %2071 = vmatmul.mubr.f32.gmra.mrb[0].mxu0 %v2002
        %v2072 = vpop.f32.mrb[0].mxu0
        %v2073 = vadd.f32 0.0, %v2072
        %v2074 = vpop.f32.mrb[0].mxu0
        %2075 = vdwg.mxu0
        %v2076 = vmul.f32 %v2073, 0.35355338
        %v2077 = vsel %vm911, %v2076, -inf
        %2078 = vmax.xlane.f32.xlu0 %v2077
        %v2079 = vpop.xlane.xlu0 %2078
        %v2080 = vsub.f32 %v2076, %v2079
        %v2081 = vmul.f32 %v2080, 1.442695
        %v2082 = vpow.pop %v2081
        %v2083 = vsel %vm911, %v2082, 0.0
        %2084 = vadd.xlane.f32.xlu0 %v2083
        %v2085 = vpop.xlane.xlu0 %2084
        %v2086 = vrcp.pop %v2085
        %v2087 = vmul.f32 %v2082, %v2086
        %2088 = vrot.lane.b32.xlu0 %v1996, 64
        %v2089 = vpop.permute.xlu0 %2088
        %v2092 = vsel %vm911, %v2087, 0
        %2094 = vmatprep.subr.mxu0 0.0
        %2095 = vmatpush1.msra.mxu0 %v2089
        %2096 = vmatprep.subr.mxu0 0.0
        %2097 = vmatpush1.msra.mxu0 0.0
        %2098 = vmatprep.subr.mxu0 0.0
        %2099 = vmatpush1.msra.mxu0 0.0
        %2100 = vmatprep.subr.mxu0 0.0
        %2101 = vmatpush1.msra.mxu0 0.0
        %2102 = vmatprep.subr.mxu0 0.0
        %2103 = vmatpush1.msra.mxu0 0.0
        %2104 = vmatprep.subr.mxu0 0.0
        %2105 = vmatpush1.msra.mxu0 0.0
        %2106 = vmatprep.subr.mxu0 0.0
        %2107 = vmatpush1.msra.mxu0 0.0
        %2108 = vmatprep.subr.mxu0 0.0
        %2109 = vmatpush1.msra.mxu0 0.0
        %2110 = vmatprep.subr.mxu0 0.0
        %2111 = vmatpush1.msra.mxu0 0.0
        %2112 = vmatprep.subr.mxu0 0.0
        %2113 = vmatpush1.msra.mxu0 0.0
        %2114 = vmatprep.subr.mxu0 0.0
        %2115 = vmatpush1.msra.mxu0 0.0
        %2116 = vmatprep.subr.mxu0 0.0
        %2117 = vmatpush1.msra.mxu0 0.0
        %2118 = vmatprep.subr.mxu0 0.0
        %2119 = vmatpush1.msra.mxu0 0.0
        %2120 = vmatprep.subr.mxu0 0.0
        %2121 = vmatpush1.msra.mxu0 0.0
        %2122 = vmatprep.subr.mxu0 0.0
        %2123 = vmatpush1.msra.mxu0 0.0
        %2124 = vmatprep.subr.mxu0 0.0
        %2125 = vmatpush1.msra.mxu0 0.0
        %2126 = vmatprep.subr.mxu0 0.0
        %2127 = vmatpush1.msra.mxu0 0.0
        %2128 = vmatprep.subr.mxu0 0.0
        %2129 = vmatpush1.msra.mxu0 0.0
        %2130 = vmatprep.subr.mxu0 0.0
        %2131 = vmatpush1.msra.mxu0 0.0
        %2132 = vmatprep.subr.mxu0 0.0
        %2133 = vmatpush1.msra.mxu0 0.0
        %2134 = vmatprep.subr.mxu0 0.0
        %2135 = vmatpush1.msra.mxu0 0.0
        %2136 = vmatprep.subr.mxu0 0.0
        %2137 = vmatpush1.msra.mxu0 0.0
        %2138 = vmatprep.subr.mxu0 0.0
        %2139 = vmatpush1.msra.mxu0 0.0
        %2140 = vmatprep.subr.mxu0 0.0
        %2141 = vmatpush1.msra.mxu0 0.0
        %2142 = vmatprep.subr.mxu0 0.0
        %2143 = vmatpush1.msra.mxu0 0.0
        %2144 = vmatprep.subr.mxu0 0.0
        %2145 = vmatpush1.msra.mxu0 0.0
        %2146 = vmatprep.subr.mxu0 0.0
        %2147 = vmatpush1.msra.mxu0 0.0
        %2148 = vmatprep.subr.mxu0 0.0
        %2149 = vmatpush1.msra.mxu0 0.0
        %2150 = vmatprep.subr.mxu0 0.0
        %2151 = vmatpush1.msra.mxu0 0.0
        %2152 = vmatprep.subr.mxu0 0.0
        %2153 = vmatpush1.msra.mxu0 0.0
        %2154 = vmatprep.subr.mxu0 0.0
        %2155 = vmatpush1.msra.mxu0 0.0
        %2156 = vmatprep.subr.mxu0 0.0
        %2157 = vmatpush1.msra.mxu0 0.0
        %2158 = vmatprep.mubr.f32.mxu0 0.0
        %2159 = vmatmul.mubr.f32.gmra.mrb[0].mxu0 %v2092
        %v2160 = vpop.f32.mrb[0].mxu0
        %v2161 = vadd.f32 0.0, %v2160
        %v2162 = vpop.f32.mrb[0].mxu0
        %2163 = vdwg.mxu0
        %2164 = vrot.lane.b32.xlu0 %v1996, 120
        %v2165 = vpop.permute.xlu0 %2164
        %2166 = vrot.lane.b32.xlu0 %v1996, 88
        %v2167 = vpop.permute.xlu0 %2166
        %v2168 = vsel %vm911, %v2165, 0
        %v2170 = vsel %vm911, %v2167, 0
        %2172 = vmatprep.subr.mxu0 0.0
        %2173 = vmatpush1.xpose.msra.mxu0 %v2170
        %2174 = vmatprep.subr.mxu0 0.0
        %2175 = vmatpush1.xpose.msra.mxu0 0.0
        %2176 = vmatprep.subr.mxu0 0.0
        %2177 = vmatpush1.xpose.msra.mxu0 0.0
        %2178 = vmatprep.subr.mxu0 0.0
        %2179 = vmatpush1.xpose.msra.mxu0 0.0
        %2180 = vmatprep.subr.mxu0 0.0
        %2181 = vmatpush1.xpose.msra.mxu0 0.0
        %2182 = vmatprep.subr.mxu0 0.0
        %2183 = vmatpush1.xpose.msra.mxu0 0.0
        %2184 = vmatprep.subr.mxu0 0.0
        %2185 = vmatpush1.xpose.msra.mxu0 0.0
        %2186 = vmatprep.subr.mxu0 0.0
        %2187 = vmatpush1.xpose.msra.mxu0 0.0
        %2188 = vmatprep.subr.mxu0 0.0
        %2189 = vmatpush1.xpose.msra.mxu0 0.0
        %2190 = vmatprep.subr.mxu0 0.0
        %2191 = vmatpush1.xpose.msra.mxu0 0.0
        %2192 = vmatprep.subr.mxu0 0.0
        %2193 = vmatpush1.xpose.msra.mxu0 0.0
        %2194 = vmatprep.subr.mxu0 0.0
        %2195 = vmatpush1.xpose.msra.mxu0 0.0
        %2196 = vmatprep.subr.mxu0 0.0
        %2197 = vmatpush1.xpose.msra.mxu0 0.0
        %2198 = vmatprep.subr.mxu0 0.0
        %2199 = vmatpush1.xpose.msra.mxu0 0.0
        %2200 = vmatprep.subr.mxu0 0.0
        %2201 = vmatpush1.xpose.msra.mxu0 0.0
        %2202 = vmatprep.subr.mxu0 0.0
        %2203 = vmatpush1.xpose.msra.mxu0 0.0
        %2204 = vmatprep.subr.mxu0 0.0
        %2205 = vmatpush1.xpose.msra.mxu0 0.0
        %2206 = vmatprep.subr.mxu0 0.0
        %2207 = vmatpush1.xpose.msra.mxu0 0.0
        %2208 = vmatprep.subr.mxu0 0.0
        %2209 = vmatpush1.xpose.msra.mxu0 0.0
        %2210 = vmatprep.subr.mxu0 0.0
        %2211 = vmatpush1.xpose.msra.mxu0 0.0
        %2212 = vmatprep.subr.mxu0 0.0
        %2213 = vmatpush1.xpose.msra.mxu0 0.0
        %2214 = vmatprep.subr.mxu0 0.0
        %2215 = vmatpush1.xpose.msra.mxu0 0.0
        %2216 = vmatprep.subr.mxu0 0.0
        %2217 = vmatpush1.xpose.msra.mxu0 0.0
        %2218 = vmatprep.subr.mxu0 0.0
        %2219 = vmatpush1.xpose.msra.mxu0 0.0
        %2220 = vmatprep.subr.mxu0 0.0
        %2221 = vmatpush1.xpose.msra.mxu0 0.0
        %2222 = vmatprep.subr.mxu0 0.0
        %2223 = vmatpush1.xpose.msra.mxu0 0.0
        %2224 = vmatprep.subr.mxu0 0.0
        %2225 = vmatpush1.xpose.msra.mxu0 0.0
        %2226 = vmatprep.subr.mxu0 0.0
        %2227 = vmatpush1.xpose.msra.mxu0 0.0
        %2228 = vmatprep.subr.mxu0 0.0
        %2229 = vmatpush1.xpose.msra.mxu0 0.0
        %2230 = vmatprep.subr.mxu0 0.0
        %2231 = vmatpush1.xpose.msra.mxu0 0.0
        %2232 = vmatprep.subr.mxu0 0.0
        %2233 = vmatpush1.xpose.msra.mxu0 0.0
        %2234 = vmatprep.subr.mxu0 0.0
        %2235 = vmatpush1.xpose.msra.mxu0 0.0
        %2236 = vmatprep.mubr.f32.mxu0 0.0
        %2237 = vmatmul.mubr.f32.gmra.mrb[0].mxu0 %v2168
        %v2238 = vpop.f32.mrb[0].mxu0
        %v2239 = vadd.f32 0.0, %v2238
        %v2240 = vpop.f32.mrb[0].mxu0
        %2241 = vdwg.mxu0
        %v2242 = vmul.f32 %v2239, 0.35355338
        %v2243 = vsel %vm911, %v2242, -inf
        %2244 = vmax.xlane.f32.xlu0 %v2243
        %v2245 = vpop.xlane.xlu0 %2244
        %v2246 = vsub.f32 %v2242, %v2245
        %v2247 = vmul.f32 %v2246, 1.442695
        %v2248 = vpow.pop %v2247
        %v2249 = vsel %vm911, %v2248, 0.0
        %2250 = vadd.xlane.f32.xlu0 %v2249
        %v2251 = vpop.xlane.xlu0 %2250
        %v2252 = vrcp.pop %v2251
        %v2253 = vmul.f32 %v2248, %v2252
        %2254 = vrot.lane.b32.xlu0 %v1996, 56
        %v2255 = vpop.permute.xlu0 %2254
        %v2258 = vsel %vm911, %v2253, 0
        %2260 = vmatprep.subr.mxu0 0.0
        %2261 = vmatpush1.msra.mxu0 %v2255
        %2262 = vmatprep.subr.mxu0 0.0
        %2263 = vmatpush1.msra.mxu0 0.0
        %2264 = vmatprep.subr.mxu0 0.0
        %2265 = vmatpush1.msra.mxu0 0.0
        %2266 = vmatprep.subr.mxu0 0.0
        %2267 = vmatpush1.msra.mxu0 0.0
        %2268 = vmatprep.subr.mxu0 0.0
        %2269 = vmatpush1.msra.mxu0 0.0
        %2270 = vmatprep.subr.mxu0 0.0
        %2271 = vmatpush1.msra.mxu0 0.0
        %2272 = vmatprep.subr.mxu0 0.0
        %2273 = vmatpush1.msra.mxu0 0.0
        %2274 = vmatprep.subr.mxu0 0.0
        %2275 = vmatpush1.msra.mxu0 0.0
        %2276 = vmatprep.subr.mxu0 0.0
        %2277 = vmatpush1.msra.mxu0 0.0
        %2278 = vmatprep.subr.mxu0 0.0
        %2279 = vmatpush1.msra.mxu0 0.0
        %2280 = vmatprep.subr.mxu0 0.0
        %2281 = vmatpush1.msra.mxu0 0.0
        %2282 = vmatprep.subr.mxu0 0.0
        %2283 = vmatpush1.msra.mxu0 0.0
        %2284 = vmatprep.subr.mxu0 0.0
        %2285 = vmatpush1.msra.mxu0 0.0
        %2286 = vmatprep.subr.mxu0 0.0
        %2287 = vmatpush1.msra.mxu0 0.0
        %2288 = vmatprep.subr.mxu0 0.0
        %2289 = vmatpush1.msra.mxu0 0.0
        %2290 = vmatprep.subr.mxu0 0.0
        %2291 = vmatpush1.msra.mxu0 0.0
        %2292 = vmatprep.subr.mxu0 0.0
        %2293 = vmatpush1.msra.mxu0 0.0
        %2294 = vmatprep.subr.mxu0 0.0
        %2295 = vmatpush1.msra.mxu0 0.0
        %2296 = vmatprep.subr.mxu0 0.0
        %2297 = vmatpush1.msra.mxu0 0.0
        %2298 = vmatprep.subr.mxu0 0.0
        %2299 = vmatpush1.msra.mxu0 0.0
        %2300 = vmatprep.subr.mxu0 0.0
        %2301 = vmatpush1.msra.mxu0 0.0
        %2302 = vmatprep.subr.mxu0 0.0
        %2303 = vmatpush1.msra.mxu0 0.0
        %2304 = vmatprep.subr.mxu0 0.0
        %2305 = vmatpush1.msra.mxu0 0.0
        %2306 = vmatprep.subr.mxu0 0.0
        %2307 = vmatpush1.msra.mxu0 0.0
        %2308 = vmatprep.subr.mxu0 0.0
        %2309 = vmatpush1.msra.mxu0 0.0
        %2310 = vmatprep.subr.mxu0 0.0
        %2311 = vmatpush1.msra.mxu0 0.0
        %2312 = vmatprep.subr.mxu0 0.0
        %2313 = vmatpush1.msra.mxu0 0.0
        %2314 = vmatprep.subr.mxu0 0.0
        %2315 = vmatpush1.msra.mxu0 0.0
        %2316 = vmatprep.subr.mxu0 0.0
        %2317 = vmatpush1.msra.mxu0 0.0
        %2318 = vmatprep.subr.mxu0 0.0
        %2319 = vmatpush1.msra.mxu0 0.0
        %2320 = vmatprep.subr.mxu0 0.0
        %2321 = vmatpush1.msra.mxu0 0.0
        %2322 = vmatprep.subr.mxu0 0.0
        %2323 = vmatpush1.msra.mxu0 0.0
        %2324 = vmatprep.mubr.f32.mxu0 0.0
        %2325 = vmatmul.mubr.f32.gmra.mrb[0].mxu0 %v2258
        %v2326 = vpop.f32.mrb[0].mxu0
        %v2327 = vadd.f32 0.0, %v2326
        %v2328 = vpop.f32.mrb[0].mxu0
        %2329 = vdwg.mxu0
        %2330 = vrot.lane.b32.xlu0 %v1996, 112
        %v2331 = vpop.permute.xlu0 %2330
        %2332 = vrot.lane.b32.xlu0 %v1996, 80
        %v2333 = vpop.permute.xlu0 %2332
        %v2334 = vsel %vm911, %v2331, 0
        %v2336 = vsel %vm911, %v2333, 0
        %2338 = vmatprep.subr.mxu0 0.0
        %2339 = vmatpush1.xpose.msra.mxu0 %v2336
        %2340 = vmatprep.subr.mxu0 0.0
        %2341 = vmatpush1.xpose.msra.mxu0 0.0
        %2342 = vmatprep.subr.mxu0 0.0
        %2343 = vmatpush1.xpose.msra.mxu0 0.0
        %2344 = vmatprep.subr.mxu0 0.0
        %2345 = vmatpush1.xpose.msra.mxu0 0.0
        %2346 = vmatprep.subr.mxu0 0.0
        %2347 = vmatpush1.xpose.msra.mxu0 0.0
        %2348 = vmatprep.subr.mxu0 0.0
        %2349 = vmatpush1.xpose.msra.mxu0 0.0
        %2350 = vmatprep.subr.mxu0 0.0
        %2351 = vmatpush1.xpose.msra.mxu0 0.0
        %2352 = vmatprep.subr.mxu0 0.0
        %2353 = vmatpush1.xpose.msra.mxu0 0.0
        %2354 = vmatprep.subr.mxu0 0.0
        %2355 = vmatpush1.xpose.msra.mxu0 0.0
        %2356 = vmatprep.subr.mxu0 0.0
        %2357 = vmatpush1.xpose.msra.mxu0 0.0
        %2358 = vmatprep.subr.mxu0 0.0
        %2359 = vmatpush1.xpose.msra.mxu0 0.0
        %2360 = vmatprep.subr.mxu0 0.0
        %2361 = vmatpush1.xpose.msra.mxu0 0.0
        %2362 = vmatprep.subr.mxu0 0.0
        %2363 = vmatpush1.xpose.msra.mxu0 0.0
        %2364 = vmatprep.subr.mxu0 0.0
        %2365 = vmatpush1.xpose.msra.mxu0 0.0
        %2366 = vmatprep.subr.mxu0 0.0
        %2367 = vmatpush1.xpose.msra.mxu0 0.0
        %2368 = vmatprep.subr.mxu0 0.0
        %2369 = vmatpush1.xpose.msra.mxu0 0.0
        %2370 = vmatprep.subr.mxu0 0.0
        %2371 = vmatpush1.xpose.msra.mxu0 0.0
        %2372 = vmatprep.subr.mxu0 0.0
        %2373 = vmatpush1.xpose.msra.mxu0 0.0
        %2374 = vmatprep.subr.mxu0 0.0
        %2375 = vmatpush1.xpose.msra.mxu0 0.0
        %2376 = vmatprep.subr.mxu0 0.0
        %2377 = vmatpush1.xpose.msra.mxu0 0.0
        %2378 = vmatprep.subr.mxu0 0.0
        %2379 = vmatpush1.xpose.msra.mxu0 0.0
        %2380 = vmatprep.subr.mxu0 0.0
        %2381 = vmatpush1.xpose.msra.mxu0 0.0
        %2382 = vmatprep.subr.mxu0 0.0
        %2383 = vmatpush1.xpose.msra.mxu0 0.0
        %2384 = vmatprep.subr.mxu0 0.0
        %2385 = vmatpush1.xpose.msra.mxu0 0.0
        %2386 = vmatprep.subr.mxu0 0.0
        %2387 = vmatpush1.xpose.msra.mxu0 0.0
        %2388 = vmatprep.subr.mxu0 0.0
        %2389 = vmatpush1.xpose.msra.mxu0 0.0
        %2390 = vmatprep.subr.mxu0 0.0
        %2391 = vmatpush1.xpose.msra.mxu0 0.0
        %2392 = vmatprep.subr.mxu0 0.0
        %2393 = vmatpush1.xpose.msra.mxu0 0.0
        %2394 = vmatprep.subr.mxu0 0.0
        %2395 = vmatpush1.xpose.msra.mxu0 0.0
        %2396 = vmatprep.subr.mxu0 0.0
        %2397 = vmatpush1.xpose.msra.mxu0 0.0
        %2398 = vmatprep.subr.mxu0 0.0
        %2399 = vmatpush1.xpose.msra.mxu0 0.0
        %2400 = vmatprep.subr.mxu0 0.0
        %2401 = vmatpush1.xpose.msra.mxu0 0.0
        %2402 = vmatprep.mubr.f32.mxu0 0.0
        %2403 = vmatmul.mubr.f32.gmra.mrb[0].mxu0 %v2334
        %v2404 = vpop.f32.mrb[0].mxu0
        %v2405 = vadd.f32 0.0, %v2404
        %v2406 = vpop.f32.mrb[0].mxu0
        %2407 = vdwg.mxu0
        %v2408 = vmul.f32 %v2405, 0.35355338
        %v2409 = vsel %vm911, %v2408, -inf
        %2410 = vmax.xlane.f32.xlu0 %v2409
        %v2411 = vpop.xlane.xlu0 %2410
        %v2412 = vsub.f32 %v2408, %v2411
        %v2413 = vmul.f32 %v2412, 1.442695
        %v2414 = vpow.pop %v2413
        %v2415 = vsel %vm911, %v2414, 0.0
        %2416 = vadd.xlane.f32.xlu0 %v2415
        %v2417 = vpop.xlane.xlu0 %2416
        %v2418 = vrcp.pop %v2417
        %v2419 = vmul.f32 %v2414, %v2418
        %2420 = vrot.lane.b32.xlu0 %v1996, 48
        %v2421 = vpop.permute.xlu0 %2420
        %v2424 = vsel %vm911, %v2419, 0
        %2426 = vmatprep.subr.mxu0 0.0
        %2427 = vmatpush1.msra.mxu0 %v2421
        %2428 = vmatprep.subr.mxu0 0.0
        %2429 = vmatpush1.msra.mxu0 0.0
        %2430 = vmatprep.subr.mxu0 0.0
        %2431 = vmatpush1.msra.mxu0 0.0
        %2432 = vmatprep.subr.mxu0 0.0
        %2433 = vmatpush1.msra.mxu0 0.0
        %2434 = vmatprep.subr.mxu0 0.0
        %2435 = vmatpush1.msra.mxu0 0.0
        %2436 = vmatprep.subr.mxu0 0.0
        %2437 = vmatpush1.msra.mxu0 0.0
        %2438 = vmatprep.subr.mxu0 0.0
        %2439 = vmatpush1.msra.mxu0 0.0
        %2440 = vmatprep.subr.mxu0 0.0
        %2441 = vmatpush1.msra.mxu0 0.0
        %2442 = vmatprep.subr.mxu0 0.0
        %2443 = vmatpush1.msra.mxu0 0.0
        %2444 = vmatprep.subr.mxu0 0.0
        %2445 = vmatpush1.msra.mxu0 0.0
        %2446 = vmatprep.subr.mxu0 0.0
        %2447 = vmatpush1.msra.mxu0 0.0
        %2448 = vmatprep.subr.mxu0 0.0
        %2449 = vmatpush1.msra.mxu0 0.0
        %2450 = vmatprep.subr.mxu0 0.0
        %2451 = vmatpush1.msra.mxu0 0.0
        %2452 = vmatprep.subr.mxu0 0.0
        %2453 = vmatpush1.msra.mxu0 0.0
        %2454 = vmatprep.subr.mxu0 0.0
        %2455 = vmatpush1.msra.mxu0 0.0
        %2456 = vmatprep.subr.mxu0 0.0
        %2457 = vmatpush1.msra.mxu0 0.0
        %2458 = vmatprep.subr.mxu0 0.0
        %2459 = vmatpush1.msra.mxu0 0.0
        %2460 = vmatprep.subr.mxu0 0.0
        %2461 = vmatpush1.msra.mxu0 0.0
        %2462 = vmatprep.subr.mxu0 0.0
        %2463 = vmatpush1.msra.mxu0 0.0
        %2464 = vmatprep.subr.mxu0 0.0
        %2465 = vmatpush1.msra.mxu0 0.0
        %2466 = vmatprep.subr.mxu0 0.0
        %2467 = vmatpush1.msra.mxu0 0.0
        %2468 = vmatprep.subr.mxu0 0.0
        %2469 = vmatpush1.msra.mxu0 0.0
        %2470 = vmatprep.subr.mxu0 0.0
        %2471 = vmatpush1.msra.mxu0 0.0
        %2472 = vmatprep.subr.mxu0 0.0
        %2473 = vmatpush1.msra.mxu0 0.0
        %2474 = vmatprep.subr.mxu0 0.0
        %2475 = vmatpush1.msra.mxu0 0.0
        %2476 = vmatprep.subr.mxu0 0.0
        %2477 = vmatpush1.msra.mxu0 0.0
        %2478 = vmatprep.subr.mxu0 0.0
        %2479 = vmatpush1.msra.mxu0 0.0
        %2480 = vmatprep.subr.mxu0 0.0
        %2481 = vmatpush1.msra.mxu0 0.0
        %2482 = vmatprep.subr.mxu0 0.0
        %2483 = vmatpush1.msra.mxu0 0.0
        %2484 = vmatprep.subr.mxu0 0.0
        %2485 = vmatpush1.msra.mxu0 0.0
        %2486 = vmatprep.subr.mxu0 0.0
        %2487 = vmatpush1.msra.mxu0 0.0
        %2488 = vmatprep.subr.mxu0 0.0
        %2489 = vmatpush1.msra.mxu0 0.0
        %2490 = vmatprep.mubr.f32.mxu0 0.0
        %2491 = vmatmul.mubr.f32.gmra.mrb[0].mxu0 %v2424
        %v2492 = vpop.f32.mrb[0].mxu0
        %v2493 = vadd.f32 0.0, %v2492
        %v2494 = vpop.f32.mrb[0].mxu0
        %2495 = vdwg.mxu0
        %2496 = vrot.lane.b32.xlu0 %v1996, 104
        %v2497 = vpop.permute.xlu0 %2496
        %2498 = vrot.lane.b32.xlu0 %v1996, 72
        %v2499 = vpop.permute.xlu0 %2498
        %v2500 = vsel %vm911, %v2497, 0
        %v2502 = vsel %vm911, %v2499, 0
        %2504 = vmatprep.subr.mxu0 0.0
        %2505 = vmatpush1.xpose.msra.mxu0 %v2502
        %2506 = vmatprep.subr.mxu0 0.0
        %2507 = vmatpush1.xpose.msra.mxu0 0.0
        %2508 = vmatprep.subr.mxu0 0.0
        %2509 = vmatpush1.xpose.msra.mxu0 0.0
        %2510 = vmatprep.subr.mxu0 0.0
        %2511 = vmatpush1.xpose.msra.mxu0 0.0
        %2512 = vmatprep.subr.mxu0 0.0
        %2513 = vmatpush1.xpose.msra.mxu0 0.0
        %2514 = vmatprep.subr.mxu0 0.0
        %2515 = vmatpush1.xpose.msra.mxu0 0.0
        %2516 = vmatprep.subr.mxu0 0.0
        %2517 = vmatpush1.xpose.msra.mxu0 0.0
        %2518 = vmatprep.subr.mxu0 0.0
        %2519 = vmatpush1.xpose.msra.mxu0 0.0
        %2520 = vmatprep.subr.mxu0 0.0
        %2521 = vmatpush1.xpose.msra.mxu0 0.0
        %2522 = vmatprep.subr.mxu0 0.0
        %2523 = vmatpush1.xpose.msra.mxu0 0.0
        %2524 = vmatprep.subr.mxu0 0.0
        %2525 = vmatpush1.xpose.msra.mxu0 0.0
        %2526 = vmatprep.subr.mxu0 0.0
        %2527 = vmatpush1.xpose.msra.mxu0 0.0
        %2528 = vmatprep.subr.mxu0 0.0
        %2529 = vmatpush1.xpose.msra.mxu0 0.0
        %2530 = vmatprep.subr.mxu0 0.0
        %2531 = vmatpush1.xpose.msra.mxu0 0.0
        %2532 = vmatprep.subr.mxu0 0.0
        %2533 = vmatpush1.xpose.msra.mxu0 0.0
        %2534 = vmatprep.subr.mxu0 0.0
        %2535 = vmatpush1.xpose.msra.mxu0 0.0
        %2536 = vmatprep.subr.mxu0 0.0
        %2537 = vmatpush1.xpose.msra.mxu0 0.0
        %2538 = vmatprep.subr.mxu0 0.0
        %2539 = vmatpush1.xpose.msra.mxu0 0.0
        %2540 = vmatprep.subr.mxu0 0.0
        %2541 = vmatpush1.xpose.msra.mxu0 0.0
        %2542 = vmatprep.subr.mxu0 0.0
        %2543 = vmatpush1.xpose.msra.mxu0 0.0
        %2544 = vmatprep.subr.mxu0 0.0
        %2545 = vmatpush1.xpose.msra.mxu0 0.0
        %2546 = vmatprep.subr.mxu0 0.0
        %2547 = vmatpush1.xpose.msra.mxu0 0.0
        %2548 = vmatprep.subr.mxu0 0.0
        %2549 = vmatpush1.xpose.msra.mxu0 0.0
        %2550 = vmatprep.subr.mxu0 0.0
        %2551 = vmatpush1.xpose.msra.mxu0 0.0
        %2552 = vmatprep.subr.mxu0 0.0
        %2553 = vmatpush1.xpose.msra.mxu0 0.0
        %2554 = vmatprep.subr.mxu0 0.0
        %2555 = vmatpush1.xpose.msra.mxu0 0.0
        %2556 = vmatprep.subr.mxu0 0.0
        %2557 = vmatpush1.xpose.msra.mxu0 0.0
        %2558 = vmatprep.subr.mxu0 0.0
        %2559 = vmatpush1.xpose.msra.mxu0 0.0
        %2560 = vmatprep.subr.mxu0 0.0
        %2561 = vmatpush1.xpose.msra.mxu0 0.0
        %2562 = vmatprep.subr.mxu0 0.0
        %2563 = vmatpush1.xpose.msra.mxu0 0.0
        %2564 = vmatprep.subr.mxu0 0.0
        %2565 = vmatpush1.xpose.msra.mxu0 0.0
        %2566 = vmatprep.subr.mxu0 0.0
        %2567 = vmatpush1.xpose.msra.mxu0 0.0
        %2568 = vmatprep.mubr.f32.mxu0 0.0
        %2569 = vmatmul.mubr.f32.gmra.mrb[0].mxu0 %v2500
        %v2570 = vpop.f32.mrb[0].mxu0
        %v2571 = vadd.f32 0.0, %v2570
        %v2572 = vpop.f32.mrb[0].mxu0
        %2573 = vdwg.mxu0
        %v2574 = vmul.f32 %v2571, 0.35355338
        %v2575 = vsel %vm911, %v2574, -inf
        %2576 = vmax.xlane.f32.xlu0 %v2575
        %v2577 = vpop.xlane.xlu0 %2576
        %v2578 = vsub.f32 %v2574, %v2577
        %v2579 = vmul.f32 %v2578, 1.442695
        %v2580 = vpow.pop %v2579
        %v2581 = vsel %vm911, %v2580, 0.0
        %2582 = vadd.xlane.f32.xlu0 %v2581
        %v2583 = vpop.xlane.xlu0 %2582
        %v2584 = vrcp.pop %v2583
        %v2585 = vmul.f32 %v2580, %v2584
        %2586 = vrot.lane.b32.xlu0 %v1996, 40
        %v2587 = vpop.permute.xlu0 %2586
        %v2590 = vsel %vm911, %v2585, 0
        %2592 = vmatprep.subr.mxu0 0.0
        %2593 = vmatpush1.msra.mxu0 %v2587
        %2594 = vmatprep.subr.mxu0 0.0
        %2595 = vmatpush1.msra.mxu0 0.0
        %2596 = vmatprep.subr.mxu0 0.0
        %2597 = vmatpush1.msra.mxu0 0.0
        %2598 = vmatprep.subr.mxu0 0.0
        %2599 = vmatpush1.msra.mxu0 0.0
        %2600 = vmatprep.subr.mxu0 0.0
        %2601 = vmatpush1.msra.mxu0 0.0
        %2602 = vmatprep.subr.mxu0 0.0
        %2603 = vmatpush1.msra.mxu0 0.0
        %2604 = vmatprep.subr.mxu0 0.0
        %2605 = vmatpush1.msra.mxu0 0.0
        %2606 = vmatprep.subr.mxu0 0.0
        %2607 = vmatpush1.msra.mxu0 0.0
        %2608 = vmatprep.subr.mxu0 0.0
        %2609 = vmatpush1.msra.mxu0 0.0
        %2610 = vmatprep.subr.mxu0 0.0
        %2611 = vmatpush1.msra.mxu0 0.0
        %2612 = vmatprep.subr.mxu0 0.0
        %2613 = vmatpush1.msra.mxu0 0.0
        %2614 = vmatprep.subr.mxu0 0.0
        %2615 = vmatpush1.msra.mxu0 0.0
        %2616 = vmatprep.subr.mxu0 0.0
        %2617 = vmatpush1.msra.mxu0 0.0
        %2618 = vmatprep.subr.mxu0 0.0
        %2619 = vmatpush1.msra.mxu0 0.0
        %2620 = vmatprep.subr.mxu0 0.0
        %2621 = vmatpush1.msra.mxu0 0.0
        %2622 = vmatprep.subr.mxu0 0.0
        %2623 = vmatpush1.msra.mxu0 0.0
        %2624 = vmatprep.subr.mxu0 0.0
        %2625 = vmatpush1.msra.mxu0 0.0
        %2626 = vmatprep.subr.mxu0 0.0
        %2627 = vmatpush1.msra.mxu0 0.0
        %2628 = vmatprep.subr.mxu0 0.0
        %2629 = vmatpush1.msra.mxu0 0.0
        %2630 = vmatprep.subr.mxu0 0.0
        %2631 = vmatpush1.msra.mxu0 0.0
        %2632 = vmatprep.subr.mxu0 0.0
        %2633 = vmatpush1.msra.mxu0 0.0
        %2634 = vmatprep.subr.mxu0 0.0
        %2635 = vmatpush1.msra.mxu0 0.0
        %2636 = vmatprep.subr.mxu0 0.0
        %2637 = vmatpush1.msra.mxu0 0.0
        %2638 = vmatprep.subr.mxu0 0.0
        %2639 = vmatpush1.msra.mxu0 0.0
        %2640 = vmatprep.subr.mxu0 0.0
        %2641 = vmatpush1.msra.mxu0 0.0
        %2642 = vmatprep.subr.mxu0 0.0
        %2643 = vmatpush1.msra.mxu0 0.0
        %2644 = vmatprep.subr.mxu0 0.0
        %2645 = vmatpush1.msra.mxu0 0.0
        %2646 = vmatprep.subr.mxu0 0.0
        %2647 = vmatpush1.msra.mxu0 0.0
        %2648 = vmatprep.subr.mxu0 0.0
        %2649 = vmatpush1.msra.mxu0 0.0
        %2650 = vmatprep.subr.mxu0 0.0
        %2651 = vmatpush1.msra.mxu0 0.0
        %2652 = vmatprep.subr.mxu0 0.0
        %2653 = vmatpush1.msra.mxu0 0.0
        %2654 = vmatprep.subr.mxu0 0.0
        %2655 = vmatpush1.msra.mxu0 0.0
        %2656 = vmatprep.mubr.f32.mxu0 0.0
        %2657 = vmatmul.mubr.f32.gmra.mrb[0].mxu0 %v2590
        %v2658 = vpop.f32.mrb[0].mxu0
        %v2659 = vadd.f32 0.0, %v2658
        %v2660 = vpop.f32.mrb[0].mxu0
        %2661 = vdwg.mxu0
        %2663 = vrot.lane.b32.xlu0 %v2327, 8
        %v2664 = vpop.permute.xlu0 %2663
        %2667 = vrot.lane.b32.xlu0 %v2493, 16
        %v2668 = vpop.permute.xlu0 %2667
        %2671 = vrot.lane.b32.xlu0 %v2659, 24
        %v2672 = vpop.permute.xlu0 %2671
        %v2674 = vsel %vm911, %v2161, %v2664
        %v2675 = vsel %vm742, %v2674, %v2668
        %v2676 = vsel %vm1586, %v2675, %v2672
        %v2678 = vlaneseq
        %v2679 = vshrl.u32 %v2678, 7
        %v2680 = vsub.s32 0, %v2679
        %v2681 = vrot.slane %v1919, %v2680
        %v2684 = vsel %vm834, %v2676, 0
        %2686 = vmatprep.subr.mxu0 0.0
        %2687 = vmatpush1.msra.mxu0 %v1914
        %2688 = vmatprep.subr.mxu0 0.0
        %2689 = vmatpush1.msra.mxu0 %v1915
        %2690 = vmatprep.subr.mxu0 0.0
        %2691 = vmatpush1.msra.mxu0 %v1916
        %2692 = vmatprep.subr.mxu0 0.0
        %2693 = vmatpush1.msra.mxu0 %v1917
        %2694 = vmatprep.subr.mxu0 0.0
        %2695 = vmatpush1.msra.mxu0 0.0
        %2696 = vmatprep.subr.mxu0 0.0
        %2697 = vmatpush1.msra.mxu0 0.0
        %2698 = vmatprep.subr.mxu0 0.0
        %2699 = vmatpush1.msra.mxu0 0.0
        %2700 = vmatprep.subr.mxu0 0.0
        %2701 = vmatpush1.msra.mxu0 0.0
        %2702 = vmatprep.subr.mxu0 0.0
        %2703 = vmatpush1.msra.mxu0 0.0
        %2704 = vmatprep.subr.mxu0 0.0
        %2705 = vmatpush1.msra.mxu0 0.0
        %2706 = vmatprep.subr.mxu0 0.0
        %2707 = vmatpush1.msra.mxu0 0.0
        %2708 = vmatprep.subr.mxu0 0.0
        %2709 = vmatpush1.msra.mxu0 0.0
        %2710 = vmatprep.subr.mxu0 0.0
        %2711 = vmatpush1.msra.mxu0 0.0
        %2712 = vmatprep.subr.mxu0 0.0
        %2713 = vmatpush1.msra.mxu0 0.0
        %2714 = vmatprep.subr.mxu0 0.0
        %2715 = vmatpush1.msra.mxu0 0.0
        %2716 = vmatprep.subr.mxu0 0.0
        %2717 = vmatpush1.msra.mxu0 0.0
        %2718 = vmatprep.subr.mxu0 0.0
        %2719 = vmatpush1.msra.mxu0 0.0
        %2720 = vmatprep.subr.mxu0 0.0
        %2721 = vmatpush1.msra.mxu0 0.0
        %2722 = vmatprep.subr.mxu0 0.0
        %2723 = vmatpush1.msra.mxu0 0.0
        %2724 = vmatprep.subr.mxu0 0.0
        %2725 = vmatpush1.msra.mxu0 0.0
        %2726 = vmatprep.subr.mxu0 0.0
        %2727 = vmatpush1.msra.mxu0 0.0
        %2728 = vmatprep.subr.mxu0 0.0
        %2729 = vmatpush1.msra.mxu0 0.0
        %2730 = vmatprep.subr.mxu0 0.0
        %2731 = vmatpush1.msra.mxu0 0.0
        %2732 = vmatprep.subr.mxu0 0.0
        %2733 = vmatpush1.msra.mxu0 0.0
        %2734 = vmatprep.subr.mxu0 0.0
        %2735 = vmatpush1.msra.mxu0 0.0
        %2736 = vmatprep.subr.mxu0 0.0
        %2737 = vmatpush1.msra.mxu0 0.0
        %2738 = vmatprep.subr.mxu0 0.0
        %2739 = vmatpush1.msra.mxu0 0.0
        %2740 = vmatprep.subr.mxu0 0.0
        %2741 = vmatpush1.msra.mxu0 0.0
        %2742 = vmatprep.subr.mxu0 0.0
        %2743 = vmatpush1.msra.mxu0 0.0
        %2744 = vmatprep.subr.mxu0 0.0
        %2745 = vmatpush1.msra.mxu0 0.0
        %2746 = vmatprep.subr.mxu0 0.0
        %2747 = vmatpush1.msra.mxu0 0.0
        %2748 = vmatprep.subr.mxu0 0.0
        %2749 = vmatpush1.msra.mxu0 0.0
        %2750 = vmatprep.mubr.f32.mxu0 0.0
        %2751 = vmatmul.mubr.f32.gmra.mrb[0].mxu0 %v2684
        %v2752 = vpop.f32.mrb[0].mxu0
        %v2753 = vadd.f32 %v2681, %v2752
        %v2754 = vpop.f32.mrb[0].mxu0
        %2755 = vdwg.mxu0
        %v2756 = vadd.f32 %v1905, %v2753
        %s2757 = scalar_lea.vmem %s8, 1
        %v2758 = vld [vmem:[%s2757] sm:$0x1]
        %s2759 = scalar_lea.vmem %s9, 1
        %v2760 = vld [vmem:[%s2759] sm:$0x1]
        %v2761 = vsel %vm834, %v2756, 0.0
        %2762 = vadd.xlane.f32.xlu0 %v2761
        %v2763 = vpop.xlane.xlu0 %2762
        %v2764 = vmul.f32 %v2763, %v1673
        %v2765 = vsub.f32 %v2756, %v2764
        %v2766 = vmul.f32 %v2765, %v2765
        %v2767 = vsel %vm834, %v2766, 0.0
        %2768 = vadd.xlane.f32.xlu0 %v2767
        %v2769 = vpop.xlane.xlu0 %2768
        %v2770 = vmul.f32 %v2769, %v1673
        %v2771 = vadd.f32 %v2770, 1e-05
        %v2772 = vrsqrt.pop %v2771
        %v2773 = vmul.f32 %v2765, %v2772
        %v2775 = vlaneseq
        %v2776 = vshrl.u32 %v2775, 7
        %v2777 = vsub.s32 0, %v2776
        %v2778 = vrot.slane %v2758, %v2777
        %v2780 = vmul.f32 %v2773, %v2778
        %v2782 = vlaneseq
        %v2783 = vshrl.u32 %v2782, 7
        %v2784 = vsub.s32 0, %v2783
        %v2785 = vrot.slane %v2760, %v2784
        %v2787 = vadd.f32 %v2780, %v2785
        %s2788 = scalar_lea.vmem %s10, 32
        %v2789 = vld [vmem:[%s2788] sm:$0xff]
        %v2790 = vld [vmem:[%s2788 + $0x8] sm:$0xff]
        %v2791 = vld [vmem:[%s2788 + $0x10] sm:$0xff]
        %v2792 = vld [vmem:[%s2788 + $0x18] sm:$0xff]
        %s2793 = scalar_lea.vmem %s11, 1
        %v2794 = vld [vmem:[%s2793] sm:$0x1]
        %v2796 = vlaneseq
        %v2797 = vshrl.u32 %v2796, 7
        %v2798 = vsub.s32 0, %v2797
        %v2799 = vrot.slane %v2794, %v2798
        %v2802 = vsel %vm834, %v2787, 0
        %2804 = vmatprep.subr.mxu0 0.0
        %2805 = vmatpush1.msra.mxu0 %v2789
        %2806 = vmatprep.subr.mxu0 0.0
        %2807 = vmatpush1.msra.mxu0 %v2790
        %2808 = vmatprep.subr.mxu0 0.0
        %2809 = vmatpush1.msra.mxu0 %v2791
        %2810 = vmatprep.subr.mxu0 0.0
        %2811 = vmatpush1.msra.mxu0 %v2792
        %2812 = vmatprep.subr.mxu0 0.0
        %2813 = vmatpush1.msra.mxu0 0.0
        %2814 = vmatprep.subr.mxu0 0.0
        %2815 = vmatpush1.msra.mxu0 0.0
        %2816 = vmatprep.subr.mxu0 0.0
        %2817 = vmatpush1.msra.mxu0 0.0
        %2818 = vmatprep.subr.mxu0 0.0
        %2819 = vmatpush1.msra.mxu0 0.0
        %2820 = vmatprep.subr.mxu0 0.0
        %2821 = vmatpush1.msra.mxu0 0.0
        %2822 = vmatprep.subr.mxu0 0.0
        %2823 = vmatpush1.msra.mxu0 0.0
        %2824 = vmatprep.subr.mxu0 0.0
        %2825 = vmatpush1.msra.mxu0 0.0
        %2826 = vmatprep.subr.mxu0 0.0
        %2827 = vmatpush1.msra.mxu0 0.0
        %2828 = vmatprep.subr.mxu0 0.0
        %2829 = vmatpush1.msra.mxu0 0.0
        %2830 = vmatprep.subr.mxu0 0.0
        %2831 = vmatpush1.msra.mxu0 0.0
        %2832 = vmatprep.subr.mxu0 0.0
        %2833 = vmatpush1.msra.mxu0 0.0
        %2834 = vmatprep.subr.mxu0 0.0
        %2835 = vmatpush1.msra.mxu0 0.0
        %2836 = vmatprep.subr.mxu0 0.0
        %2837 = vmatpush1.msra.mxu0 0.0
        %2838 = vmatprep.subr.mxu0 0.0
        %2839 = vmatpush1.msra.mxu0 0.0
        %2840 = vmatprep.subr.mxu0 0.0
        %2841 = vmatpush1.msra.mxu0 0.0
        %2842 = vmatprep.subr.mxu0 0.0
        %2843 = vmatpush1.msra.mxu0 0.0
        %2844 = vmatprep.subr.mxu0 0.0
        %2845 = vmatpush1.msra.mxu0 0.0
        %2846 = vmatprep.subr.mxu0 0.0
        %2847 = vmatpush1.msra.mxu0 0.0
        %2848 = vmatprep.subr.mxu0 0.0
        %2849 = vmatpush1.msra.mxu0 0.0
        %2850 = vmatprep.subr.mxu0 0.0
        %2851 = vmatpush1.msra.mxu0 0.0
        %2852 = vmatprep.subr.mxu0 0.0
        %2853 = vmatpush1.msra.mxu0 0.0
        %2854 = vmatprep.subr.mxu0 0.0
        %2855 = vmatpush1.msra.mxu0 0.0
        %2856 = vmatprep.subr.mxu0 0.0
        %2857 = vmatpush1.msra.mxu0 0.0
        %2858 = vmatprep.subr.mxu0 0.0
        %2859 = vmatpush1.msra.mxu0 0.0
        %2860 = vmatprep.subr.mxu0 0.0
        %2861 = vmatpush1.msra.mxu0 0.0
        %2862 = vmatprep.subr.mxu0 0.0
        %2863 = vmatpush1.msra.mxu0 0.0
        %2864 = vmatprep.subr.mxu0 0.0
        %2865 = vmatpush1.msra.mxu0 0.0
        %2866 = vmatprep.subr.mxu0 0.0
        %2867 = vmatpush1.msra.mxu0 0.0
        %2868 = vmatprep.mubr.f32.mxu0 0.0
        %2869 = vmatmul.mubr.f32.gmra.mrb[0].mxu0 %v2802
        %v2870 = vpop.f32.mrb[0].mxu0
        %v2871 = vadd.f32 %v2799, %v2870
        %v2872 = vpop.f32.mrb[0].mxu0
        %2873 = vdwg.mxu0
        %v2874 = vmax.f32 %v2871, 0.0
        %s2875 = scalar_lea.vmem %s12, 128
        %v2876 = vld [vmem:[%s2875] sm:$0xff]
        %v2877 = vld [vmem:[%s2875 + $0x8] sm:$0xff]
        %v2878 = vld [vmem:[%s2875 + $0x10] sm:$0xff]
        %v2879 = vld [vmem:[%s2875 + $0x18] sm:$0xff]
        %v2880 = vld [vmem:[%s2875 + $0x20] sm:$0xff]
        %v2881 = vld [vmem:[%s2875 + $0x28] sm:$0xff]
        %v2882 = vld [vmem:[%s2875 + $0x30] sm:$0xff]
        %v2883 = vld [vmem:[%s2875 + $0x38] sm:$0xff]
        %v2884 = vld [vmem:[%s2875 + $0x40] sm:$0xff]
        %v2885 = vld [vmem:[%s2875 + $0x48] sm:$0xff]
        %v2886 = vld [vmem:[%s2875 + $0x50] sm:$0xff]
        %v2887 = vld [vmem:[%s2875 + $0x58] sm:$0xff]
        %v2888 = vld [vmem:[%s2875 + $0x60] sm:$0xff]
        %v2889 = vld [vmem:[%s2875 + $0x68] sm:$0xff]
        %v2890 = vld [vmem:[%s2875 + $0x70] sm:$0xff]
        %v2891 = vld [vmem:[%s2875 + $0x78] sm:$0xff]
        %s2892 = scalar_lea.vmem %s13, 1
        %v2893 = vld [vmem:[%s2892] sm:$0x1]
        %v2895 = vlaneseq
        %v2896 = vshrl.u32 %v2895, 7
        %v2897 = vsub.s32 0, %v2896
        %v2898 = vrot.slane %v2893, %v2897
        %2900 = vmatprep.subr.mxu0 0.0
        %2901 = vmatpush1.msra.mxu0 %v2876
        %2902 = vmatprep.subr.mxu0 0.0
        %2903 = vmatpush1.msra.mxu0 %v2877
        %2904 = vmatprep.subr.mxu0 0.0
        %2905 = vmatpush1.msra.mxu0 %v2878
        %2906 = vmatprep.subr.mxu0 0.0
        %2907 = vmatpush1.msra.mxu0 %v2879
        %2908 = vmatprep.subr.mxu0 0.0
        %2909 = vmatpush1.msra.mxu0 %v2880
        %2910 = vmatprep.subr.mxu0 0.0
        %2911 = vmatpush1.msra.mxu0 %v2881
        %2912 = vmatprep.subr.mxu0 0.0
        %2913 = vmatpush1.msra.mxu0 %v2882
        %2914 = vmatprep.subr.mxu0 0.0
        %2915 = vmatpush1.msra.mxu0 %v2883
        %2916 = vmatprep.subr.mxu0 0.0
        %2917 = vmatpush1.msra.mxu0 %v2884
        %2918 = vmatprep.subr.mxu0 0.0
        %2919 = vmatpush1.msra.mxu0 %v2885
        %2920 = vmatprep.subr.mxu0 0.0
        %2921 = vmatpush1.msra.mxu0 %v2886
        %2922 = vmatprep.subr.mxu0 0.0
        %2923 = vmatpush1.msra.mxu0 %v2887
        %2924 = vmatprep.subr.mxu0 0.0
        %2925 = vmatpush1.msra.mxu0 %v2888
        %2926 = vmatprep.subr.mxu0 0.0
        %2927 = vmatpush1.msra.mxu0 %v2889
        %2928 = vmatprep.subr.mxu0 0.0
        %2929 = vmatpush1.msra.mxu0 %v2890
        %2930 = vmatprep.subr.mxu0 0.0
        %2931 = vmatpush1.msra.mxu0 %v2891
        %2932 = vmatprep.subr.mxu0 0.0
        %2933 = vmatpush1.msra.mxu0 0.0
        %2934 = vmatprep.subr.mxu0 0.0
        %2935 = vmatpush1.msra.mxu0 0.0
        %2936 = vmatprep.subr.mxu0 0.0
        %2937 = vmatpush1.msra.mxu0 0.0
        %2938 = vmatprep.subr.mxu0 0.0
        %2939 = vmatpush1.msra.mxu0 0.0
        %2940 = vmatprep.subr.mxu0 0.0
        %2941 = vmatpush1.msra.mxu0 0.0
        %2942 = vmatprep.subr.mxu0 0.0
        %2943 = vmatpush1.msra.mxu0 0.0
        %2944 = vmatprep.subr.mxu0 0.0
        %2945 = vmatpush1.msra.mxu0 0.0
        %2946 = vmatprep.subr.mxu0 0.0
        %2947 = vmatpush1.msra.mxu0 0.0
        %2948 = vmatprep.subr.mxu0 0.0
        %2949 = vmatpush1.msra.mxu0 0.0
        %2950 = vmatprep.subr.mxu0 0.0
        %2951 = vmatpush1.msra.mxu0 0.0
        %2952 = vmatprep.subr.mxu0 0.0
        %2953 = vmatpush1.msra.mxu0 0.0
        %2954 = vmatprep.subr.mxu0 0.0
        %2955 = vmatpush1.msra.mxu0 0.0
        %2956 = vmatprep.subr.mxu0 0.0
        %2957 = vmatpush1.msra.mxu0 0.0
        %2958 = vmatprep.subr.mxu0 0.0
        %2959 = vmatpush1.msra.mxu0 0.0
        %2960 = vmatprep.subr.mxu0 0.0
        %2961 = vmatpush1.msra.mxu0 0.0
        %2962 = vmatprep.subr.mxu0 0.0
        %2963 = vmatpush1.msra.mxu0 0.0
        %2964 = vmatprep.mubr.f32.mxu0 0.0
        %2965 = vmatmul.mubr.f32.gmra.mrb[0].mxu0 %v2874
        %v2966 = vpop.f32.mrb[0].mxu0
        %v2967 = vadd.f32 %v2898, %v2966
        %v2968 = vpop.f32.mrb[0].mxu0
        %2969 = vdwg.mxu0
        %v2970 = vadd.f32 %v2787, %v2967
        %s2971 = scalar_lea.vmem %s14, 1
        %v2972 = vld [vmem:[%s2971] sm:$0x1]
        %s2973 = scalar_lea.vmem %s15, 1
        %v2974 = vld [vmem:[%s2973] sm:$0x1]
        %v2975 = vsel %vm834, %v2970, 0.0
        %2976 = vadd.xlane.f32.xlu0 %v2975
        %v2977 = vpop.xlane.xlu0 %2976
        %v2978 = vmul.f32 %v2977, %v1673
        %v2979 = vsub.f32 %v2970, %v2978
        %v2980 = vmul.f32 %v2979, %v2979
        %v2981 = vsel %vm834, %v2980, 0.0
        %2982 = vadd.xlane.f32.xlu0 %v2981
        %v2983 = vpop.xlane.xlu0 %2982
        %v2984 = vmul.f32 %v2983, %v1673
        %v2985 = vadd.f32 %v2984, 1e-05
        %v2986 = vrsqrt.pop %v2985
        %v2987 = vmul.f32 %v2979, %v2986
        %v2989 = vlaneseq
        %v2990 = vshrl.u32 %v2989, 7
        %v2991 = vsub.s32 0, %v2990
        %v2992 = vrot.slane %v2972, %v2991
        %v2994 = vmul.f32 %v2987, %v2992
        %v2996 = vlaneseq
        %v2997 = vshrl.u32 %v2996, 7
        %v2998 = vsub.s32 0, %v2997
        %v2999 = vrot.slane %v2974, %v2998
        %v3001 = vadd.f32 %v2994, %v2999
        %v3002 = vld [vmem:[%s16] sm:$0xff]
        %v3003 = vld [vmem:[%s16 + $0x8] sm:$0xff]
        %v3004 = vld [vmem:[%s16 + $0x10] sm:$0xff]
        %v3005 = vld [vmem:[%s16 + $0x18] sm:$0xff]
        %v3006 = vld [vmem:[%s17] sm:$0x1]
        %v3007 = vld [vmem:[%s18] sm:$0xff]
        %v3008 = vld [vmem:[%s18 + $0x8] sm:$0xff]
        %v3009 = vld [vmem:[%s18 + $0x10] sm:$0xff]
        %v3010 = vld [vmem:[%s18 + $0x18] sm:$0xff]
        %v3011 = vld [vmem:[%s19] sm:$0x1]
        %v3013 = vlaneseq
        %v3014 = vshrl.u32 %v3013, 7
        %v3015 = vsub.s32 0, %v3014
        %v3016 = vrot.slane %v3006, %v3015
        %v3019 = vsel %vm834, %v3001, 0
        %3021 = vmatprep.subr.mxu0 0.0
        %3022 = vmatpush1.msra.mxu0 %v3002
        %3023 = vmatprep.subr.mxu0 0.0
        %3024 = vmatpush1.msra.mxu0 %v3003
        %3025 = vmatprep.subr.mxu0 0.0
        %3026 = vmatpush1.msra.mxu0 %v3004
        %3027 = vmatprep.subr.mxu0 0.0
        %3028 = vmatpush1.msra.mxu0 %v3005
        %3029 = vmatprep.subr.mxu0 0.0
        %3030 = vmatpush1.msra.mxu0 0.0
        %3031 = vmatprep.subr.mxu0 0.0
        %3032 = vmatpush1.msra.mxu0 0.0
        %3033 = vmatprep.subr.mxu0 0.0
        %3034 = vmatpush1.msra.mxu0 0.0
        %3035 = vmatprep.subr.mxu0 0.0
        %3036 = vmatpush1.msra.mxu0 0.0
        %3037 = vmatprep.subr.mxu0 0.0
        %3038 = vmatpush1.msra.mxu0 0.0
        %3039 = vmatprep.subr.mxu0 0.0
        %3040 = vmatpush1.msra.mxu0 0.0
        %3041 = vmatprep.subr.mxu0 0.0
        %3042 = vmatpush1.msra.mxu0 0.0
        %3043 = vmatprep.subr.mxu0 0.0
        %3044 = vmatpush1.msra.mxu0 0.0
        %3045 = vmatprep.subr.mxu0 0.0
        %3046 = vmatpush1.msra.mxu0 0.0
        %3047 = vmatprep.subr.mxu0 0.0
        %3048 = vmatpush1.msra.mxu0 0.0
        %3049 = vmatprep.subr.mxu0 0.0
        %3050 = vmatpush1.msra.mxu0 0.0
        %3051 = vmatprep.subr.mxu0 0.0
        %3052 = vmatpush1.msra.mxu0 0.0
        %3053 = vmatprep.subr.mxu0 0.0
        %3054 = vmatpush1.msra.mxu0 0.0
        %3055 = vmatprep.subr.mxu0 0.0
        %3056 = vmatpush1.msra.mxu0 0.0
        %3057 = vmatprep.subr.mxu0 0.0
        %3058 = vmatpush1.msra.mxu0 0.0
        %3059 = vmatprep.subr.mxu0 0.0
        %3060 = vmatpush1.msra.mxu0 0.0
        %3061 = vmatprep.subr.mxu0 0.0
        %3062 = vmatpush1.msra.mxu0 0.0
        %3063 = vmatprep.subr.mxu0 0.0
        %3064 = vmatpush1.msra.mxu0 0.0
        %3065 = vmatprep.subr.mxu0 0.0
        %3066 = vmatpush1.msra.mxu0 0.0
        %3067 = vmatprep.subr.mxu0 0.0
        %3068 = vmatpush1.msra.mxu0 0.0
        %3069 = vmatprep.subr.mxu0 0.0
        %3070 = vmatpush1.msra.mxu0 0.0
        %3071 = vmatprep.subr.mxu0 0.0
        %3072 = vmatpush1.msra.mxu0 0.0
        %3073 = vmatprep.subr.mxu0 0.0
        %3074 = vmatpush1.msra.mxu0 0.0
        %3075 = vmatprep.subr.mxu0 0.0
        %3076 = vmatpush1.msra.mxu0 0.0
        %3077 = vmatprep.subr.mxu0 0.0
        %3078 = vmatpush1.msra.mxu0 0.0
        %3079 = vmatprep.subr.mxu0 0.0
        %3080 = vmatpush1.msra.mxu0 0.0
        %3081 = vmatprep.subr.mxu0 0.0
        %3082 = vmatpush1.msra.mxu0 0.0
        %3083 = vmatprep.subr.mxu0 0.0
        %3084 = vmatpush1.msra.mxu0 0.0
        %3085 = vmatprep.mubr.f32.mxu0 0.0
        %3086 = vmatmul.mubr.f32.gmra.mrb[0].mxu0 %v3019
        %v3087 = vpop.f32.mrb[0].mxu0
        %v3088 = vadd.f32 %v3016, %v3087
        %v3089 = vpop.f32.mrb[0].mxu0
        %3090 = vdwg.mxu0
        %3092 = vrot.lane.b32.xlu0 %v3088, 96
        %v3093 = vpop.permute.xlu0 %3092
        %v3094 = vsel %vm911, %v3088, 0
        %v3096 = vsel %vm911, %v3093, 0
        %3098 = vmatprep.subr.mxu0 0.0
        %3099 = vmatpush1.xpose.msra.mxu0 %v3096
        %3100 = vmatprep.subr.mxu0 0.0
        %3101 = vmatpush1.xpose.msra.mxu0 0.0
        %3102 = vmatprep.subr.mxu0 0.0
        %3103 = vmatpush1.xpose.msra.mxu0 0.0
        %3104 = vmatprep.subr.mxu0 0.0
        %3105 = vmatpush1.xpose.msra.mxu0 0.0
        %3106 = vmatprep.subr.mxu0 0.0
        %3107 = vmatpush1.xpose.msra.mxu0 0.0
        %3108 = vmatprep.subr.mxu0 0.0
        %3109 = vmatpush1.xpose.msra.mxu0 0.0
        %3110 = vmatprep.subr.mxu0 0.0
        %3111 = vmatpush1.xpose.msra.mxu0 0.0
        %3112 = vmatprep.subr.mxu0 0.0
        %3113 = vmatpush1.xpose.msra.mxu0 0.0
        %3114 = vmatprep.subr.mxu0 0.0
        %3115 = vmatpush1.xpose.msra.mxu0 0.0
        %3116 = vmatprep.subr.mxu0 0.0
        %3117 = vmatpush1.xpose.msra.mxu0 0.0
        %3118 = vmatprep.subr.mxu0 0.0
        %3119 = vmatpush1.xpose.msra.mxu0 0.0
        %3120 = vmatprep.subr.mxu0 0.0
        %3121 = vmatpush1.xpose.msra.mxu0 0.0
        %3122 = vmatprep.subr.mxu0 0.0
        %3123 = vmatpush1.xpose.msra.mxu0 0.0
        %3124 = vmatprep.subr.mxu0 0.0
        %3125 = vmatpush1.xpose.msra.mxu0 0.0
        %3126 = vmatprep.subr.mxu0 0.0
        %3127 = vmatpush1.xpose.msra.mxu0 0.0
        %3128 = vmatprep.subr.mxu0 0.0
        %3129 = vmatpush1.xpose.msra.mxu0 0.0
        %3130 = vmatprep.subr.mxu0 0.0
        %3131 = vmatpush1.xpose.msra.mxu0 0.0
        %3132 = vmatprep.subr.mxu0 0.0
        %3133 = vmatpush1.xpose.msra.mxu0 0.0
        %3134 = vmatprep.subr.mxu0 0.0
        %3135 = vmatpush1.xpose.msra.mxu0 0.0
        %3136 = vmatprep.subr.mxu0 0.0
        %3137 = vmatpush1.xpose.msra.mxu0 0.0
        %3138 = vmatprep.subr.mxu0 0.0
        %3139 = vmatpush1.xpose.msra.mxu0 0.0
        %3140 = vmatprep.subr.mxu0 0.0
        %3141 = vmatpush1.xpose.msra.mxu0 0.0
        %3142 = vmatprep.subr.mxu0 0.0
        %3143 = vmatpush1.xpose.msra.mxu0 0.0
        %3144 = vmatprep.subr.mxu0 0.0
        %3145 = vmatpush1.xpose.msra.mxu0 0.0
        %3146 = vmatprep.subr.mxu0 0.0
        %3147 = vmatpush1.xpose.msra.mxu0 0.0
        %3148 = vmatprep.subr.mxu0 0.0
        %3149 = vmatpush1.xpose.msra.mxu0 0.0
        %3150 = vmatprep.subr.mxu0 0.0
        %3151 = vmatpush1.xpose.msra.mxu0 0.0
        %3152 = vmatprep.subr.mxu0 0.0
        %3153 = vmatpush1.xpose.msra.mxu0 0.0
        %3154 = vmatprep.subr.mxu0 0.0
        %3155 = vmatpush1.xpose.msra.mxu0 0.0
        %3156 = vmatprep.subr.mxu0 0.0
        %3157 = vmatpush1.xpose.msra.mxu0 0.0
        %3158 = vmatprep.subr.mxu0 0.0
        %3159 = vmatpush1.xpose.msra.mxu0 0.0
        %3160 = vmatprep.subr.mxu0 0.0
        %3161 = vmatpush1.xpose.msra.mxu0 0.0
        %3162 = vmatprep.mubr.f32.mxu0 0.0
        %3163 = vmatmul.mubr.f32.gmra.mrb[0].mxu0 %v3094
        %v3164 = vpop.f32.mrb[0].mxu0
        %v3165 = vadd.f32 0.0, %v3164
        %v3166 = vpop.f32.mrb[0].mxu0
        %3167 = vdwg.mxu0
        %v3168 = vmul.f32 %v3165, 0.35355338
        %v3169 = vsel %vm911, %v3168, -inf
        %3170 = vmax.xlane.f32.xlu0 %v3169
        %v3171 = vpop.xlane.xlu0 %3170
        %v3172 = vsub.f32 %v3168, %v3171
        %v3173 = vmul.f32 %v3172, 1.442695
        %v3174 = vpow.pop %v3173
        %v3175 = vsel %vm911, %v3174, 0.0
        %3176 = vadd.xlane.f32.xlu0 %v3175
        %v3177 = vpop.xlane.xlu0 %3176
        %v3178 = vrcp.pop %v3177
        %v3179 = vmul.f32 %v3174, %v3178
        %3180 = vrot.lane.b32.xlu0 %v3088, 64
        %v3181 = vpop.permute.xlu0 %3180
        %v3184 = vsel %vm911, %v3179, 0
        %3186 = vmatprep.subr.mxu0 0.0
        %3187 = vmatpush1.msra.mxu0 %v3181
        %3188 = vmatprep.subr.mxu0 0.0
        %3189 = vmatpush1.msra.mxu0 0.0
        %3190 = vmatprep.subr.mxu0 0.0
        %3191 = vmatpush1.msra.mxu0 0.0
        %3192 = vmatprep.subr.mxu0 0.0
        %3193 = vmatpush1.msra.mxu0 0.0
        %3194 = vmatprep.subr.mxu0 0.0
        %3195 = vmatpush1.msra.mxu0 0.0
        %3196 = vmatprep.subr.mxu0 0.0
        %3197 = vmatpush1.msra.mxu0 0.0
        %3198 = vmatprep.subr.mxu0 0.0
        %3199 = vmatpush1.msra.mxu0 0.0
        %3200 = vmatprep.subr.mxu0 0.0
        %3201 = vmatpush1.msra.mxu0 0.0
        %3202 = vmatprep.subr.mxu0 0.0
        %3203 = vmatpush1.msra.mxu0 0.0
        %3204 = vmatprep.subr.mxu0 0.0
        %3205 = vmatpush1.msra.mxu0 0.0
        %3206 = vmatprep.subr.mxu0 0.0
        %3207 = vmatpush1.msra.mxu0 0.0
        %3208 = vmatprep.subr.mxu0 0.0
        %3209 = vmatpush1.msra.mxu0 0.0
        %3210 = vmatprep.subr.mxu0 0.0
        %3211 = vmatpush1.msra.mxu0 0.0
        %3212 = vmatprep.subr.mxu0 0.0
        %3213 = vmatpush1.msra.mxu0 0.0
        %3214 = vmatprep.subr.mxu0 0.0
        %3215 = vmatpush1.msra.mxu0 0.0
        %3216 = vmatprep.subr.mxu0 0.0
        %3217 = vmatpush1.msra.mxu0 0.0
        %3218 = vmatprep.subr.mxu0 0.0
        %3219 = vmatpush1.msra.mxu0 0.0
        %3220 = vmatprep.subr.mxu0 0.0
        %3221 = vmatpush1.msra.mxu0 0.0
        %3222 = vmatprep.subr.mxu0 0.0
        %3223 = vmatpush1.msra.mxu0 0.0
        %3224 = vmatprep.subr.mxu0 0.0
        %3225 = vmatpush1.msra.mxu0 0.0
        %3226 = vmatprep.subr.mxu0 0.0
        %3227 = vmatpush1.msra.mxu0 0.0
        %3228 = vmatprep.subr.mxu0 0.0
        %3229 = vmatpush1.msra.mxu0 0.0
        %3230 = vmatprep.subr.mxu0 0.0
        %3231 = vmatpush1.msra.mxu0 0.0
        %3232 = vmatprep.subr.mxu0 0.0
        %3233 = vmatpush1.msra.mxu0 0.0
        %3234 = vmatprep.subr.mxu0 0.0
        %3235 = vmatpush1.msra.mxu0 0.0
        %3236 = vmatprep.subr.mxu0 0.0
        %3237 = vmatpush1.msra.mxu0 0.0
        %3238 = vmatprep.subr.mxu0 0.0
        %3239 = vmatpush1.msra.mxu0 0.0
        %3240 = vmatprep.subr.mxu0 0.0
        %3241 = vmatpush1.msra.mxu0 0.0
        %3242 = vmatprep.subr.mxu0 0.0
        %3243 = vmatpush1.msra.mxu0 0.0
        %3244 = vmatprep.subr.mxu0 0.0
        %3245 = vmatpush1.msra.mxu0 0.0
        %3246 = vmatprep.subr.mxu0 0.0
        %3247 = vmatpush1.msra.mxu0 0.0
        %3248 = vmatprep.subr.mxu0 0.0
        %3249 = vmatpush1.msra.mxu0 0.0
        %3250 = vmatprep.mubr.f32.mxu0 0.0
        %3251 = vmatmul.mubr.f32.gmra.mrb[0].mxu0 %v3184
        %v3252 = vpop.f32.mrb[0].mxu0
        %v3253 = vadd.f32 0.0, %v3252
        %v3254 = vpop.f32.mrb[0].mxu0
        %3255 = vdwg.mxu0
        %3256 = vrot.lane.b32.xlu0 %v3088, 120
        %v3257 = vpop.permute.xlu0 %3256
        %3258 = vrot.lane.b32.xlu0 %v3088, 88
        %v3259 = vpop.permute.xlu0 %3258
        %v3260 = vsel %vm911, %v3257, 0
        %v3262 = vsel %vm911, %v3259, 0
        %3264 = vmatprep.subr.mxu0 0.0
        %3265 = vmatpush1.xpose.msra.mxu0 %v3262
        %3266 = vmatprep.subr.mxu0 0.0
        %3267 = vmatpush1.xpose.msra.mxu0 0.0
        %3268 = vmatprep.subr.mxu0 0.0
        %3269 = vmatpush1.xpose.msra.mxu0 0.0
        %3270 = vmatprep.subr.mxu0 0.0
        %3271 = vmatpush1.xpose.msra.mxu0 0.0
        %3272 = vmatprep.subr.mxu0 0.0
        %3273 = vmatpush1.xpose.msra.mxu0 0.0
        %3274 = vmatprep.subr.mxu0 0.0
        %3275 = vmatpush1.xpose.msra.mxu0 0.0
        %3276 = vmatprep.subr.mxu0 0.0
        %3277 = vmatpush1.xpose.msra.mxu0 0.0
        %3278 = vmatprep.subr.mxu0 0.0
        %3279 = vmatpush1.xpose.msra.mxu0 0.0
        %3280 = vmatprep.subr.mxu0 0.0
        %3281 = vmatpush1.xpose.msra.mxu0 0.0
        %3282 = vmatprep.subr.mxu0 0.0
        %3283 = vmatpush1.xpose.msra.mxu0 0.0
        %3284 = vmatprep.subr.mxu0 0.0
        %3285 = vmatpush1.xpose.msra.mxu0 0.0
        %3286 = vmatprep.subr.mxu0 0.0
        %3287 = vmatpush1.xpose.msra.mxu0 0.0
        %3288 = vmatprep.subr.mxu0 0.0
        %3289 = vmatpush1.xpose.msra.mxu0 0.0
        %3290 = vmatprep.subr.mxu0 0.0
        %3291 = vmatpush1.xpose.msra.mxu0 0.0
        %3292 = vmatprep.subr.mxu0 0.0
        %3293 = vmatpush1.xpose.msra.mxu0 0.0
        %3294 = vmatprep.subr.mxu0 0.0
        %3295 = vmatpush1.xpose.msra.mxu0 0.0
        %3296 = vmatprep.subr.mxu0 0.0
        %3297 = vmatpush1.xpose.msra.mxu0 0.0
        %3298 = vmatprep.subr.mxu0 0.0
        %3299 = vmatpush1.xpose.msra.mxu0 0.0
        %3300 = vmatprep.subr.mxu0 0.0
        %3301 = vmatpush1.xpose.msra.mxu0 0.0
        %3302 = vmatprep.subr.mxu0 0.0
        %3303 = vmatpush1.xpose.msra.mxu0 0.0
        %3304 = vmatprep.subr.mxu0 0.0
        %3305 = vmatpush1.xpose.msra.mxu0 0.0
        %3306 = vmatprep.subr.mxu0 0.0
        %3307 = vmatpush1.xpose.msra.mxu0 0.0
        %3308 = vmatprep.subr.mxu0 0.0
        %3309 = vmatpush1.xpose.msra.mxu0 0.0
        %3310 = vmatprep.subr.mxu0 0.0
        %3311 = vmatpush1.xpose.msra.mxu0 0.0
        %3312 = vmatprep.subr.mxu0 0.0
        %3313 = vmatpush1.xpose.msra.mxu0 0.0
        %3314 = vmatprep.subr.mxu0 0.0
        %3315 = vmatpush1.xpose.msra.mxu0 0.0
        %3316 = vmatprep.subr.mxu0 0.0
        %3317 = vmatpush1.xpose.msra.mxu0 0.0
        %3318 = vmatprep.subr.mxu0 0.0
        %3319 = vmatpush1.xpose.msra.mxu0 0.0
        %3320 = vmatprep.subr.mxu0 0.0
        %3321 = vmatpush1.xpose.msra.mxu0 0.0
        %3322 = vmatprep.subr.mxu0 0.0
        %3323 = vmatpush1.xpose.msra.mxu0 0.0
        %3324 = vmatprep.subr.mxu0 0.0
        %3325 = vmatpush1.xpose.msra.mxu0 0.0
        %3326 = vmatprep.subr.mxu0 0.0
        %3327 = vmatpush1.xpose.msra.mxu0 0.0
        %3328 = vmatprep.mubr.f32.mxu0 0.0
        %3329 = vmatmul.mubr.f32.gmra.mrb[0].mxu0 %v3260
        %v3330 = vpop.f32.mrb[0].mxu0
        %v3331 = vadd.f32 0.0, %v3330
        %v3332 = vpop.f32.mrb[0].mxu0
        %3333 = vdwg.mxu0
        %v3334 = vmul.f32 %v3331, 0.35355338
        %v3335 = vsel %vm911, %v3334, -inf
        %3336 = vmax.xlane.f32.xlu0 %v3335
        %v3337 = vpop.xlane.xlu0 %3336
        %v3338 = vsub.f32 %v3334, %v3337
        %v3339 = vmul.f32 %v3338, 1.442695
        %v3340 = vpow.pop %v3339
        %v3341 = vsel %vm911, %v3340, 0.0
        %3342 = vadd.xlane.f32.xlu0 %v3341
        %v3343 = vpop.xlane.xlu0 %3342
        %v3344 = vrcp.pop %v3343
        %v3345 = vmul.f32 %v3340, %v3344
        %3346 = vrot.lane.b32.xlu0 %v3088, 56
        %v3347 = vpop.permute.xlu0 %3346
        %v3350 = vsel %vm911, %v3345, 0
        %3352 = vmatprep.subr.mxu0 0.0
        %3353 = vmatpush1.msra.mxu0 %v3347
        %3354 = vmatprep.subr.mxu0 0.0
        %3355 = vmatpush1.msra.mxu0 0.0
        %3356 = vmatprep.subr.mxu0 0.0
        %3357 = vmatpush1.msra.mxu0 0.0
        %3358 = vmatprep.subr.mxu0 0.0
        %3359 = vmatpush1.msra.mxu0 0.0
        %3360 = vmatprep.subr.mxu0 0.0
        %3361 = vmatpush1.msra.mxu0 0.0
        %3362 = vmatprep.subr.mxu0 0.0
        %3363 = vmatpush1.msra.mxu0 0.0
        %3364 = vmatprep.subr.mxu0 0.0
        %3365 = vmatpush1.msra.mxu0 0.0
        %3366 = vmatprep.subr.mxu0 0.0
        %3367 = vmatpush1.msra.mxu0 0.0
        %3368 = vmatprep.subr.mxu0 0.0
        %3369 = vmatpush1.msra.mxu0 0.0
        %3370 = vmatprep.subr.mxu0 0.0
        %3371 = vmatpush1.msra.mxu0 0.0
        %3372 = vmatprep.subr.mxu0 0.0
        %3373 = vmatpush1.msra.mxu0 0.0
        %3374 = vmatprep.subr.mxu0 0.0
        %3375 = vmatpush1.msra.mxu0 0.0
        %3376 = vmatprep.subr.mxu0 0.0
        %3377 = vmatpush1.msra.mxu0 0.0
        %3378 = vmatprep.subr.mxu0 0.0
        %3379 = vmatpush1.msra.mxu0 0.0
        %3380 = vmatprep.subr.mxu0 0.0
        %3381 = vmatpush1.msra.mxu0 0.0
        %3382 = vmatprep.subr.mxu0 0.0
        %3383 = vmatpush1.msra.mxu0 0.0
        %3384 = vmatprep.subr.mxu0 0.0
        %3385 = vmatpush1.msra.mxu0 0.0
        %3386 = vmatprep.subr.mxu0 0.0
        %3387 = vmatpush1.msra.mxu0 0.0
        %3388 = vmatprep.subr.mxu0 0.0
        %3389 = vmatpush1.msra.mxu0 0.0
        %3390 = vmatprep.subr.mxu0 0.0
        %3391 = vmatpush1.msra.mxu0 0.0
        %3392 = vmatprep.subr.mxu0 0.0
        %3393 = vmatpush1.msra.mxu0 0.0
        %3394 = vmatprep.subr.mxu0 0.0
        %3395 = vmatpush1.msra.mxu0 0.0
        %3396 = vmatprep.subr.mxu0 0.0
        %3397 = vmatpush1.msra.mxu0 0.0
        %3398 = vmatprep.subr.mxu0 0.0
        %3399 = vmatpush1.msra.mxu0 0.0
        %3400 = vmatprep.subr.mxu0 0.0
        %3401 = vmatpush1.msra.mxu0 0.0
        %3402 = vmatprep.subr.mxu0 0.0
        %3403 = vmatpush1.msra.mxu0 0.0
        %3404 = vmatprep.subr.mxu0 0.0
        %3405 = vmatpush1.msra.mxu0 0.0
        %3406 = vmatprep.subr.mxu0 0.0
        %3407 = vmatpush1.msra.mxu0 0.0
        %3408 = vmatprep.subr.mxu0 0.0
        %3409 = vmatpush1.msra.mxu0 0.0
        %3410 = vmatprep.subr.mxu0 0.0
        %3411 = vmatpush1.msra.mxu0 0.0
        %3412 = vmatprep.subr.mxu0 0.0
        %3413 = vmatpush1.msra.mxu0 0.0
        %3414 = vmatprep.subr.mxu0 0.0
        %3415 = vmatpush1.msra.mxu0 0.0
        %3416 = vmatprep.mubr.f32.mxu0 0.0
        %3417 = vmatmul.mubr.f32.gmra.mrb[0].mxu0 %v3350
        %v3418 = vpop.f32.mrb[0].mxu0
        %v3419 = vadd.f32 0.0, %v3418
        %v3420 = vpop.f32.mrb[0].mxu0
        %3421 = vdwg.mxu0
        %3422 = vrot.lane.b32.xlu0 %v3088, 112
        %v3423 = vpop.permute.xlu0 %3422
        %3424 = vrot.lane.b32.xlu0 %v3088, 80
        %v3425 = vpop.permute.xlu0 %3424
        %v3426 = vsel %vm911, %v3423, 0
        %v3428 = vsel %vm911, %v3425, 0
        %3430 = vmatprep.subr.mxu0 0.0
        %3431 = vmatpush1.xpose.msra.mxu0 %v3428
        %3432 = vmatprep.subr.mxu0 0.0
        %3433 = vmatpush1.xpose.msra.mxu0 0.0
        %3434 = vmatprep.subr.mxu0 0.0
        %3435 = vmatpush1.xpose.msra.mxu0 0.0
        %3436 = vmatprep.subr.mxu0 0.0
        %3437 = vmatpush1.xpose.msra.mxu0 0.0
        %3438 = vmatprep.subr.mxu0 0.0
        %3439 = vmatpush1.xpose.msra.mxu0 0.0
        %3440 = vmatprep.subr.mxu0 0.0
        %3441 = vmatpush1.xpose.msra.mxu0 0.0
        %3442 = vmatprep.subr.mxu0 0.0
        %3443 = vmatpush1.xpose.msra.mxu0 0.0
        %3444 = vmatprep.subr.mxu0 0.0
        %3445 = vmatpush1.xpose.msra.mxu0 0.0
        %3446 = vmatprep.subr.mxu0 0.0
        %3447 = vmatpush1.xpose.msra.mxu0 0.0
        %3448 = vmatprep.subr.mxu0 0.0
        %3449 = vmatpush1.xpose.msra.mxu0 0.0
        %3450 = vmatprep.subr.mxu0 0.0
        %3451 = vmatpush1.xpose.msra.mxu0 0.0
        %3452 = vmatprep.subr.mxu0 0.0
        %3453 = vmatpush1.xpose.msra.mxu0 0.0
        %3454 = vmatprep.subr.mxu0 0.0
        %3455 = vmatpush1.xpose.msra.mxu0 0.0
        %3456 = vmatprep.subr.mxu0 0.0
        %3457 = vmatpush1.xpose.msra.mxu0 0.0
        %3458 = vmatprep.subr.mxu0 0.0
        %3459 = vmatpush1.xpose.msra.mxu0 0.0
        %3460 = vmatprep.subr.mxu0 0.0
        %3461 = vmatpush1.xpose.msra.mxu0 0.0
        %3462 = vmatprep.subr.mxu0 0.0
        %3463 = vmatpush1.xpose.msra.mxu0 0.0
        %3464 = vmatprep.subr.mxu0 0.0
        %3465 = vmatpush1.xpose.msra.mxu0 0.0
        %3466 = vmatprep.subr.mxu0 0.0
        %3467 = vmatpush1.xpose.msra.mxu0 0.0
        %3468 = vmatprep.subr.mxu0 0.0
        %3469 = vmatpush1.xpose.msra.mxu0 0.0
        %3470 = vmatprep.subr.mxu0 0.0
        %3471 = vmatpush1.xpose.msra.mxu0 0.0
        %3472 = vmatprep.subr.mxu0 0.0
        %3473 = vmatpush1.xpose.msra.mxu0 0.0
        %3474 = vmatprep.subr.mxu0 0.0
        %3475 = vmatpush1.xpose.msra.mxu0 0.0
        %3476 = vmatprep.subr.mxu0 0.0
        %3477 = vmatpush1.xpose.msra.mxu0 0.0
        %3478 = vmatprep.subr.mxu0 0.0
        %3479 = vmatpush1.xpose.msra.mxu0 0.0
        %3480 = vmatprep.subr.mxu0 0.0
        %3481 = vmatpush1.xpose.msra.mxu0 0.0
        %3482 = vmatprep.subr.mxu0 0.0
        %3483 = vmatpush1.xpose.msra.mxu0 0.0
        %3484 = vmatprep.subr.mxu0 0.0
        %3485 = vmatpush1.xpose.msra.mxu0 0.0
        %3486 = vmatprep.subr.mxu0 0.0
        %3487 = vmatpush1.xpose.msra.mxu0 0.0
        %3488 = vmatprep.subr.mxu0 0.0
        %3489 = vmatpush1.xpose.msra.mxu0 0.0
        %3490 = vmatprep.subr.mxu0 0.0
        %3491 = vmatpush1.xpose.msra.mxu0 0.0
        %3492 = vmatprep.subr.mxu0 0.0
        %3493 = vmatpush1.xpose.msra.mxu0 0.0
        %3494 = vmatprep.mubr.f32.mxu0 0.0
        %3495 = vmatmul.mubr.f32.gmra.mrb[0].mxu0 %v3426
        %v3496 = vpop.f32.mrb[0].mxu0
        %v3497 = vadd.f32 0.0, %v3496
        %v3498 = vpop.f32.mrb[0].mxu0
        %3499 = vdwg.mxu0
        %v3500 = vmul.f32 %v3497, 0.35355338
        %v3501 = vsel %vm911, %v3500, -inf
        %3502 = vmax.xlane.f32.xlu0 %v3501
        %v3503 = vpop.xlane.xlu0 %3502
        %v3504 = vsub.f32 %v3500, %v3503
        %v3505 = vmul.f32 %v3504, 1.442695
        %v3506 = vpow.pop %v3505
        %v3507 = vsel %vm911, %v3506, 0.0
        %3508 = vadd.xlane.f32.xlu0 %v3507
        %v3509 = vpop.xlane.xlu0 %3508
        %v3510 = vrcp.pop %v3509
        %v3511 = vmul.f32 %v3506, %v3510
        %3512 = vrot.lane.b32.xlu0 %v3088, 48
        %v3513 = vpop.permute.xlu0 %3512
        %v3516 = vsel %vm911, %v3511, 0
        %3518 = vmatprep.subr.mxu0 0.0
        %3519 = vmatpush1.msra.mxu0 %v3513
        %3520 = vmatprep.subr.mxu0 0.0
        %3521 = vmatpush1.msra.mxu0 0.0
        %3522 = vmatprep.subr.mxu0 0.0
        %3523 = vmatpush1.msra.mxu0 0.0
        %3524 = vmatprep.subr.mxu0 0.0
        %3525 = vmatpush1.msra.mxu0 0.0
        %3526 = vmatprep.subr.mxu0 0.0
        %3527 = vmatpush1.msra.mxu0 0.0
        %3528 = vmatprep.subr.mxu0 0.0
        %3529 = vmatpush1.msra.mxu0 0.0
        %3530 = vmatprep.subr.mxu0 0.0
        %3531 = vmatpush1.msra.mxu0 0.0
        %3532 = vmatprep.subr.mxu0 0.0
        %3533 = vmatpush1.msra.mxu0 0.0
        %3534 = vmatprep.subr.mxu0 0.0
        %3535 = vmatpush1.msra.mxu0 0.0
        %3536 = vmatprep.subr.mxu0 0.0
        %3537 = vmatpush1.msra.mxu0 0.0
        %3538 = vmatprep.subr.mxu0 0.0
        %3539 = vmatpush1.msra.mxu0 0.0
        %3540 = vmatprep.subr.mxu0 0.0
        %3541 = vmatpush1.msra.mxu0 0.0
        %3542 = vmatprep.subr.mxu0 0.0
        %3543 = vmatpush1.msra.mxu0 0.0
        %3544 = vmatprep.subr.mxu0 0.0
        %3545 = vmatpush1.msra.mxu0 0.0
        %3546 = vmatprep.subr.mxu0 0.0
        %3547 = vmatpush1.msra.mxu0 0.0
        %3548 = vmatprep.subr.mxu0 0.0
        %3549 = vmatpush1.msra.mxu0 0.0
        %3550 = vmatprep.subr.mxu0 0.0
        %3551 = vmatpush1.msra.mxu0 0.0
        %3552 = vmatprep.subr.mxu0 0.0
        %3553 = vmatpush1.msra.mxu0 0.0
        %3554 = vmatprep.subr.mxu0 0.0
        %3555 = vmatpush1.msra.mxu0 0.0
        %3556 = vmatprep.subr.mxu0 0.0
        %3557 = vmatpush1.msra.mxu0 0.0
        %3558 = vmatprep.subr.mxu0 0.0
        %3559 = vmatpush1.msra.mxu0 0.0
        %3560 = vmatprep.subr.mxu0 0.0
        %3561 = vmatpush1.msra.mxu0 0.0
        %3562 = vmatprep.subr.mxu0 0.0
        %3563 = vmatpush1.msra.mxu0 0.0
        %3564 = vmatprep.subr.mxu0 0.0
        %3565 = vmatpush1.msra.mxu0 0.0
        %3566 = vmatprep.subr.mxu0 0.0
        %3567 = vmatpush1.msra.mxu0 0.0
        %3568 = vmatprep.subr.mxu0 0.0
        %3569 = vmatpush1.msra.mxu0 0.0
        %3570 = vmatprep.subr.mxu0 0.0
        %3571 = vmatpush1.msra.mxu0 0.0
        %3572 = vmatprep.subr.mxu0 0.0
        %3573 = vmatpush1.msra.mxu0 0.0
        %3574 = vmatprep.subr.mxu0 0.0
        %3575 = vmatpush1.msra.mxu0 0.0
        %3576 = vmatprep.subr.mxu0 0.0
        %3577 = vmatpush1.msra.mxu0 0.0
        %3578 = vmatprep.subr.mxu0 0.0
        %3579 = vmatpush1.msra.mxu0 0.0
        %3580 = vmatprep.subr.mxu0 0.0
        %3581 = vmatpush1.msra.mxu0 0.0
        %3582 = vmatprep.mubr.f32.mxu0 0.0
        %3583 = vmatmul.mubr.f32.gmra.mrb[0].mxu0 %v3516
        %v3584 = vpop.f32.mrb[0].mxu0
        %v3585 = vadd.f32 0.0, %v3584
        %v3586 = vpop.f32.mrb[0].mxu0
        %3587 = vdwg.mxu0
        %3588 = vrot.lane.b32.xlu0 %v3088, 104
        %v3589 = vpop.permute.xlu0 %3588
        %3590 = vrot.lane.b32.xlu0 %v3088, 72
        %v3591 = vpop.permute.xlu0 %3590
        %v3592 = vsel %vm911, %v3589, 0
        %v3594 = vsel %vm911, %v3591, 0
        %3596 = vmatprep.subr.mxu0 0.0
        %3597 = vmatpush1.xpose.msra.mxu0 %v3594
        %3598 = vmatprep.subr.mxu0 0.0
        %3599 = vmatpush1.xpose.msra.mxu0 0.0
        %3600 = vmatprep.subr.mxu0 0.0
        %3601 = vmatpush1.xpose.msra.mxu0 0.0
        %3602 = vmatprep.subr.mxu0 0.0
        %3603 = vmatpush1.xpose.msra.mxu0 0.0
        %3604 = vmatprep.subr.mxu0 0.0
        %3605 = vmatpush1.xpose.msra.mxu0 0.0
        %3606 = vmatprep.subr.mxu0 0.0
        %3607 = vmatpush1.xpose.msra.mxu0 0.0
        %3608 = vmatprep.subr.mxu0 0.0
        %3609 = vmatpush1.xpose.msra.mxu0 0.0
        %3610 = vmatprep.subr.mxu0 0.0
        %3611 = vmatpush1.xpose.msra.mxu0 0.0
        %3612 = vmatprep.subr.mxu0 0.0
        %3613 = vmatpush1.xpose.msra.mxu0 0.0
        %3614 = vmatprep.subr.mxu0 0.0
        %3615 = vmatpush1.xpose.msra.mxu0 0.0
        %3616 = vmatprep.subr.mxu0 0.0
        %3617 = vmatpush1.xpose.msra.mxu0 0.0
        %3618 = vmatprep.subr.mxu0 0.0
        %3619 = vmatpush1.xpose.msra.mxu0 0.0
        %3620 = vmatprep.subr.mxu0 0.0
        %3621 = vmatpush1.xpose.msra.mxu0 0.0
        %3622 = vmatprep.subr.mxu0 0.0
        %3623 = vmatpush1.xpose.msra.mxu0 0.0
        %3624 = vmatprep.subr.mxu0 0.0
        %3625 = vmatpush1.xpose.msra.mxu0 0.0
        %3626 = vmatprep.subr.mxu0 0.0
        %3627 = vmatpush1.xpose.msra.mxu0 0.0
        %3628 = vmatprep.subr.mxu0 0.0
        %3629 = vmatpush1.xpose.msra.mxu0 0.0
        %3630 = vmatprep.subr.mxu0 0.0
        %3631 = vmatpush1.xpose.msra.mxu0 0.0
        %3632 = vmatprep.subr.mxu0 0.0
        %3633 = vmatpush1.xpose.msra.mxu0 0.0
        %3634 = vmatprep.subr.mxu0 0.0
        %3635 = vmatpush1.xpose.msra.mxu0 0.0
        %3636 = vmatprep.subr.mxu0 0.0
        %3637 = vmatpush1.xpose.msra.mxu0 0.0
        %3638 = vmatprep.subr.mxu0 0.0
        %3639 = vmatpush1.xpose.msra.mxu0 0.0
        %3640 = vmatprep.subr.mxu0 0.0
        %3641 = vmatpush1.xpose.msra.mxu0 0.0
        %3642 = vmatprep.subr.mxu0 0.0
        %3643 = vmatpush1.xpose.msra.mxu0 0.0
        %3644 = vmatprep.subr.mxu0 0.0
        %3645 = vmatpush1.xpose.msra.mxu0 0.0
        %3646 = vmatprep.subr.mxu0 0.0
        %3647 = vmatpush1.xpose.msra.mxu0 0.0
        %3648 = vmatprep.subr.mxu0 0.0
        %3649 = vmatpush1.xpose.msra.mxu0 0.0
        %3650 = vmatprep.subr.mxu0 0.0
        %3651 = vmatpush1.xpose.msra.mxu0 0.0
        %3652 = vmatprep.subr.mxu0 0.0
        %3653 = vmatpush1.xpose.msra.mxu0 0.0
        %3654 = vmatprep.subr.mxu0 0.0
        %3655 = vmatpush1.xpose.msra.mxu0 0.0
        %3656 = vmatprep.subr.mxu0 0.0
        %3657 = vmatpush1.xpose.msra.mxu0 0.0
        %3658 = vmatprep.subr.mxu0 0.0
        %3659 = vmatpush1.xpose.msra.mxu0 0.0
        %3660 = vmatprep.mubr.f32.mxu0 0.0
        %3661 = vmatmul.mubr.f32.gmra.mrb[0].mxu0 %v3592
        %v3662 = vpop.f32.mrb[0].mxu0
        %v3663 = vadd.f32 0.0, %v3662
        %v3664 = vpop.f32.mrb[0].mxu0
        %3665 = vdwg.mxu0
        %v3666 = vmul.f32 %v3663, 0.35355338
        %v3667 = vsel %vm911, %v3666, -inf
        %3668 = vmax.xlane.f32.xlu0 %v3667
        %v3669 = vpop.xlane.xlu0 %3668
        %v3670 = vsub.f32 %v3666, %v3669
        %v3671 = vmul.f32 %v3670, 1.442695
        %v3672 = vpow.pop %v3671
        %v3673 = vsel %vm911, %v3672, 0.0
        %3674 = vadd.xlane.f32.xlu0 %v3673
        %v3675 = vpop.xlane.xlu0 %3674
        %v3676 = vrcp.pop %v3675
        %v3677 = vmul.f32 %v3672, %v3676
        %3678 = vrot.lane.b32.xlu0 %v3088, 40
        %v3679 = vpop.permute.xlu0 %3678
        %v3682 = vsel %vm911, %v3677, 0
        %3684 = vmatprep.subr.mxu0 0.0
        %3685 = vmatpush1.msra.mxu0 %v3679
        %3686 = vmatprep.subr.mxu0 0.0
        %3687 = vmatpush1.msra.mxu0 0.0
        %3688 = vmatprep.subr.mxu0 0.0
        %3689 = vmatpush1.msra.mxu0 0.0
        %3690 = vmatprep.subr.mxu0 0.0
        %3691 = vmatpush1.msra.mxu0 0.0
        %3692 = vmatprep.subr.mxu0 0.0
        %3693 = vmatpush1.msra.mxu0 0.0
        %3694 = vmatprep.subr.mxu0 0.0
        %3695 = vmatpush1.msra.mxu0 0.0
        %3696 = vmatprep.subr.mxu0 0.0
        %3697 = vmatpush1.msra.mxu0 0.0
        %3698 = vmatprep.subr.mxu0 0.0
        %3699 = vmatpush1.msra.mxu0 0.0
        %3700 = vmatprep.subr.mxu0 0.0
        %3701 = vmatpush1.msra.mxu0 0.0
        %3702 = vmatprep.subr.mxu0 0.0
        %3703 = vmatpush1.msra.mxu0 0.0
        %3704 = vmatprep.subr.mxu0 0.0
        %3705 = vmatpush1.msra.mxu0 0.0
        %3706 = vmatprep.subr.mxu0 0.0
        %3707 = vmatpush1.msra.mxu0 0.0
        %3708 = vmatprep.subr.mxu0 0.0
        %3709 = vmatpush1.msra.mxu0 0.0
        %3710 = vmatprep.subr.mxu0 0.0
        %3711 = vmatpush1.msra.mxu0 0.0
        %3712 = vmatprep.subr.mxu0 0.0
        %3713 = vmatpush1.msra.mxu0 0.0
        %3714 = vmatprep.subr.mxu0 0.0
        %3715 = vmatpush1.msra.mxu0 0.0
        %3716 = vmatprep.subr.mxu0 0.0
        %3717 = vmatpush1.msra.mxu0 0.0
        %3718 = vmatprep.subr.mxu0 0.0
        %3719 = vmatpush1.msra.mxu0 0.0
        %3720 = vmatprep.subr.mxu0 0.0
        %3721 = vmatpush1.msra.mxu0 0.0
        %3722 = vmatprep.subr.mxu0 0.0
        %3723 = vmatpush1.msra.mxu0 0.0
        %3724 = vmatprep.subr.mxu0 0.0
        %3725 = vmatpush1.msra.mxu0 0.0
        %3726 = vmatprep.subr.mxu0 0.0
        %3727 = vmatpush1.msra.mxu0 0.0
        %3728 = vmatprep.subr.mxu0 0.0
        %3729 = vmatpush1.msra.mxu0 0.0
        %3730 = vmatprep.subr.mxu0 0.0
        %3731 = vmatpush1.msra.mxu0 0.0
        %3732 = vmatprep.subr.mxu0 0.0
        %3733 = vmatpush1.msra.mxu0 0.0
        %3734 = vmatprep.subr.mxu0 0.0
        %3735 = vmatpush1.msra.mxu0 0.0
        %3736 = vmatprep.subr.mxu0 0.0
        %3737 = vmatpush1.msra.mxu0 0.0
        %3738 = vmatprep.subr.mxu0 0.0
        %3739 = vmatpush1.msra.mxu0 0.0
        %3740 = vmatprep.subr.mxu0 0.0
        %3741 = vmatpush1.msra.mxu0 0.0
        %3742 = vmatprep.subr.mxu0 0.0
        %3743 = vmatpush1.msra.mxu0 0.0
        %3744 = vmatprep.subr.mxu0 0.0
        %3745 = vmatpush1.msra.mxu0 0.0
        %3746 = vmatprep.subr.mxu0 0.0
        %3747 = vmatpush1.msra.mxu0 0.0
        %3748 = vmatprep.mubr.f32.mxu0 0.0
        %3749 = vmatmul.mubr.f32.gmra.mrb[0].mxu0 %v3682
        %v3750 = vpop.f32.mrb[0].mxu0
        %v3751 = vadd.f32 0.0, %v3750
        %v3752 = vpop.f32.mrb[0].mxu0
        %3753 = vdwg.mxu0
        %3755 = vrot.lane.b32.xlu0 %v3419, 8
        %v3756 = vpop.permute.xlu0 %3755
        %3759 = vrot.lane.b32.xlu0 %v3585, 16
        %v3760 = vpop.permute.xlu0 %3759
        %3763 = vrot.lane.b32.xlu0 %v3751, 24
        %v3764 = vpop.permute.xlu0 %3763
        %v3766 = vsel %vm911, %v3253, %v3756
        %v3767 = vsel %vm742, %v3766, %v3760
        %v3768 = vsel %vm1586, %v3767, %v3764
        %v3770 = vlaneseq
        %v3771 = vshrl.u32 %v3770, 7
        %v3772 = vsub.s32 0, %v3771
        %v3773 = vrot.slane %v3011, %v3772
        %v3776 = vsel %vm834, %v3768, 0
        %3778 = vmatprep.subr.mxu0 0.0
        %3779 = vmatpush1.msra.mxu0 %v3007
        %3780 = vmatprep.subr.mxu0 0.0
        %3781 = vmatpush1.msra.mxu0 %v3008
        %3782 = vmatprep.subr.mxu0 0.0
        %3783 = vmatpush1.msra.mxu0 %v3009
        %3784 = vmatprep.subr.mxu0 0.0
        %3785 = vmatpush1.msra.mxu0 %v3010
        %3786 = vmatprep.subr.mxu0 0.0
        %3787 = vmatpush1.msra.mxu0 0.0
        %3788 = vmatprep.subr.mxu0 0.0
        %3789 = vmatpush1.msra.mxu0 0.0
        %3790 = vmatprep.subr.mxu0 0.0
        %3791 = vmatpush1.msra.mxu0 0.0
        %3792 = vmatprep.subr.mxu0 0.0
        %3793 = vmatpush1.msra.mxu0 0.0
        %3794 = vmatprep.subr.mxu0 0.0
        %3795 = vmatpush1.msra.mxu0 0.0
        %3796 = vmatprep.subr.mxu0 0.0
        %3797 = vmatpush1.msra.mxu0 0.0
        %3798 = vmatprep.subr.mxu0 0.0
        %3799 = vmatpush1.msra.mxu0 0.0
        %3800 = vmatprep.subr.mxu0 0.0
        %3801 = vmatpush1.msra.mxu0 0.0
        %3802 = vmatprep.subr.mxu0 0.0
        %3803 = vmatpush1.msra.mxu0 0.0
        %3804 = vmatprep.subr.mxu0 0.0
        %3805 = vmatpush1.msra.mxu0 0.0
        %3806 = vmatprep.subr.mxu0 0.0
        %3807 = vmatpush1.msra.mxu0 0.0
        %3808 = vmatprep.subr.mxu0 0.0
        %3809 = vmatpush1.msra.mxu0 0.0
        %3810 = vmatprep.subr.mxu0 0.0
        %3811 = vmatpush1.msra.mxu0 0.0
        %3812 = vmatprep.subr.mxu0 0.0
        %3813 = vmatpush1.msra.mxu0 0.0
        %3814 = vmatprep.subr.mxu0 0.0
        %3815 = vmatpush1.msra.mxu0 0.0
        %3816 = vmatprep.subr.mxu0 0.0
        %3817 = vmatpush1.msra.mxu0 0.0
        %3818 = vmatprep.subr.mxu0 0.0
        %3819 = vmatpush1.msra.mxu0 0.0
        %3820 = vmatprep.subr.mxu0 0.0
        %3821 = vmatpush1.msra.mxu0 0.0
        %3822 = vmatprep.subr.mxu0 0.0
        %3823 = vmatpush1.msra.mxu0 0.0
        %3824 = vmatprep.subr.mxu0 0.0
        %3825 = vmatpush1.msra.mxu0 0.0
        %3826 = vmatprep.subr.mxu0 0.0
        %3827 = vmatpush1.msra.mxu0 0.0
        %3828 = vmatprep.subr.mxu0 0.0
        %3829 = vmatpush1.msra.mxu0 0.0
        %3830 = vmatprep.subr.mxu0 0.0
        %3831 = vmatpush1.msra.mxu0 0.0
        %3832 = vmatprep.subr.mxu0 0.0
        %3833 = vmatpush1.msra.mxu0 0.0
        %3834 = vmatprep.subr.mxu0 0.0
        %3835 = vmatpush1.msra.mxu0 0.0
        %3836 = vmatprep.subr.mxu0 0.0
        %3837 = vmatpush1.msra.mxu0 0.0
        %3838 = vmatprep.subr.mxu0 0.0
        %3839 = vmatpush1.msra.mxu0 0.0
        %3840 = vmatprep.subr.mxu0 0.0
        %3841 = vmatpush1.msra.mxu0 0.0
        %3842 = vmatprep.mubr.f32.mxu0 0.0
        %3843 = vmatmul.mubr.f32.gmra.mrb[0].mxu0 %v3776
        %v3844 = vpop.f32.mrb[0].mxu0
        %v3845 = vadd.f32 %v3773, %v3844
        %v3846 = vpop.f32.mrb[0].mxu0
        %3847 = vdwg.mxu0
        %v3848 = vadd.f32 %v3001, %v3845
        %v3849 = vld [vmem:[%s20] sm:$0x1]
        %v3850 = vld [vmem:[%s21] sm:$0x1]
        %v3851 = vsel %vm834, %v3848, 0.0
        %3852 = vadd.xlane.f32.xlu0 %v3851
        %v3853 = vpop.xlane.xlu0 %3852
        %v3854 = vmul.f32 %v3853, %v1673
        %v3855 = vsub.f32 %v3848, %v3854
        %v3856 = vmul.f32 %v3855, %v3855
        %v3857 = vsel %vm834, %v3856, 0.0
        %3858 = vadd.xlane.f32.xlu0 %v3857
        %v3859 = vpop.xlane.xlu0 %3858
        %v3860 = vmul.f32 %v3859, %v1673
        %v3861 = vadd.f32 %v3860, 1e-05
        %v3862 = vrsqrt.pop %v3861
        %v3863 = vmul.f32 %v3855, %v3862
        %v3865 = vlaneseq
        %v3866 = vshrl.u32 %v3865, 7
        %v3867 = vsub.s32 0, %v3866
        %v3868 = vrot.slane %v3849, %v3867
        %v3870 = vmul.f32 %v3863, %v3868
        %v3872 = vlaneseq
        %v3873 = vshrl.u32 %v3872, 7
        %v3874 = vsub.s32 0, %v3873
        %v3875 = vrot.slane %v3850, %v3874
        %v3877 = vadd.f32 %v3870, %v3875
        %v3878 = vsel %vm834, %v3877, 0.0
        %v3879 = vrot.slane %v3878, 4
        %v3880 = vadd.f32 %v3878, %v3879
        %v3881 = vrot.slane %v3880, 2
        %v3882 = vadd.f32 %v3880, %v3881
        %v3883 = vrot.slane %v3882, 1
        %v3884 = vadd.f32 %v3882, %v3883
        %v3885 = vrcp.pop 8.0
        %v3886 = vmul.f32 %v3884, %v3885
        %v3887 = vld [vmem:[%s22] sm:$0xff]
        %v3888 = vld [vmem:[%s22 + $0x8] sm:$0xff]
        %v3889 = vld [vmem:[%s22 + $0x10] sm:$0xff]
        %v3890 = vld [vmem:[%s22 + $0x18] sm:$0xff]
        %v3891 = vld [vmem:[%s23] sm:$0x1]
        %v3893 = vsel %vm834, %v3886, 0
        %3895 = vmatprep.subr.mxu0 0.0
        %3896 = vmatpush1.msra.mxu0 %v3887
        %3897 = vmatprep.subr.mxu0 0.0
        %3898 = vmatpush1.msra.mxu0 %v3888
        %3899 = vmatprep.subr.mxu0 0.0
        %3900 = vmatpush1.msra.mxu0 %v3889
        %3901 = vmatprep.subr.mxu0 0.0
        %3902 = vmatpush1.msra.mxu0 %v3890
        %3903 = vmatprep.subr.mxu0 0.0
        %3904 = vmatpush1.msra.mxu0 0.0
        %3905 = vmatprep.subr.mxu0 0.0
        %3906 = vmatpush1.msra.mxu0 0.0
        %3907 = vmatprep.subr.mxu0 0.0
        %3908 = vmatpush1.msra.mxu0 0.0
        %3909 = vmatprep.subr.mxu0 0.0
        %3910 = vmatpush1.msra.mxu0 0.0
        %3911 = vmatprep.subr.mxu0 0.0
        %3912 = vmatpush1.msra.mxu0 0.0
        %3913 = vmatprep.subr.mxu0 0.0
        %3914 = vmatpush1.msra.mxu0 0.0
        %3915 = vmatprep.subr.mxu0 0.0
        %3916 = vmatpush1.msra.mxu0 0.0
        %3917 = vmatprep.subr.mxu0 0.0
        %3918 = vmatpush1.msra.mxu0 0.0
        %3919 = vmatprep.subr.mxu0 0.0
        %3920 = vmatpush1.msra.mxu0 0.0
        %3921 = vmatprep.subr.mxu0 0.0
        %3922 = vmatpush1.msra.mxu0 0.0
        %3923 = vmatprep.subr.mxu0 0.0
        %3924 = vmatpush1.msra.mxu0 0.0
        %3925 = vmatprep.subr.mxu0 0.0
        %3926 = vmatpush1.msra.mxu0 0.0
        %3927 = vmatprep.subr.mxu0 0.0
        %3928 = vmatpush1.msra.mxu0 0.0
        %3929 = vmatprep.subr.mxu0 0.0
        %3930 = vmatpush1.msra.mxu0 0.0
        %3931 = vmatprep.subr.mxu0 0.0
        %3932 = vmatpush1.msra.mxu0 0.0
        %3933 = vmatprep.subr.mxu0 0.0
        %3934 = vmatpush1.msra.mxu0 0.0
        %3935 = vmatprep.subr.mxu0 0.0
        %3936 = vmatpush1.msra.mxu0 0.0
        %3937 = vmatprep.subr.mxu0 0.0
        %3938 = vmatpush1.msra.mxu0 0.0
        %3939 = vmatprep.subr.mxu0 0.0
        %3940 = vmatpush1.msra.mxu0 0.0
        %3941 = vmatprep.subr.mxu0 0.0
        %3942 = vmatpush1.msra.mxu0 0.0
        %3943 = vmatprep.subr.mxu0 0.0
        %3944 = vmatpush1.msra.mxu0 0.0
        %3945 = vmatprep.subr.mxu0 0.0
        %3946 = vmatpush1.msra.mxu0 0.0
        %3947 = vmatprep.subr.mxu0 0.0
        %3948 = vmatpush1.msra.mxu0 0.0
        %3949 = vmatprep.subr.mxu0 0.0
        %3950 = vmatpush1.msra.mxu0 0.0
        %3951 = vmatprep.subr.mxu0 0.0
        %3952 = vmatpush1.msra.mxu0 0.0
        %3953 = vmatprep.subr.mxu0 0.0
        %3954 = vmatpush1.msra.mxu0 0.0
        %3955 = vmatprep.subr.mxu0 0.0
        %3956 = vmatpush1.msra.mxu0 0.0
        %3957 = vmatprep.subr.mxu0 0.0
        %3958 = vmatpush1.msra.mxu0 0.0
        %3959 = vmatprep.mubr.f32.mxu0 0.0
        %3960 = vmatmul.mubr.f32.gmra.mrb[0].mxu0 %v3893
        %v3961 = vpop.f32.mrb[0].mxu0
        %v3962 = vadd.f32 %v3891, %v3961
        %v3963 = vpop.f32.mrb[0].mxu0
        %3964 = vdwg.mxu0
        %vm3965 = vcmask 8192
        %3966 = vst.msk [vmem:[%s727] sm:$0x1] %vm3965, %v3962
        %s3967 = sand.u32 %s555, 1
        %s3968 = scalar_lea.sflag [#allocation3], %s3967
        %s3969 = sand.u32 %s555, 1
        %s3970 = scalar_lea.vmem [#allocation2], %s3969
        // Predicated region
        $region117: #{tpu_custom_call.1} parent=115 // pred_check
          %p3971 = pneg %p565
        $region118: #{tpu_custom_call.1} parent=115 // pred_check_branch
          %3973 = sbr.rel (%p3971) target = $region120
        $region119: #{tpu_custom_call.1} parent=115 // pred_region
          %s3975 = ssub.s32 16, 16
          %3976 = vsyncadd %s3968, %s3975
          %s3977 = smul.addr %s38, 16
          %s3978 = scalar_lea.hbm %s24, %s3977
          %s3980 = sshll.u32 %s3970, 4
          %s3981 = int_to_ptr.vmem [resolvable:$true] %s3980
          %3983 = dma.vmem_to_hbm [thread:$0]  %s3981, 16, %s3978, %s3968
        $region120: #{tpu_custom_call.1} parent=115 // pred_fallthru
          _
      $region116: #{tpu_custom_call.1} parent=5 // pred_fallthru
        _
      %p3984 = scmp.le.s32.totalorder 2, %s33
      // Predicated region
      $region121: #{tpu_custom_call.1} parent=5 // pred_check
        %p3985 = pneg %p3984
      $region122: #{tpu_custom_call.1} parent=5 // pred_check_branch
        %3987 = sbr.rel (%p3985) target = $region124
      $region123: #{tpu_custom_call.1} parent=5 // pred_region
        %s3988 = ssub.s32 %s33, 2
        // Predicated region
        $region125: #{tpu_custom_call.1} parent=123 // pred_check
          %p3989 = pneg %p571
        $region126: #{tpu_custom_call.1} parent=123 // pred_check_branch
          %3991 = sbr.rel (%p3989) target = $region128
        $region127: #{tpu_custom_call.1} parent=123 // pred_region
          %s3992 = sand.u32 %s556, 1
          %s3993 = scalar_lea.sflag [#allocation3], %s3992
          %s3994 = sand.u32 %s556, 1
          %s3995 = scalar_lea.vmem [#allocation2], %s3994
          %3996 = dma.done %s3993, 16
        $region128: #{tpu_custom_call.1} parent=123 // pred_fallthru
          _
      $region124: #{tpu_custom_call.1} parent=5 // pred_fallthru
        _
    $region6: #{tpu_custom_call.1} parent=1 // loop_footer
      %s37 = sadd.s32 1, %s33
    $region7: #{tpu_custom_call.1} parent=1 // loop_footer_branch
      %32 = sbr.rel target = $region3
    $region8: #{tpu_custom_call.1} parent=1 // loop_exit
      _
    %3997 = vsyncpa [#allocation3], 1
    %s3998 = scalar_lea.sflag [#allocation3], 1
    %3999 = vsyncpa %s3998, 1

</llo_original>
